<compile_context>
chip_gen: v7x
topology: tpu7x:2x2x1
jax: 0.10.0
libtpu: 0.0.40
codegen_flags: <defaults>
</compile_context>

<pallas_src>
import functools

import jax
import jax.numpy as jnp
from jax.experimental import pallas as pl
from jax.experimental.pallas import tpu as pltpu

EPS = 1e-5  # nn.LayerNorm default eps


# ---------------- in-kernel math helpers (traced into the kernel) ------------
def _layernorm(x, gamma, beta):
    """Plain per-row LayerNorm (used only on the tiny unfolded q path)."""
    mu = jnp.mean(x, axis=-1, keepdims=True)
    var = jnp.mean(jnp.square(x - mu), axis=-1, keepdims=True)
    return (x - mu) * jax.lax.rsqrt(var + EPS) * gamma + beta


def _ln_folded(x, gamma, beta, amean_bf16):
    """Per-32-lane-group LayerNorm on a lane-folded slab.

    Group means / variances are computed with a block-diagonal averaging matmul
    (amean = kron(I, ones(C,C)/C)) on the MXU, which has plenty of slack here,
    instead of cross-lane VPU/XLU reductions.  Results come back already
    broadcast to every lane of the group.
    """
    mu = jnp.dot(x.astype(jnp.bfloat16), amean_bf16,
                 preferred_element_type=jnp.float32)
    xc = x - mu
    var = jnp.dot((xc * xc).astype(jnp.bfloat16), amean_bf16,
                  preferred_element_type=jnp.float32)
    return xc * jax.lax.rsqrt(var + EPS) * gamma + beta


def _mish(x):
    # mish(x) = x * tanh(softplus(x)).  With u = exp(-|x|) (never overflows):
    #   x >= 0: tanh(softplus(x)) = (1 + 2u) / (1 + 2u + 2u^2)
    #   x <  0: tanh(softplus(x)) = (u^2 + 2u) / (u^2 + 2u + 2)
    # One EUP exp (bf16 operand -> bf16 EUP path on v6e/v7x) plus one approx EUP
    # reciprocal (den >= 1 always); everything else on the VPU.
    u = jnp.exp((-jnp.abs(x)).astype(jnp.bfloat16)).astype(jnp.float32)
    u2 = u * u
    two_u = 2.0 * u
    nonneg = x >= 0.0
    num = jnp.where(nonneg, 1.0 + two_u, u2 + two_u)
    den = jnp.where(nonneg, 1.0 + two_u + 2.0 * u2, u2 + two_u + 2.0)
    return x * num * pl.reciprocal(den, approx=True)


def _fold_reduce(x, op, group):
    """Reduce across the F = L//group lane groups of a (rows, L) array.

    Uses log2(F) XLU lane rotations (shifts are multiples of `group`, so the
    channel offset within each group is preserved); every lane ends up holding
    the reduction over all groups at its channel -> already broadcast.
    """
    L = x.shape[-1]
    shift = group
    while shift < L:
        x = op(x, pltpu.roll(x, shift, axis=x.ndim - 1))
        shift *= 2
    return x


# ------------------------------ Pallas kernel --------------------------------
def _vector_attention_kernel(
    feat_t_ref,   # (1, TI, C)     f32   query rows of this i-tile
    feat_f_ref,   # (1, NF, 128)   f32   lane-folded full feat (keys/values)
    pos_ref,      # (1, R, 128)    bf16  lane-folded pos i-tile (R = TI*N/F)
    dist_f_ref,   # (1, NF, 128)   f32   lane-folded dist (key weights)
    dist_t_ref,   # (1, TI, 1)     f32   dist of query rows (mask)
    wq_ref,       # (C, C)         f32
    qvec_ref,     # (3, C)         f32   [bq, gamma_q, beta_q]
    wkv_ref,      # (128, 256)     f32   [blockdiag(Wk) | blockdiag(Wv)]
    kvvec_ref,    # (4, 128)       f32   [bk_f, bv_f, gamma_k_f, beta_k_f]
    w1pb_ref,     # (128, 256)     bf16  [blockdiag(W1_pmul) | blockdiag(W1_pbias)]
    mlp1_ref,     # (4, 256)       f32   [b1 | b1], [g | g], [be | be], [b2 | b2]
    w2pb_ref,     # (256, 256)     bf16  blockdiag(blockdiag(W2_pmul), blockdiag(W2_pbias))
    w1we_ref,     # (128, 128)     bf16  blockdiag(W1_we)
    w2we_ref,     # (128, 128)     bf16  blockdiag(W2_we)
    wevec_ref,    # (4, 128)       f32   [b1_we, gamma_we, beta_we, b2_we] (folded)
    amean_ref,    # (128, 128)     bf16  kron(I_F, ones(C,C)/C)
    amean2_ref,   # (256, 256)     bf16  kron(I_2F, ones(C,C)/C)
    out_feat_ref,  # (1, TI, C)    f32
    out_rel_ref,   # (1, R, 128)   bf16  lane-folded relation_qk
):
    TI = feat_t_ref.shape[1]
    C = feat_t_ref.shape[2]
    NF = feat_f_ref.shape[1]
    FC = pos_ref.shape[2]          # = 128
    F = FC // C
    R = pos_ref.shape[1]           # = TI * NF

    feat_t = feat_t_ref[0]
    feat_f = feat_f_ref[0]
    dist_f = dist_f_ref[0]
    dist_t = dist_t_ref[0]
    amean = amean_ref[...]
    amean2 = amean2_ref[...]
    qv = qvec_ref[...]
    kvv = kvvec_ref[...]
    m1 = mlp1_ref[...]
    wev = wevec_ref[...]

    # ---- small path: q on the unfolded i-tile rows; k/v on folded full feat ----
    q_pre = jnp.dot(feat_t, wq_ref[...], preferred_element_type=jnp.float32) + qv[0:1]
    q = _mish(_layernorm(q_pre, qv[1:2], qv[2:3]))                     # (TI, C)
    q_rep = jnp.concatenate([q] * F, axis=-1) if F > 1 else q          # (TI, 128)

    kv = jnp.dot(feat_f, wkv_ref[...], preferred_element_type=jnp.float32)  # (NF, 256)
    k_f = _mish(_ln_folded(kv[:, :FC] + kvv[0:1], kvv[2:3], kvv[3:4], amean))
    v_f = kv[:, FC:] + kvv[1:2]                                        # (NF, 128)

    # relation base: rel[i, j] = key[j] - query[i], built directly in the folded
    # layout (folded row = i*NF + j//F, lane group = j%F).
    rel_base = (k_f[None, :, :] - q_rep[:, None, :]).reshape(R, FC)    # (R, 128) f32

    # ---- hot path: lane-dense (R, 128)/(R, 256) slabs, bf16 MXU, f32 accum ----
    pos_t = pos_ref[0].astype(jnp.bfloat16)                            # (R, 128)
    # fused first layers of linear_p_multiplier / linear_p_bias (shared input)
    h = jnp.dot(pos_t, w1pb_ref[...], preferred_element_type=jnp.float32) + m1[0:1]
    h = _mish(_ln_folded(h, m1[1:2], m1[2:3], amean2))                 # (R, 256)
    # fused second layers: one 256x256 block-diagonal matmul -> [pem | peb]
    pem_peb = jnp.dot(h.astype(jnp.bfloat16), w2pb_ref[...],
                      preferred_element_type=jnp.float32) + m1[3:4]    # (R, 256)
    rel = rel_base * pem_peb[:, :FC] + pem_peb[:, FC:]                 # (R, 128) f32
    out_rel_ref[0] = rel.astype(out_rel_ref.dtype)                     # bf16, lane-dense

    # ---- weight encoding MLP ----
    hw = jnp.dot(rel.astype(jnp.bfloat16), w1we_ref[...],
                 preferred_element_type=jnp.float32) + wev[0:1]
    hw = _mish(_ln_folded(hw, wev[1:2], wev[2:3], amean))
    w = jnp.dot(hw.astype(jnp.bfloat16), w2we_ref[...],
                preferred_element_type=jnp.float32) + wev[3:4]         # (R, 128)

    # ---- weighted softmax over keys j (= folded sublane axis x F lane groups) ----
    w3 = w.reshape(TI, NF, FC)
    m_part = jnp.max(w3, axis=1)                                       # (TI, 128)
    m_all = _fold_reduce(m_part, jnp.maximum, C)                       # over lane groups
    wexp = jnp.exp(w3 - m_all[:, None, :]) * dist_f[None, :, :]        # weight by dist_j
    d_part = jnp.sum(wexp, axis=1)                                     # (TI, 128)
    denom = _fold_reduce(d_part, jnp.add, C)
    # NOTE: if all dist_j == 0 for a row, denom == 0 -> NaN, matching the
    # reference (0/0) exactly ("bug-compatible"), so no guard is added.
    probs = wexp * pl.reciprocal(denom, approx=True)[:, None, :]

    # einsum 'b i j k, b j k -> b i k' over j = (sublane, lane-group)
    acc = jnp.sum(probs * v_f[None, :, :], axis=1)                     # (TI, 128)
    out = _fold_reduce(acc, jnp.add, C)[:, :C]                         # (TI, C)
    # mask (dist_i * dist_j > 0): the dist_j factor is already enforced by the
    # dist_j weighting of the numerator, so only dist_i > 0 remains.
    out = out * (dist_t > 0.0).astype(out.dtype)
    out_feat_ref[0] = out.astype(out_feat_ref.dtype)


# ------------------------------- wrapper --------------------------------------
def _default_vmem_limit_bytes():
    """Generation-aware scoped-VMEM limit (review item: v7x has only 64 MiB)."""
    cap = 64 * 1024 * 1024  # conservative fallback (v7x per-TC VMEM)
    try:
        cap = int(getattr(pltpu.get_tpu_info(), "vmem_capacity_bytes", cap))
    except Exception:
        pass
    # v7x: 64 MiB -> 48 MiB limit; v5e/v6e: 128 MiB -> 96 MiB limit.
    return max(32 * 1024 * 1024, min(cap - 16 * 1024 * 1024, 96 * 1024 * 1024))


def _pick_tile_i(N, C, pos_itemsize, vmem_limit_bytes):
    """Largest i-tile (multiple of 8 dividing N, or N itself) that fits VMEM.

    Per i-row of the tile (lane-dense folded layout, no lane padding left):
      pos block (double-buffered) + bf16 out_rel block (double-buffered) +
      ~12 live f32 (R,128)-equivalent hot-path temporaries.
    """
    per_i = N * C * (2 * pos_itemsize + 2 * 2 + 12 * 4)
    budget = int(vmem_limit_bytes * 0.85)  # headroom: weights + small buffers
    t = max(8, (budget // max(per_i, 1)) // 8 * 8)
    t = min(t, N)
    while t > 8 and N % t:
        t -= 8
    if N % t:
        t = N
    return int(t)
    # TODO(synk): at very large N even TI=8 exceeds the budget; needs the
    # j-tiled online-softmax restructure.


@functools.partial(jax.jit, static_argnames=("tile_i",))
def vector_attention(feat, pos, dist, wqkv, bqkv, lnqk, wmlp, vmlp, tile_i=None):
    B, N, C = feat.shape
    assert C <= 128 and 128 % C == 0, "C must divide 128"  # TODO(synk): tile C > 128
    F = 128 // C
    FC = F * C                       # = 128
    assert N % F == 0, "N must be a multiple of 128 // C for lane folding"
    NF = N // F

    vmem_limit = _default_vmem_limit_bytes()
    if tile_i is None:
        tile_i = _pick_tile_i(N, C, jnp.dtype(pos.dtype).itemsize, vmem_limit)
    assert N % tile_i == 0 and (tile_i % 8 == 0 or tile_i == N), (N, tile_i)
    TI = tile_i
    n_it = N // TI
    R = TI * N // F

    f32 = jnp.float32
    bf16 = jnp.bfloat16
    eyeF = jnp.eye(F, dtype=f32)

    def bd(w):                      # (C, C) -> (128, 128) block-diagonal, F copies
        return jnp.kron(eyeF, w.astype(f32))

    def fold(vec):                  # (C,) -> (1, 128): repeat per lane group
        return jnp.tile(vec.astype(f32), F)[None, :]

    # ---- host-side parameter packing (block-diagonal / lane-folded) ----------
    wq = wqkv[0].astype(f32)                                            # (C, C)
    qvec = jnp.stack([bqkv[0], lnqk[0], lnqk[1]]).astype(f32)           # (3, C)
    wkv_f = jnp.concatenate([bd(wqkv[1]), bd(wqkv[2])], axis=1)         # (128, 256)
    kvvec = jnp.concatenate(
        [fold(bqkv[1]), fold(bqkv[2]), fold(lnqk[2]), fold(lnqk[3])], axis=0)  # (4,128)
    w1pb = jnp.concatenate([bd(wmlp[0, 0]), bd(wmlp[1, 0])], axis=1).astype(bf16)
    mlp1 = jnp.concatenate([
        jnp.concatenate([fold(vmlp[0, 0]), fold(vmlp[1, 0])], axis=1),  # b1
        jnp.concatenate([fold(vmlp[0, 1]), fold(vmlp[1, 1])], axis=1),  # gamma
        jnp.concatenate([fold(vmlp[0, 2]), fold(vmlp[1, 2])], axis=1),  # beta
        jnp.concatenate([fold(vmlp[0, 3]), fold(vmlp[1, 3])], axis=1),  # b2
    ], axis=0)                                                           # (4, 256)
    zero = jnp.zeros((FC, FC), f32)
    w2pb = jnp.concatenate([
        jnp.concatenate([bd(wmlp[0, 1]), zero], axis=1),
        jnp.concatenate([zero, bd(wmlp[1, 1])], axis=1)], axis=0).astype(bf16)  # (256,256)
    w1we = bd(wmlp[2, 0]).astype(bf16)                                   # (128, 128)
    w2we = bd(wmlp[2, 1]).astype(bf16)                                   # (128, 128)
    wevec = jnp.concatenate(
        [fold(vmlp[2, 0]), fold(vmlp[2, 1]), fold(vmlp[2, 2]), fold(vmlp[2, 3])],
        axis=0)                                                           # (4, 128)
    amean = jnp.kron(eyeF, jnp.full((C, C), 1.0 / C, f32)).astype(bf16)   # (128, 128)
    amean2 = jnp.kron(jnp.eye(2 * F, dtype=f32),
                      jnp.full((C, C), 1.0 / C, f32)).astype(bf16)        # (256, 256)

    # ---- lane-folding of the data (contiguous reshapes: free) ---------------
    pos_f = pos.reshape(B, (N * N) // F, FC)       # keep caller dtype (bf16 preferred)
    feat_f = feat.reshape(B, NF, FC).astype(f32)
    dist_f = jnp.broadcast_to(dist, (B, N, C)).reshape(B, NF, FC).astype(f32)

    out_shapes = (
        jax.ShapeDtypeStruct((B, N, C), feat.dtype),
        jax.ShapeDtypeStruct((B, (N * N) // F, FC), bf16),   # relation_qk (bf16, folded)
    )
    in_specs = [
        pl.BlockSpec((1, TI, C), lambda b, it: (b, it, 0)),          # feat i-tile (q)
        pl.BlockSpec((1, NF, FC), lambda b, it: (b, 0, 0)),          # feat folded (k/v)
        pl.BlockSpec((1, R, FC), lambda b, it: (b, it, 0)),          # pos folded i-tile
        pl.BlockSpec((1, NF, FC), lambda b, it: (b, 0, 0)),          # dist folded (keys)
        pl.BlockSpec((1, TI, 1), lambda b, it: (b, it, 0)),          # dist i-tile (mask)
        pl.BlockSpec((C, C), lambda b, it: (0, 0)),                  # wq
        pl.BlockSpec((3, C), lambda b, it: (0, 0)),                  # qvec
        pl.BlockSpec((FC, 2 * FC), lambda b, it: (0, 0)),            # wkv folded
        pl.BlockSpec((4, FC), lambda b, it: (0, 0)),                 # kvvec
        pl.BlockSpec((FC, 2 * FC), lambda b, it: (0, 0)),            # w1pb (bf16)
        pl.BlockSpec((4, 2 * FC), lambda b, it: (0, 0)),             # mlp1
        pl.BlockSpec((2 * FC, 2 * FC), lambda b, it: (0, 0)),        # w2pb (bf16)
        pl.BlockSpec((FC, FC), lambda b, it: (0, 0)),                # w1we (bf16)
        pl.BlockSpec((FC, FC), lambda b, it: (0, 0)),                # w2we (bf16)
        pl.BlockSpec((4, FC), lambda b, it: (0, 0)),                 # wevec
        pl.BlockSpec((FC, FC), lambda b, it: (0, 0)),                # amean (bf16)
        pl.BlockSpec((2 * FC, 2 * FC), lambda b, it: (0, 0)),        # amean2 (bf16)
    ]
    out_specs = (
        pl.BlockSpec((1, TI, C), lambda b, it: (b, it, 0)),
        pl.BlockSpec((1, R, FC), lambda b, it: (b, it, 0)),
    )

    out_feat, out_rel = pl.pallas_call(
        _vector_attention_kernel,
        out_shape=out_shapes,
        grid=(B, n_it),
        in_specs=in_specs,
        out_specs=out_specs,
        compiler_params=pltpu.CompilerParams(
            dimension_semantics=("parallel", "parallel"),
            vmem_limit_bytes=int(vmem_limit),
        ),
    )(feat, feat_f, pos_f, dist_f, dist,
      wq, qvec, wkv_f, kvvec,
      w1pb, mlp1, w2pb, w1we, w2we, wevec, amean, amean2)

    # unfold relation_qk back to (B, N, N, C); kept in bf16 per the perf review.
    return out_feat, out_rel.reshape(B, N, N, C)


# ----------------------- pure-JAX reference (for checking) --------------------
def reference(feat, pos, dist, wqkv, bqkv, lnqk, wmlp, vmlp):
    def linear(x, w, b):
        return x @ w + b

    def ln(x, g, be):
        mu = jnp.mean(x, -1, keepdims=True)
        var = jnp.mean((x - mu) ** 2, -1, keepdims=True)
        return (x - mu) / jnp.sqrt(var + EPS) * g + be

    def mish(x):
        return x * jnp.tanh(jax.nn.softplus(x))

    def mlp2(x, i):
        h = mish(ln(linear(x, wmlp[i, 0], vmlp[i, 0]), vmlp[i, 1], vmlp[i, 2]))
        return linear(h, wmlp[i, 1], vmlp[i, 3])

    q = mish(ln(linear(feat, wqkv[0], bqkv[0]), lnqk[0], lnqk[1]))
    k = mish(ln(linear(feat, wqkv[1], bqkv[1]), lnqk[2], lnqk[3]))
    v = linear(feat, wqkv[2], bqkv[2])

    rel = k[:, None, :, :] - q[:, :, None, :]          # (B, N, N, C)
    rel = rel * mlp2(pos, 0) + mlp2(pos, 1)

    w = mlp2(rel, 2)
    maxes = jnp.max(w, axis=2, keepdims=True)
    wexp = jnp.exp(w - maxes) * dist[:, None, :, :]
    probs = wexp / jnp.sum(wexp, axis=2, keepdims=True)
    mask = (dist * jnp.swapaxes(dist, -1, -2)) > 0
    probs = probs * mask[..., None]
    out = jnp.einsum("bijc,bjc->bic", probs, v)
    return out, rel


# ----------------------------------- main --------------------------------------
if __name__ == "__main__":
    B, N, C = 2, 32, 32

    key = jax.random.PRNGKey(0)
    ks = jax.random.split(key, 12)

    # deterministic synthetic parameters
    wqkv = 0.2 * jax.random.normal(ks[0], (3, C, C), jnp.float32)
    bqkv = 0.1 * jax.random.normal(ks[1], (3, C), jnp.float32)
    lnqk = jnp.stack([
        1.0 + 0.1 * jax.random.normal(ks[2], (C,), jnp.float32),  # gamma_q
        0.1 * jax.random.normal(ks[3], (C,), jnp.float32),        # beta_q
        1.0 + 0.1 * jax.random.normal(ks[4], (C,), jnp.float32),  # gamma_k
        0.1 * jax.random.normal(ks[5], (C,), jnp.float32),        # beta_k
    ])
    wmlp = 0.2 * jax.random.normal(ks[6], (3, 2, C, C), jnp.float32)
    bvec = 0.1 * jax.random.normal(ks[7], (3, 4, C), jnp.float32)
    vmlp = bvec.at[:, 1, :].add(1.0)  # rows 1 are LayerNorm gammas -> around 1

    # inputs
    feat = jax.random.normal(ks[8], (B, N, C), jnp.float32)
    pos = jax.random.normal(ks[9], (B, N, N, C), jnp.float32)
    dist = jax.random.uniform(ks[10], (B, N, 1), jnp.float32, 0.1, 1.0)
    dist = dist.at[1, N - 3:, :].set(0.0)  # padded entries exercise the mask

    # tile_i=16 -> grid (B, 2): exercises the multi-tile path at this small N.
    # pos is handed to the kernel in bf16 (the intended production layout).
    out_feat, out_rel = vector_attention(
        feat, pos.astype(jnp.bfloat16), dist, wqkv, bqkv, lnqk, wmlp, vmlp, tile_i=16)
    out_feat = jax.block_until_ready(out_feat)
    out_rel = jax.block_until_ready(out_rel)

    ref_feat, ref_rel = reference(feat, pos, dist, wqkv, bqkv, lnqk, wmlp, vmlp)

    def max_rel_err(x, ref):
        return float(jnp.max(jnp.abs(x - ref)) / (jnp.max(jnp.abs(ref)) + 1e-9))

    assert out_feat.shape == (B, N, C) and out_rel.shape == (B, N, N, C)
    assert bool(jnp.all(jnp.isfinite(out_feat)))
    assert bool(jnp.all(jnp.isfinite(out_rel.astype(jnp.float32))))
    # bf16 hot-path matmuls, bf16 pos / relation_qk, bf16-operand mish exps and
    # approximate EUP reciprocals -> mixed-precision tolerance.
    assert max_rel_err(out_feat, ref_feat) < 1e-1, "feat mismatch"
    assert max_rel_err(out_rel.astype(jnp.float32), ref_rel) < 1e-1, "relation_qk mismatch"

    print("KERNEL_OK")
</pallas_src>

<mosaic_0001>
module attributes {stable_mosaic.version = 11 : i64} {
  func.func @_vector_attention_kernel(%arg0: i32, %arg1: i32, %arg2: memref<1x16x32xf32, #tpu.memory_space<vmem>>, %arg3: memref<1x8x128xf32, #tpu.memory_space<vmem>>, %arg4: memref<1x128x128xbf16, #tpu.memory_space<vmem>>, %arg5: memref<1x8x128xf32, #tpu.memory_space<vmem>>, %arg6: memref<1x16x1xf32, #tpu.memory_space<vmem>>, %arg7: memref<32x32xf32, #tpu.memory_space<vmem>>, %arg8: memref<3x32xf32, #tpu.memory_space<vmem>>, %arg9: memref<128x256xf32, #tpu.memory_space<vmem>>, %arg10: memref<4x128xf32, #tpu.memory_space<vmem>>, %arg11: memref<128x256xbf16, #tpu.memory_space<vmem>>, %arg12: memref<4x256xf32, #tpu.memory_space<vmem>>, %arg13: memref<256x256xbf16, #tpu.memory_space<vmem>>, %arg14: memref<128x128xbf16, #tpu.memory_space<vmem>>, %arg15: memref<128x128xbf16, #tpu.memory_space<vmem>>, %arg16: memref<4x128xf32, #tpu.memory_space<vmem>>, %arg17: memref<128x128xbf16, #tpu.memory_space<vmem>>, %arg18: memref<256x256xbf16, #tpu.memory_space<vmem>>, %arg19: memref<1x16x32xf32, #tpu.memory_space<vmem>>, %arg20: memref<1x128x128xbf16, #tpu.memory_space<vmem>>) attributes {dimension_semantics = [#tpu.dimension_semantics<parallel>, #tpu.dimension_semantics<parallel>], iteration_bounds = array<i64: 2, 2>, scalar_prefetch = 0 : i64, scratch_operands = 0 : i64, tpu.core_type = #tpu.core_type<tc>, window_params = [{transform_indices = @transform_0, window_bounds = array<i64: 1, 16, 32>}, {transform_indices = @transform_1, window_bounds = array<i64: 1, 8, 128>}, {transform_indices = @transform_2, window_bounds = array<i64: 1, 128, 128>}, {transform_indices = @transform_3, window_bounds = array<i64: 1, 8, 128>}, {transform_indices = @transform_4, window_bounds = array<i64: 1, 16, 1>}, {pipeline_mode = #tpu.pipeline_mode<synchronous>, transform_indices = @transform_5, window_bounds = array<i64: 32, 32>}, {pipeline_mode = #tpu.pipeline_mode<synchronous>, transform_indices = @transform_6, window_bounds = array<i64: 3, 32>}, {pipeline_mode = #tpu.pipeline_mode<synchronous>, transform_indices = @transform_7, window_bounds = array<i64: 128, 256>}, {pipeline_mode = #tpu.pipeline_mode<synchronous>, transform_indices = @transform_8, window_bounds = array<i64: 4, 128>}, {pipeline_mode = #tpu.pipeline_mode<synchronous>, transform_indices = @transform_9, window_bounds = array<i64: 128, 256>}, {pipeline_mode = #tpu.pipeline_mode<synchronous>, transform_indices = @transform_10, window_bounds = array<i64: 4, 256>}, {pipeline_mode = #tpu.pipeline_mode<synchronous>, transform_indices = @transform_11, window_bounds = array<i64: 256, 256>}, {pipeline_mode = #tpu.pipeline_mode<synchronous>, transform_indices = @transform_12, window_bounds = array<i64: 128, 128>}, {pipeline_mode = #tpu.pipeline_mode<synchronous>, transform_indices = @transform_13, window_bounds = array<i64: 128, 128>}, {pipeline_mode = #tpu.pipeline_mode<synchronous>, transform_indices = @transform_14, window_bounds = array<i64: 4, 128>}, {pipeline_mode = #tpu.pipeline_mode<synchronous>, transform_indices = @transform_15, window_bounds = array<i64: 128, 128>}, {pipeline_mode = #tpu.pipeline_mode<synchronous>, transform_indices = @transform_16, window_bounds = array<i64: 256, 256>}, {transform_indices = @transform_17, window_bounds = array<i64: 1, 16, 32>}, {transform_indices = @transform_18, window_bounds = array<i64: 1, 128, 128>}]} {
    %c0 = arith.constant 0 : index
    %c0_0 = arith.constant 0 : index
    %c0_1 = arith.constant 0 : index
    %0 = vector.load %arg2[%c0, %c0_0, %c0_1] : memref<1x16x32xf32, #tpu.memory_space<vmem>>, vector<1x16x32xf32>
    %1 = vector.shape_cast %0 : vector<1x16x32xf32> to vector<16x32xf32>
    %c0_2 = arith.constant 0 : index
    %c0_3 = arith.constant 0 : index
    %c0_4 = arith.constant 0 : index
    %2 = vector.load %arg3[%c0_2, %c0_3, %c0_4] : memref<1x8x128xf32, #tpu.memory_space<vmem>>, vector<1x8x128xf32>
    %3 = vector.shape_cast %2 : vector<1x8x128xf32> to vector<8x128xf32>
    %c0_5 = arith.constant 0 : index
    %c0_6 = arith.constant 0 : index
    %c0_7 = arith.constant 0 : index
    %4 = vector.load %arg5[%c0_5, %c0_6, %c0_7] : memref<1x8x128xf32, #tpu.memory_space<vmem>>, vector<1x8x128xf32>
    %5 = vector.shape_cast %4 : vector<1x8x128xf32> to vector<8x128xf32>
    %c0_8 = arith.constant 0 : index
    %c0_9 = arith.constant 0 : index
    %c0_10 = arith.constant 0 : index
    %6 = vector.load %arg6[%c0_8, %c0_9, %c0_10] : memref<1x16x1xf32, #tpu.memory_space<vmem>>, vector<1x16x1xf32>
    %7 = vector.shape_cast %6 : vector<1x16x1xf32> to vector<16x1xf32>
    %c0_11 = arith.constant 0 : index
    %c0_12 = arith.constant 0 : index
    %8 = vector.load %arg17[%c0_11, %c0_12] : memref<128x128xbf16, #tpu.memory_space<vmem>>, vector<128x128xbf16>
    %c0_13 = arith.constant 0 : index
    %c0_14 = arith.constant 0 : index
    %9 = vector.load %arg18[%c0_13, %c0_14] : memref<256x256xbf16, #tpu.memory_space<vmem>>, vector<256x256xbf16>
    %c0_15 = arith.constant 0 : index
    %c0_16 = arith.constant 0 : index
    %10 = vector.load %arg8[%c0_15, %c0_16] : memref<3x32xf32, #tpu.memory_space<vmem>>, vector<3x32xf32>
    %c0_17 = arith.constant 0 : index
    %c0_18 = arith.constant 0 : index
    %11 = vector.load %arg10[%c0_17, %c0_18] : memref<4x128xf32, #tpu.memory_space<vmem>>, vector<4x128xf32>
    %c0_19 = arith.constant 0 : index
    %c0_20 = arith.constant 0 : index
    %12 = vector.load %arg12[%c0_19, %c0_20] : memref<4x256xf32, #tpu.memory_space<vmem>>, vector<4x256xf32>
    %c0_21 = arith.constant 0 : index
    %c0_22 = arith.constant 0 : index
    %13 = vector.load %arg16[%c0_21, %c0_22] : memref<4x128xf32, #tpu.memory_space<vmem>>, vector<4x128xf32>
    %c0_23 = arith.constant 0 : index
    %c0_24 = arith.constant 0 : index
    %14 = vector.load %arg7[%c0_23, %c0_24] : memref<32x32xf32, #tpu.memory_space<vmem>>, vector<32x32xf32>
    %cst = arith.constant dense<0.000000e+00> : vector<16x32xf32>
    %15 = tpu.matmul %1, %14, %cst {dimension_numbers = #tpu.dot_dimension_numbers<[1], [0], [0], [1], [0, 0, 1, 1], [], []>} : vector<16x32xf32>, vector<32x32xf32>, vector<16x32xf32> -> vector<16x32xf32>
    %16 = vector.extract_strided_slice %10 {offsets = [0, 0], sizes = [1, 32], strides = [1, 1]} : vector<3x32xf32> to vector<1x32xf32>
    %17 = vector.broadcast %16 : vector<1x32xf32> to vector<16x32xf32>
    %18 = arith.addf %15, %17 : vector<16x32xf32>
    %19 = vector.extract_strided_slice %10 {offsets = [1, 0], sizes = [1, 32], strides = [1, 1]} : vector<3x32xf32> to vector<1x32xf32>
    %20 = vector.extract_strided_slice %10 {offsets = [2, 0], sizes = [1, 32], strides = [1, 1]} : vector<3x32xf32> to vector<1x32xf32>
    %cst_25 = arith.constant dense<0.000000e+00> : vector<16xf32>
    %21 = vector.multi_reduction <add>, %18, %cst_25 [1] : vector<16x32xf32> to vector<16xf32>
    %22 = vector.shape_cast %21 : vector<16xf32> to vector<16x1xf32>
    %cst_26 = arith.constant 3.200000e+01 : f32
    %23 = vector.broadcast %cst_26 : f32 to vector<16x1xf32>
    %24 = arith.divf %22, %23 : vector<16x1xf32>
    %25 = vector.broadcast %24 : vector<16x1xf32> to vector<16x32xf32>
    %26 = arith.subf %18, %25 : vector<16x32xf32>
    %27 = arith.mulf %26, %26 : vector<16x32xf32>
    %cst_27 = arith.constant dense<0.000000e+00> : vector<16xf32>
    %28 = vector.multi_reduction <add>, %27, %cst_27 [1] : vector<16x32xf32> to vector<16xf32>
    %29 = vector.shape_cast %28 : vector<16xf32> to vector<16x1xf32>
    %cst_28 = arith.constant 3.200000e+01 : f32
    %30 = vector.broadcast %cst_28 : f32 to vector<16x1xf32>
    %31 = arith.divf %29, %30 : vector<16x1xf32>
    %32 = vector.broadcast %24 : vector<16x1xf32> to vector<16x32xf32>
    %33 = arith.subf %18, %32 : vector<16x32xf32>
    %cst_29 = arith.constant 9.99999974E-6 : f32
    %34 = vector.broadcast %cst_29 : f32 to vector<16x1xf32>
    %35 = arith.addf %31, %34 : vector<16x1xf32>
    %36 = math.rsqrt %35 : vector<16x1xf32>
    %37 = vector.broadcast %36 : vector<16x1xf32> to vector<16x32xf32>
    %38 = arith.mulf %33, %37 : vector<16x32xf32>
    %39 = vector.broadcast %19 : vector<1x32xf32> to vector<16x32xf32>
    %40 = arith.mulf %38, %39 : vector<16x32xf32>
    %41 = vector.broadcast %20 : vector<1x32xf32> to vector<16x32xf32>
    %42 = arith.addf %40, %41 : vector<16x32xf32>
    %43 = math.absf %42 : vector<16x32xf32>
    %cst_30 = arith.constant 0.000000e+00 : f32
    %44 = vector.broadcast %cst_30 : f32 to vector<16x32xf32>
    %45 = arith.subf %44, %43 : vector<16x32xf32>
    %46 = arith.truncf %45 : vector<16x32xf32> to vector<16x32xbf16>
    %47 = math.exp %46 : vector<16x32xbf16>
    %48 = arith.extf %47 : vector<16x32xbf16> to vector<16x32xf32>
    %49 = arith.mulf %48, %48 : vector<16x32xf32>
    %cst_31 = arith.constant 2.000000e+00 : f32
    %50 = vector.broadcast %cst_31 : f32 to vector<16x32xf32>
    %51 = arith.mulf %50, %48 : vector<16x32xf32>
    %cst_32 = arith.constant 0.000000e+00 : f32
    %52 = vector.broadcast %cst_32 : f32 to vector<16x32xf32>
    %53 = arith.cmpf oge, %42, %52 : vector<16x32xf32>
    %cst_33 = arith.constant 1.000000e+00 : f32
    %54 = vector.broadcast %cst_33 : f32 to vector<16x32xf32>
    %55 = arith.addf %54, %51 : vector<16x32xf32>
    %56 = arith.addf %49, %51 : vector<16x32xf32>
    %57 = arith.select %53, %55, %56 : vector<16x32xi1>, vector<16x32xf32>
    %cst_34 = arith.constant 1.000000e+00 : f32
    %58 = vector.broadcast %cst_34 : f32 to vector<16x32xf32>
    %59 = arith.addf %58, %51 : vector<16x32xf32>
    %cst_35 = arith.constant 2.000000e+00 : f32
    %60 = vector.broadcast %cst_35 : f32 to vector<16x32xf32>
    %61 = arith.mulf %60, %49 : vector<16x32xf32>
    %62 = arith.addf %59, %61 : vector<16x32xf32>
    %63 = arith.addf %49, %51 : vector<16x32xf32>
    %cst_36 = arith.constant 2.000000e+00 : f32
    %64 = vector.broadcast %cst_36 : f32 to vector<16x32xf32>
    %65 = arith.addf %63, %64 : vector<16x32xf32>
    %66 = arith.select %53, %62, %65 : vector<16x32xi1>, vector<16x32xf32>
    %67 = arith.mulf %42, %57 : vector<16x32xf32>
    %68 = tpu.reciprocal %66 {approx = true} : vector<16x32xf32> -> vector<16x32xf32>
    %69 = arith.mulf %67, %68 : vector<16x32xf32>
    %70 = tpu.concatenate %69, %69, %69, %69 in 1 : vector<16x32xf32>, vector<16x32xf32>, vector<16x32xf32>, vector<16x32xf32> -> vector<16x128xf32>
    %c0_37 = arith.constant 0 : index
    %c0_38 = arith.constant 0 : index
    %71 = vector.load %arg9[%c0_37, %c0_38] : memref<128x256xf32, #tpu.memory_space<vmem>>, vector<128x256xf32>
    %cst_39 = arith.constant dense<0.000000e+00> : vector<8x256xf32>
    %72 = tpu.matmul %3, %71, %cst_39 {dimension_numbers = #tpu.dot_dimension_numbers<[1], [0], [0], [1], [0, 0, 1, 1], [], []>} : vector<8x128xf32>, vector<128x256xf32>, vector<8x256xf32> -> vector<8x256xf32>
    %73 = vector.extract_strided_slice %72 {offsets = [0, 0], sizes = [8, 128], strides = [1, 1]} : vector<8x256xf32> to vector<8x128xf32>
    %74 = vector.extract_strided_slice %11 {offsets = [0, 0], sizes = [1, 128], strides = [1, 1]} : vector<4x128xf32> to vector<1x128xf32>
    %75 = vector.broadcast %74 : vector<1x128xf32> to vector<8x128xf32>
    %76 = arith.addf %73, %75 : vector<8x128xf32>
    %77 = vector.extract_strided_slice %11 {offsets = [2, 0], sizes = [1, 128], strides = [1, 1]} : vector<4x128xf32> to vector<1x128xf32>
    %78 = vector.extract_strided_slice %11 {offsets = [3, 0], sizes = [1, 128], strides = [1, 1]} : vector<4x128xf32> to vector<1x128xf32>
    %79 = arith.truncf %76 : vector<8x128xf32> to vector<8x128xbf16>
    %cst_40 = arith.constant dense<0.000000e+00> : vector<8x128xf32>
    %80 = tpu.matmul %79, %8, %cst_40 {dimension_numbers = #tpu.dot_dimension_numbers<[1], [0], [0], [1], [0, 0, 1, 1], [], []>} : vector<8x128xbf16>, vector<128x128xbf16>, vector<8x128xf32> -> vector<8x128xf32>
    %81 = arith.subf %76, %80 : vector<8x128xf32>
    %82 = arith.mulf %81, %81 : vector<8x128xf32>
    %83 = arith.truncf %82 : vector<8x128xf32> to vector<8x128xbf16>
    %cst_41 = arith.constant dense<0.000000e+00> : vector<8x128xf32>
    %84 = tpu.matmul %83, %8, %cst_41 {dimension_numbers = #tpu.dot_dimension_numbers<[1], [0], [0], [1], [0, 0, 1, 1], [], []>} : vector<8x128xbf16>, vector<128x128xbf16>, vector<8x128xf32> -> vector<8x128xf32>
    %cst_42 = arith.constant 9.99999974E-6 : f32
    %85 = vector.broadcast %cst_42 : f32 to vector<8x128xf32>
    %86 = arith.addf %84, %85 : vector<8x128xf32>
    %87 = math.rsqrt %86 : vector<8x128xf32>
    %88 = arith.mulf %81, %87 : vector<8x128xf32>
    %89 = vector.broadcast %77 : vector<1x128xf32> to vector<8x128xf32>
    %90 = arith.mulf %88, %89 : vector<8x128xf32>
    %91 = vector.broadcast %78 : vector<1x128xf32> to vector<8x128xf32>
    %92 = arith.addf %90, %91 : vector<8x128xf32>
    %93 = math.absf %92 : vector<8x128xf32>
    %cst_43 = arith.constant 0.000000e+00 : f32
    %94 = vector.broadcast %cst_43 : f32 to vector<8x128xf32>
    %95 = arith.subf %94, %93 : vector<8x128xf32>
    %96 = arith.truncf %95 : vector<8x128xf32> to vector<8x128xbf16>
    %97 = math.exp %96 : vector<8x128xbf16>
    %98 = arith.extf %97 : vector<8x128xbf16> to vector<8x128xf32>
    %99 = arith.mulf %98, %98 : vector<8x128xf32>
    %cst_44 = arith.constant 2.000000e+00 : f32
    %100 = vector.broadcast %cst_44 : f32 to vector<8x128xf32>
    %101 = arith.mulf %100, %98 : vector<8x128xf32>
    %cst_45 = arith.constant 0.000000e+00 : f32
    %102 = vector.broadcast %cst_45 : f32 to vector<8x128xf32>
    %103 = arith.cmpf oge, %92, %102 : vector<8x128xf32>
    %cst_46 = arith.constant 1.000000e+00 : f32
    %104 = vector.broadcast %cst_46 : f32 to vector<8x128xf32>
    %105 = arith.addf %104, %101 : vector<8x128xf32>
    %106 = arith.addf %99, %101 : vector<8x128xf32>
    %107 = arith.select %103, %105, %106 : vector<8x128xi1>, vector<8x128xf32>
    %cst_47 = arith.constant 1.000000e+00 : f32
    %108 = vector.broadcast %cst_47 : f32 to vector<8x128xf32>
    %109 = arith.addf %108, %101 : vector<8x128xf32>
    %cst_48 = arith.constant 2.000000e+00 : f32
    %110 = vector.broadcast %cst_48 : f32 to vector<8x128xf32>
    %111 = arith.mulf %110, %99 : vector<8x128xf32>
    %112 = arith.addf %109, %111 : vector<8x128xf32>
    %113 = arith.addf %99, %101 : vector<8x128xf32>
    %cst_49 = arith.constant 2.000000e+00 : f32
    %114 = vector.broadcast %cst_49 : f32 to vector<8x128xf32>
    %115 = arith.addf %113, %114 : vector<8x128xf32>
    %116 = arith.select %103, %112, %115 : vector<8x128xi1>, vector<8x128xf32>
    %117 = arith.mulf %92, %107 : vector<8x128xf32>
    %118 = tpu.reciprocal %116 {approx = true} : vector<8x128xf32> -> vector<8x128xf32>
    %119 = arith.mulf %117, %118 : vector<8x128xf32>
    %120 = vector.extract_strided_slice %72 {offsets = [0, 128], sizes = [8, 128], strides = [1, 1]} : vector<8x256xf32> to vector<8x128xf32>
    %121 = vector.extract_strided_slice %11 {offsets = [1, 0], sizes = [1, 128], strides = [1, 1]} : vector<4x128xf32> to vector<1x128xf32>
    %122 = vector.broadcast %121 : vector<1x128xf32> to vector<8x128xf32>
    %123 = arith.addf %120, %122 : vector<8x128xf32>
    %124 = vector.shape_cast %119 : vector<8x128xf32> to vector<1x8x128xf32>
    %125 = vector.shape_cast %70 : vector<16x128xf32> to vector<16x1x128xf32>
    %126 = vector.broadcast %124 : vector<1x8x128xf32> to vector<16x8x128xf32>
    %127 = vector.broadcast %125 : vector<16x1x128xf32> to vector<16x8x128xf32>
    %128 = arith.subf %126, %127 : vector<16x8x128xf32>
    %129 = vector.shape_cast %128 : vector<16x8x128xf32> to vector<128x128xf32>
    %c0_50 = arith.constant 0 : index
    %c0_51 = arith.constant 0 : index
    %c0_52 = arith.constant 0 : index
    %130 = vector.load %arg4[%c0_50, %c0_51, %c0_52] : memref<1x128x128xbf16, #tpu.memory_space<vmem>>, vector<1x128x128xbf16>
    %131 = vector.shape_cast %130 : vector<1x128x128xbf16> to vector<128x128xbf16>
    %c0_53 = arith.constant 0 : index
    %c0_54 = arith.constant 0 : index
    %132 = vector.load %arg11[%c0_53, %c0_54] : memref<128x256xbf16, #tpu.memory_space<vmem>>, vector<128x256xbf16>
    %cst_55 = arith.constant dense<0.000000e+00> : vector<128x256xf32>
    %133 = tpu.matmul %131, %132, %cst_55 {dimension_numbers = #tpu.dot_dimension_numbers<[1], [0], [0], [1], [0, 0, 1, 1], [], []>} : vector<128x128xbf16>, vector<128x256xbf16>, vector<128x256xf32> -> vector<128x256xf32>
    %134 = vector.extract_strided_slice %12 {offsets = [0, 0], sizes = [1, 256], strides = [1, 1]} : vector<4x256xf32> to vector<1x256xf32>
    %135 = vector.broadcast %134 : vector<1x256xf32> to vector<128x256xf32>
    %136 = arith.addf %133, %135 : vector<128x256xf32>
    %137 = vector.extract_strided_slice %12 {offsets = [1, 0], sizes = [1, 256], strides = [1, 1]} : vector<4x256xf32> to vector<1x256xf32>
    %138 = vector.extract_strided_slice %12 {offsets = [2, 0], sizes = [1, 256], strides = [1, 1]} : vector<4x256xf32> to vector<1x256xf32>
    %139 = arith.truncf %136 : vector<128x256xf32> to vector<128x256xbf16>
    %cst_56 = arith.constant dense<0.000000e+00> : vector<128x256xf32>
    %140 = tpu.matmul %139, %9, %cst_56 {dimension_numbers = #tpu.dot_dimension_numbers<[1], [0], [0], [1], [0, 0, 1, 1], [], []>} : vector<128x256xbf16>, vector<256x256xbf16>, vector<128x256xf32> -> vector<128x256xf32>
    %141 = arith.subf %136, %140 : vector<128x256xf32>
    %142 = arith.mulf %141, %141 : vector<128x256xf32>
    %143 = arith.truncf %142 : vector<128x256xf32> to vector<128x256xbf16>
    %cst_57 = arith.constant dense<0.000000e+00> : vector<128x256xf32>
    %144 = tpu.matmul %143, %9, %cst_57 {dimension_numbers = #tpu.dot_dimension_numbers<[1], [0], [0], [1], [0, 0, 1, 1], [], []>} : vector<128x256xbf16>, vector<256x256xbf16>, vector<128x256xf32> -> vector<128x256xf32>
    %cst_58 = arith.constant 9.99999974E-6 : f32
    %145 = vector.broadcast %cst_58 : f32 to vector<128x256xf32>
    %146 = arith.addf %144, %145 : vector<128x256xf32>
    %147 = math.rsqrt %146 : vector<128x256xf32>
    %148 = arith.mulf %141, %147 : vector<128x256xf32>
    %149 = vector.broadcast %137 : vector<1x256xf32> to vector<128x256xf32>
    %150 = arith.mulf %148, %149 : vector<128x256xf32>
    %151 = vector.broadcast %138 : vector<1x256xf32> to vector<128x256xf32>
    %152 = arith.addf %150, %151 : vector<128x256xf32>
    %153 = math.absf %152 : vector<128x256xf32>
    %cst_59 = arith.constant 0.000000e+00 : f32
    %154 = vector.broadcast %cst_59 : f32 to vector<128x256xf32>
    %155 = arith.subf %154, %153 : vector<128x256xf32>
    %156 = arith.truncf %155 : vector<128x256xf32> to vector<128x256xbf16>
    %157 = math.exp %156 : vector<128x256xbf16>
    %158 = arith.extf %157 : vector<128x256xbf16> to vector<128x256xf32>
    %159 = arith.mulf %158, %158 : vector<128x256xf32>
    %cst_60 = arith.constant 2.000000e+00 : f32
    %160 = vector.broadcast %cst_60 : f32 to vector<128x256xf32>
    %161 = arith.mulf %160, %158 : vector<128x256xf32>
    %cst_61 = arith.constant 0.000000e+00 : f32
    %162 = vector.broadcast %cst_61 : f32 to vector<128x256xf32>
    %163 = arith.cmpf oge, %152, %162 : vector<128x256xf32>
    %cst_62 = arith.constant 1.000000e+00 : f32
    %164 = vector.broadcast %cst_62 : f32 to vector<128x256xf32>
    %165 = arith.addf %164, %161 : vector<128x256xf32>
    %166 = arith.addf %159, %161 : vector<128x256xf32>
    %167 = arith.select %163, %165, %166 : vector<128x256xi1>, vector<128x256xf32>
    %cst_63 = arith.constant 1.000000e+00 : f32
    %168 = vector.broadcast %cst_63 : f32 to vector<128x256xf32>
    %169 = arith.addf %168, %161 : vector<128x256xf32>
    %cst_64 = arith.constant 2.000000e+00 : f32
    %170 = vector.broadcast %cst_64 : f32 to vector<128x256xf32>
    %171 = arith.mulf %170, %159 : vector<128x256xf32>
    %172 = arith.addf %169, %171 : vector<128x256xf32>
    %173 = arith.addf %159, %161 : vector<128x256xf32>
    %cst_65 = arith.constant 2.000000e+00 : f32
    %174 = vector.broadcast %cst_65 : f32 to vector<128x256xf32>
    %175 = arith.addf %173, %174 : vector<128x256xf32>
    %176 = arith.select %163, %172, %175 : vector<128x256xi1>, vector<128x256xf32>
    %177 = arith.mulf %152, %167 : vector<128x256xf32>
    %178 = tpu.reciprocal %176 {approx = true} : vector<128x256xf32> -> vector<128x256xf32>
    %179 = arith.mulf %177, %178 : vector<128x256xf32>
    %180 = arith.truncf %179 : vector<128x256xf32> to vector<128x256xbf16>
    %c0_66 = arith.constant 0 : index
    %c0_67 = arith.constant 0 : index
    %181 = vector.load %arg13[%c0_66, %c0_67] : memref<256x256xbf16, #tpu.memory_space<vmem>>, vector<256x256xbf16>
    %cst_68 = arith.constant dense<0.000000e+00> : vector<128x256xf32>
    %182 = tpu.matmul %180, %181, %cst_68 {dimension_numbers = #tpu.dot_dimension_numbers<[1], [0], [0], [1], [0, 0, 1, 1], [], []>} : vector<128x256xbf16>, vector<256x256xbf16>, vector<128x256xf32> -> vector<128x256xf32>
    %183 = vector.extract_strided_slice %12 {offsets = [3, 0], sizes = [1, 256], strides = [1, 1]} : vector<4x256xf32> to vector<1x256xf32>
    %184 = vector.broadcast %183 : vector<1x256xf32> to vector<128x256xf32>
    %185 = arith.addf %182, %184 : vector<128x256xf32>
    %186 = vector.extract_strided_slice %185 {offsets = [0, 0], sizes = [128, 128], strides = [1, 1]} : vector<128x256xf32> to vector<128x128xf32>
    %187 = arith.mulf %129, %186 : vector<128x128xf32>
    %188 = vector.extract_strided_slice %185 {offsets = [0, 128], sizes = [128, 128], strides = [1, 1]} : vector<128x256xf32> to vector<128x128xf32>
    %189 = arith.addf %187, %188 : vector<128x128xf32>
    %190 = arith.truncf %189 : vector<128x128xf32> to vector<128x128xbf16>
    %c0_69 = arith.constant 0 : index
    %c0_70 = arith.constant 0 : index
    %c0_71 = arith.constant 0 : index
    %191 = vector.load %arg20[%c0_69, %c0_70, %c0_71] : memref<1x128x128xbf16, #tpu.memory_space<vmem>>, vector<1x128x128xbf16>
    %192 = vector.shape_cast %191 : vector<1x128x128xbf16> to vector<128x128xbf16>
    %193 = vector.shape_cast %190 : vector<128x128xbf16> to vector<1x128x128xbf16>
    tpu.vector_store %arg20[%c0_69, %c0_70, %c0_71], %193 {strides = array<i32>} : memref<1x128x128xbf16, #tpu.memory_space<vmem>>, vector<1x128x128xbf16>,
    %194 = arith.truncf %189 : vector<128x128xf32> to vector<128x128xbf16>
    %c0_72 = arith.constant 0 : index
    %c0_73 = arith.constant 0 : index
    %195 = vector.load %arg14[%c0_72, %c0_73] : memref<128x128xbf16, #tpu.memory_space<vmem>>, vector<128x128xbf16>
    %cst_74 = arith.constant dense<0.000000e+00> : vector<128x128xf32>
    %196 = tpu.matmul %194, %195, %cst_74 {dimension_numbers = #tpu.dot_dimension_numbers<[1], [0], [0], [1], [0, 0, 1, 1], [], []>} : vector<128x128xbf16>, vector<128x128xbf16>, vector<128x128xf32> -> vector<128x128xf32>
    %197 = vector.extract_strided_slice %13 {offsets = [0, 0], sizes = [1, 128], strides = [1, 1]} : vector<4x128xf32> to vector<1x128xf32>
    %198 = vector.broadcast %197 : vector<1x128xf32> to vector<128x128xf32>
    %199 = arith.addf %196, %198 : vector<128x128xf32>
    %200 = vector.extract_strided_slice %13 {offsets = [1, 0], sizes = [1, 128], strides = [1, 1]} : vector<4x128xf32> to vector<1x128xf32>
    %201 = vector.extract_strided_slice %13 {offsets = [2, 0], sizes = [1, 128], strides = [1, 1]} : vector<4x128xf32> to vector<1x128xf32>
    %202 = arith.truncf %199 : vector<128x128xf32> to vector<128x128xbf16>
    %cst_75 = arith.constant dense<0.000000e+00> : vector<128x128xf32>
    %203 = tpu.matmul %202, %8, %cst_75 {dimension_numbers = #tpu.dot_dimension_numbers<[1], [0], [0], [1], [0, 0, 1, 1], [], []>} : vector<128x128xbf16>, vector<128x128xbf16>, vector<128x128xf32> -> vector<128x128xf32>
    %204 = arith.subf %199, %203 : vector<128x128xf32>
    %205 = arith.mulf %204, %204 : vector<128x128xf32>
    %206 = arith.truncf %205 : vector<128x128xf32> to vector<128x128xbf16>
    %cst_76 = arith.constant dense<0.000000e+00> : vector<128x128xf32>
    %207 = tpu.matmul %206, %8, %cst_76 {dimension_numbers = #tpu.dot_dimension_numbers<[1], [0], [0], [1], [0, 0, 1, 1], [], []>} : vector<128x128xbf16>, vector<128x128xbf16>, vector<128x128xf32> -> vector<128x128xf32>
    %cst_77 = arith.constant 9.99999974E-6 : f32
    %208 = vector.broadcast %cst_77 : f32 to vector<128x128xf32>
    %209 = arith.addf %207, %208 : vector<128x128xf32>
    %210 = math.rsqrt %209 : vector<128x128xf32>
    %211 = arith.mulf %204, %210 : vector<128x128xf32>
    %212 = vector.broadcast %200 : vector<1x128xf32> to vector<128x128xf32>
    %213 = arith.mulf %211, %212 : vector<128x128xf32>
    %214 = vector.broadcast %201 : vector<1x128xf32> to vector<128x128xf32>
    %215 = arith.addf %213, %214 : vector<128x128xf32>
    %216 = math.absf %215 : vector<128x128xf32>
    %cst_78 = arith.constant 0.000000e+00 : f32
    %217 = vector.broadcast %cst_78 : f32 to vector<128x128xf32>
    %218 = arith.subf %217, %216 : vector<128x128xf32>
    %219 = arith.truncf %218 : vector<128x128xf32> to vector<128x128xbf16>
    %220 = math.exp %219 : vector<128x128xbf16>
    %221 = arith.extf %220 : vector<128x128xbf16> to vector<128x128xf32>
    %222 = arith.mulf %221, %221 : vector<128x128xf32>
    %cst_79 = arith.constant 2.000000e+00 : f32
    %223 = vector.broadcast %cst_79 : f32 to vector<128x128xf32>
    %224 = arith.mulf %223, %221 : vector<128x128xf32>
    %cst_80 = arith.constant 0.000000e+00 : f32
    %225 = vector.broadcast %cst_80 : f32 to vector<128x128xf32>
    %226 = arith.cmpf oge, %215, %225 : vector<128x128xf32>
    %cst_81 = arith.constant 1.000000e+00 : f32
    %227 = vector.broadcast %cst_81 : f32 to vector<128x128xf32>
    %228 = arith.addf %227, %224 : vector<128x128xf32>
    %229 = arith.addf %222, %224 : vector<128x128xf32>
    %230 = arith.select %226, %228, %229 : vector<128x128xi1>, vector<128x128xf32>
    %cst_82 = arith.constant 1.000000e+00 : f32
    %231 = vector.broadcast %cst_82 : f32 to vector<128x128xf32>
    %232 = arith.addf %231, %224 : vector<128x128xf32>
    %cst_83 = arith.constant 2.000000e+00 : f32
    %233 = vector.broadcast %cst_83 : f32 to vector<128x128xf32>
    %234 = arith.mulf %233, %222 : vector<128x128xf32>
    %235 = arith.addf %232, %234 : vector<128x128xf32>
    %236 = arith.addf %222, %224 : vector<128x128xf32>
    %cst_84 = arith.constant 2.000000e+00 : f32
    %237 = vector.broadcast %cst_84 : f32 to vector<128x128xf32>
    %238 = arith.addf %236, %237 : vector<128x128xf32>
    %239 = arith.select %226, %235, %238 : vector<128x128xi1>, vector<128x128xf32>
    %240 = arith.mulf %215, %230 : vector<128x128xf32>
    %241 = tpu.reciprocal %239 {approx = true} : vector<128x128xf32> -> vector<128x128xf32>
    %242 = arith.mulf %240, %241 : vector<128x128xf32>
    %243 = arith.truncf %242 : vector<128x128xf32> to vector<128x128xbf16>
    %c0_85 = arith.constant 0 : index
    %c0_86 = arith.constant 0 : index
    %244 = vector.load %arg15[%c0_85, %c0_86] : memref<128x128xbf16, #tpu.memory_space<vmem>>, vector<128x128xbf16>
    %cst_87 = arith.constant dense<0.000000e+00> : vector<128x128xf32>
    %245 = tpu.matmul %243, %244, %cst_87 {dimension_numbers = #tpu.dot_dimension_numbers<[1], [0], [0], [1], [0, 0, 1, 1], [], []>} : vector<128x128xbf16>, vector<128x128xbf16>, vector<128x128xf32> -> vector<128x128xf32>
    %246 = vector.extract_strided_slice %13 {offsets = [3, 0], sizes = [1, 128], strides = [1, 1]} : vector<4x128xf32> to vector<1x128xf32>
    %247 = vector.broadcast %246 : vector<1x128xf32> to vector<128x128xf32>
    %248 = arith.addf %245, %247 : vector<128x128xf32>
    %249 = vector.shape_cast %248 : vector<128x128xf32> to vector<16x8x128xf32>
    %cst_88 = arith.constant dense<0xFF800000> : vector<16x128xf32>
    %250 = vector.multi_reduction <maximumf>, %249, %cst_88 [1] : vector<16x8x128xf32> to vector<16x128xf32>
    %c32_i32 = arith.constant 32 : i32
    %251 = tpu.dynamic_rotate %250 by %c32_i32 dim 1 : vector<16x128xf32>, i32 -> vector<16x128xf32>
    %252 = arith.maximumf %250, %251 : vector<16x128xf32>
    %c64_i32 = arith.constant 64 : i32
    %253 = tpu.dynamic_rotate %252 by %c64_i32 dim 1 : vector<16x128xf32>, i32 -> vector<16x128xf32>
    %254 = arith.maximumf %252, %253 : vector<16x128xf32>
    %255 = vector.shape_cast %254 : vector<16x128xf32> to vector<16x1x128xf32>
    %256 = vector.broadcast %255 : vector<16x1x128xf32> to vector<16x8x128xf32>
    %257 = arith.subf %249, %256 : vector<16x8x128xf32>
    %258 = math.exp %257 : vector<16x8x128xf32>
    %259 = vector.shape_cast %5 : vector<8x128xf32> to vector<1x8x128xf32>
    %260 = vector.broadcast %259 : vector<1x8x128xf32> to vector<16x8x128xf32>
    %261 = arith.mulf %258, %260 : vector<16x8x128xf32>
    %cst_89 = arith.constant dense<0.000000e+00> : vector<16x128xf32>
    %262 = vector.multi_reduction <add>, %261, %cst_89 [1] : vector<16x8x128xf32> to vector<16x128xf32>
    %c32_i32_90 = arith.constant 32 : i32
    %263 = tpu.dynamic_rotate %262 by %c32_i32_90 dim 1 : vector<16x128xf32>, i32 -> vector<16x128xf32>
    %264 = arith.addf %262, %263 : vector<16x128xf32>
    %c64_i32_91 = arith.constant 64 : i32
    %265 = tpu.dynamic_rotate %264 by %c64_i32_91 dim 1 : vector<16x128xf32>, i32 -> vector<16x128xf32>
    %266 = arith.addf %264, %265 : vector<16x128xf32>
    %267 = tpu.reciprocal %266 {approx = true} : vector<16x128xf32> -> vector<16x128xf32>
    %268 = vector.shape_cast %267 : vector<16x128xf32> to vector<16x1x128xf32>
    %269 = vector.broadcast %268 : vector<16x1x128xf32> to vector<16x8x128xf32>
    %270 = arith.mulf %261, %269 : vector<16x8x128xf32>
    %271 = vector.shape_cast %123 : vector<8x128xf32> to vector<1x8x128xf32>
    %272 = vector.broadcast %271 : vector<1x8x128xf32> to vector<16x8x128xf32>
    %273 = arith.mulf %270, %272 : vector<16x8x128xf32>
    %cst_92 = arith.constant dense<0.000000e+00> : vector<16x128xf32>
    %274 = vector.multi_reduction <add>, %273, %cst_92 [1] : vector<16x8x128xf32> to vector<16x128xf32>
    %c32_i32_93 = arith.constant 32 : i32
    %275 = tpu.dynamic_rotate %274 by %c32_i32_93 dim 1 : vector<16x128xf32>, i32 -> vector<16x128xf32>
    %276 = arith.addf %274, %275 : vector<16x128xf32>
    %c64_i32_94 = arith.constant 64 : i32
    %277 = tpu.dynamic_rotate %276 by %c64_i32_94 dim 1 : vector<16x128xf32>, i32 -> vector<16x128xf32>
    %278 = arith.addf %276, %277 : vector<16x128xf32>
    %279 = vector.extract_strided_slice %278 {offsets = [0, 0], sizes = [16, 32], strides = [1, 1]} : vector<16x128xf32> to vector<16x32xf32>
    %cst_95 = arith.constant 0.000000e+00 : f32
    %280 = vector.broadcast %cst_95 : f32 to vector<16x1xf32>
    %281 = arith.cmpf ogt, %7, %280 : vector<16x1xf32>
    %282 = arith.extui %281 : vector<16x1xi1> to vector<16x1xi32>
    %283 = arith.sitofp %282 : vector<16x1xi32> to vector<16x1xf32>
    %284 = vector.broadcast %283 : vector<16x1xf32> to vector<16x32xf32>
    %285 = arith.mulf %279, %284 : vector<16x32xf32>
    %c0_96 = arith.constant 0 : index
    %c0_97 = arith.constant 0 : index
    %c0_98 = arith.constant 0 : index
    %286 = vector.load %arg19[%c0_96, %c0_97, %c0_98] : memref<1x16x32xf32, #tpu.memory_space<vmem>>, vector<1x16x32xf32>
    %287 = vector.shape_cast %286 : vector<1x16x32xf32> to vector<16x32xf32>
    %288 = vector.shape_cast %285 : vector<16x32xf32> to vector<1x16x32xf32>
    tpu.vector_store %arg19[%c0_96, %c0_97, %c0_98], %288 {strides = array<i32>} : memref<1x16x32xf32, #tpu.memory_space<vmem>>, vector<1x16x32xf32>,
    return
  }
  func.func @transform_0(%arg0: i32, %arg1: i32) -> (i32, i32, i32) {
    %c0_i32 = arith.constant 0 : i32
    %c0_i32_0 = arith.constant 0 : i32
    return %arg0, %arg1, %c0_i32 : i32, i32, i32
  }
  func.func @transform_1(%arg0: i32, %arg1: i32) -> (i32, i32, i32) {
    %c0_i32 = arith.constant 0 : i32
    %c0_i32_0 = arith.constant 0 : i32
    %c0_i32_1 = arith.constant 0 : i32
    return %arg0, %c0_i32, %c0_i32_0 : i32, i32, i32
  }
  func.func @transform_2(%arg0: i32, %arg1: i32) -> (i32, i32, i32) {
    %c0_i32 = arith.constant 0 : i32
    %c0_i32_0 = arith.constant 0 : i32
    return %arg0, %arg1, %c0_i32 : i32, i32, i32
  }
  func.func @transform_3(%arg0: i32, %arg1: i32) -> (i32, i32, i32) {
    %c0_i32 = arith.constant 0 : i32
    %c0_i32_0 = arith.constant 0 : i32
    %c0_i32_1 = arith.constant 0 : i32
    return %arg0, %c0_i32, %c0_i32_0 : i32, i32, i32
  }
  func.func @transform_4(%arg0: i32, %arg1: i32) -> (i32, i32, i32) {
    %c0_i32 = arith.constant 0 : i32
    %c0_i32_0 = arith.constant 0 : i32
    return %arg0, %arg1, %c0_i32 : i32, i32, i32
  }
  func.func @transform_5(%arg0: i32, %arg1: i32) -> (i32, i32) {
    %c0_i32 = arith.constant 0 : i32
    %c0_i32_0 = arith.constant 0 : i32
    %c0_i32_1 = arith.constant 0 : i32
    return %c0_i32, %c0_i32_0 : i32, i32
  }
  func.func @transform_6(%arg0: i32, %arg1: i32) -> (i32, i32) {
    %c0_i32 = arith.constant 0 : i32
    %c0_i32_0 = arith.constant 0 : i32
    %c0_i32_1 = arith.constant 0 : i32
    return %c0_i32, %c0_i32_0 : i32, i32
  }
  func.func @transform_7(%arg0: i32, %arg1: i32) -> (i32, i32) {
    %c0_i32 = arith.constant 0 : i32
    %c0_i32_0 = arith.constant 0 : i32
    %c0_i32_1 = arith.constant 0 : i32
    return %c0_i32, %c0_i32_0 : i32, i32
  }
  func.func @transform_8(%arg0: i32, %arg1: i32) -> (i32, i32) {
    %c0_i32 = arith.constant 0 : i32
    %c0_i32_0 = arith.constant 0 : i32
    %c0_i32_1 = arith.constant 0 : i32
    return %c0_i32, %c0_i32_0 : i32, i32
  }
  func.func @transform_9(%arg0: i32, %arg1: i32) -> (i32, i32) {
    %c0_i32 = arith.constant 0 : i32
    %c0_i32_0 = arith.constant 0 : i32
    %c0_i32_1 = arith.constant 0 : i32
    return %c0_i32, %c0_i32_0 : i32, i32
  }
  func.func @transform_10(%arg0: i32, %arg1: i32) -> (i32, i32) {
    %c0_i32 = arith.constant 0 : i32
    %c0_i32_0 = arith.constant 0 : i32
    %c0_i32_1 = arith.constant 0 : i32
    return %c0_i32, %c0_i32_0 : i32, i32
  }
  func.func @transform_11(%arg0: i32, %arg1: i32) -> (i32, i32) {
    %c0_i32 = arith.constant 0 : i32
    %c0_i32_0 = arith.constant 0 : i32
    %c0_i32_1 = arith.constant 0 : i32
    return %c0_i32, %c0_i32_0 : i32, i32
  }
  func.func @transform_12(%arg0: i32, %arg1: i32) -> (i32, i32) {
    %c0_i32 = arith.constant 0 : i32
    %c0_i32_0 = arith.constant 0 : i32
    %c0_i32_1 = arith.constant 0 : i32
    return %c0_i32, %c0_i32_0 : i32, i32
  }
  func.func @transform_13(%arg0: i32, %arg1: i32) -> (i32, i32) {
    %c0_i32 = arith.constant 0 : i32
    %c0_i32_0 = arith.constant 0 : i32
    %c0_i32_1 = arith.constant 0 : i32
    return %c0_i32, %c0_i32_0 : i32, i32
  }
  func.func @transform_14(%arg0: i32, %arg1: i32) -> (i32, i32) {
    %c0_i32 = arith.constant 0 : i32
    %c0_i32_0 = arith.constant 0 : i32
    %c0_i32_1 = arith.constant 0 : i32
    return %c0_i32, %c0_i32_0 : i32, i32
  }
  func.func @transform_15(%arg0: i32, %arg1: i32) -> (i32, i32) {
    %c0_i32 = arith.constant 0 : i32
    %c0_i32_0 = arith.constant 0 : i32
    %c0_i32_1 = arith.constant 0 : i32
    return %c0_i32, %c0_i32_0 : i32, i32
  }
  func.func @transform_16(%arg0: i32, %arg1: i32) -> (i32, i32) {
    %c0_i32 = arith.constant 0 : i32
    %c0_i32_0 = arith.constant 0 : i32
    %c0_i32_1 = arith.constant 0 : i32
    return %c0_i32, %c0_i32_0 : i32, i32
  }
  func.func @transform_17(%arg0: i32, %arg1: i32) -> (i32, i32, i32) {
    %c0_i32 = arith.constant 0 : i32
    %c0_i32_0 = arith.constant 0 : i32
    return %arg0, %arg1, %c0_i32 : i32, i32, i32
  }
  func.func @transform_18(%arg0: i32, %arg1: i32) -> (i32, i32, i32) {
    %c0_i32 = arith.constant 0 : i32
    %c0_i32_0 = arith.constant 0 : i32
    return %arg0, %arg1, %c0_i32 : i32, i32, i32
  }
}

</mosaic_0001>

<llo_original>
// kernel: tile.102
$region0: #{tile.102}
  #allocation0 [shape = 's32[1]{0}', space=sflag, size = 0x4, scoped, tag = 'scoped memory for tile.102']
  %s0 = inlined_call_operand.vmem [shape: f32[32], index: 0, kind: input, shape index: {}]
  %s1 = inlined_call_operand.vmem [shape: f32[4,32], index: 1, kind: output, shape index: {}]
  // Predicated region
  $region2: #{tile.102} parent=0 // pred_check
    _
  $region3: #{tile.102} parent=0 // pred_check_branch
    %3 = sbr.rel (0) target = $region5
  $region4: #{tile.102} parent=0 // pred_region
    _
  $region5: #{tile.102} parent=0 // pred_fallthru
    _
  %v4 = vld [vmem:[%s0] ss:$0 sm:$0xff]
  %5 = vst [vmem:[%s1] sm:$0xf] %v4

// kernel: tile.103
$region0: #{tile.103}
  %s0 = inlined_call_operand.vmem [shape: f32[4,32], index: 0, kind: input, shape index: {}]
  %s1 = inlined_call_operand.vmem [shape: f32[1,128], index: 1, kind: output, shape index: {}]
  $region1: #{tile.103} parent=0
    #allocation0 [shape = 'u8[4096]{0}', space=vmem, size = 0x1000, scoped, tag = 'scoped mem for output reshape']
    #allocation1 [shape = 'u8[4096]{0}', space=vmem, size = 0x1000, scoped, tag = 'scoped mem for input reshape']
    %s3 = sshllo.u32 0, 4
    %v4 = vld [vmem:[%s0] sm:%s3]
    %5 = vst [vmem:[#allocation1] sm:%s3] %v4
    %v6 = vld [vmem:[#allocation1] sm:$0x1]
    %vm7 = vcmask 261120
    %8 = vst.msk [vmem:[#allocation0] sm:$0x1] %vm7, %v6
    %s9 = scalar_lea.vmem [#allocation1], 3
    %v10 = vld [vmem:[%s9] sm:$0x1]
    %11 = vrot.lane.b32.xlu0 %v10, 96
    %v12 = vpop.permute.xlu0 %11
    %vm13 = vcmask 1048320
    %14 = vst.msk [vmem:[#allocation0] sm:$0x1] %vm13, %v12
    %s15 = scalar_lea.vmem [#allocation1], 2
    %v16 = vld [vmem:[%s15] sm:$0x1]
    %17 = vrot.lane.b32.xlu0 %v16, 64
    %v18 = vpop.permute.xlu0 %17
    %vm19 = vcmask 785920
    %20 = vst.msk [vmem:[#allocation0] sm:$0x1] %vm19, %v18
    %s21 = scalar_lea.vmem [#allocation1], 1
    %v22 = vld [vmem:[%s21] sm:$0x1]
    %23 = vrot.lane.b32.xlu0 %v22, 32
    %v24 = vpop.permute.xlu0 %23
    %vm25 = vcmask 523520
    %26 = vst.msk [vmem:[#allocation0] sm:$0x1] %vm25, %v24
    %s28 = sshllo.u32 0, 1
    %v30 = vld [vmem:[#allocation0] sm:%s28]
    %s31 = sshllo.u32 0, 1
    %32 = vst [vmem:[%s1] sm:%s31] %v30

// kernel: vector_attention.1
$region0: #{vector_attention.1}
  #allocation0 [shape = 'u32[]', space=smem, size = 0x4, offset = 0x4, fixed_abs, tag = 'smem constant byte address 0x4 - core index']
  #allocation1 [shape = 'u32[144,128]{1,0:T(1,128)}', space=vmem, size = 0x12000, scoped, tag = 'internal scratch']
  %s0 = inlined_call_operand.vmem [shape: f32[2,32,32], index: 0, kind: input, shape index: {}]
  %s1 = inlined_call_operand.vmem [shape: f32[2,8,128], index: 1, kind: input, shape index: {}]
  %s2 = inlined_call_operand.vmem [shape: bf16[2,256,128], index: 2, kind: input, shape index: {}]
  %s3 = inlined_call_operand.vmem [shape: f32[2,8,128], index: 3, kind: input, shape index: {}]
  %s4 = inlined_call_operand.vmem [shape: f32[2,32,1], index: 4, kind: input, shape index: {}]
  %s5 = inlined_call_operand.vmem [shape: f32[32,32], index: 5, kind: input, shape index: {}]
  %s6 = inlined_call_operand.vmem [shape: f32[3,32], index: 6, kind: input, shape index: {}]
  %s7 = inlined_call_operand.vmem [shape: f32[128,256], index: 7, kind: input, shape index: {}]
  %s8 = inlined_call_operand.vmem [shape: f32[4,128], index: 8, kind: input, shape index: {}]
  %s9 = inlined_call_operand.vmem [shape: bf16[128,256], index: 9, kind: input, shape index: {}]
  %s10 = inlined_call_operand.vmem [shape: f32[4,256], index: 10, kind: input, shape index: {}]
  %s11 = inlined_call_operand.vmem [shape: bf16[256,256], index: 11, kind: input, shape index: {}]
  %s12 = inlined_call_operand.vmem [shape: bf16[128,128], index: 12, kind: input, shape index: {}]
  %s13 = inlined_call_operand.vmem [shape: bf16[128,128], index: 13, kind: input, shape index: {}]
  %s14 = inlined_call_operand.vmem [shape: f32[4,128], index: 14, kind: input, shape index: {}]
  %s15 = inlined_call_operand.vmem [shape: bf16[128,128], index: 15, kind: input, shape index: {}]
  %s16 = inlined_call_operand.vmem [shape: bf16[256,256], index: 16, kind: input, shape index: {}]
  %s17 = inlined_call_operand.hbm [shape: f32[2,32,32], index: 17, kind: output, shape index: {0}]
  %s18 = inlined_call_operand.vmem [shape: bf16[2,256,128], index: 18, kind: output, shape index: {1}]
  %19 = xla_tuple %s17, %s18
  %s20 = sld [smem:[#allocation0]]
  $region109: #{vector_attention.1} parent=0
    _
  %s22 = ssub.s32 1, %s20
  %s23 = scalar_select 0, %s22, %s20
  $region1: #{vector_attention.1} parent=0
    #allocation2 [shape = 'u8[16384]{0}', space=vmem, size = 0x4000, scoped, tag = 'output window, operand 0']
    #allocation3 [shape = 's32[2]{0}', space=sflag, size = 0x8, scoped, tag = 'scoped memory for vector_attention.1']
    %24 = vsyncpa [#allocation3], 0
    %s25 = scalar_lea.sflag [#allocation3], 1
    %26 = vsyncpa %s25, 0
    loop: start=0, step=1, limit=6
    $region2: #{vector_attention.1} parent=1 // loop_pre_header
      _
    $region3: #{vector_attention.1} parent=1 // loop_header
      %s28 = sphi 0, %s32
      %p29 = scmp.ge.s32.totalorder %s28, 6
      %s35 = sphi 0, %s47
      %s36 = sphi 0, %s43
      %s37 = sphi 0, %s35
      %s38 = sphi 0, %s36
      %s39 = sphi 0, %s37
      %s40 = sphi 0, %s38
      %s52 = sphi 0, %s54
      %s55 = sphi 0, %s52
      %s56 = sphi 0, %s55
      %s72 = sphi 0, %s56
      %s78 = sphi 0, %s80
      %s81 = sphi 0, %s78
      %s82 = sphi 0, %s81
      %s98 = sphi 0, %s82
      %s106 = sphi 0, %s108
      %s109 = sphi 0, %s106
      %s110 = sphi 0, %s109
      %s126 = sphi 0, %s110
      %s132 = sphi 0, %s134
      %s135 = sphi 0, %s132
      %s136 = sphi 0, %s135
      %s152 = sphi 0, %s136
      %s160 = sphi 0, %s162
      %s163 = sphi 0, %s160
      %s164 = sphi 0, %s163
      %s180 = sphi 0, %s164
      %s184 = sphi 0, %s184
      %s186 = sphi 0, %s184
      %s187 = sphi 0, %s186
      %s201 = sphi 0, %s187
      %s205 = sphi 0, %s205
      %s207 = sphi 0, %s205
      %s208 = sphi 0, %s207
      %s222 = sphi 0, %s208
      %s226 = sphi 0, %s226
      %s228 = sphi 0, %s226
      %s229 = sphi 0, %s228
      %s243 = sphi 0, %s229
      %s247 = sphi 0, %s247
      %s249 = sphi 0, %s247
      %s250 = sphi 0, %s249
      %s264 = sphi 0, %s250
      %s268 = sphi 0, %s268
      %s270 = sphi 0, %s268
      %s271 = sphi 0, %s270
      %s285 = sphi 0, %s271
      %s289 = sphi 0, %s289
      %s291 = sphi 0, %s289
      %s292 = sphi 0, %s291
      %s306 = sphi 0, %s292
      %s310 = sphi 0, %s310
      %s312 = sphi 0, %s310
      %s313 = sphi 0, %s312
      %s327 = sphi 0, %s313
      %s331 = sphi 0, %s331
      %s333 = sphi 0, %s331
      %s334 = sphi 0, %s333
      %s348 = sphi 0, %s334
      %s352 = sphi 0, %s352
      %s354 = sphi 0, %s352
      %s355 = sphi 0, %s354
      %s369 = sphi 0, %s355
      %s373 = sphi 0, %s373
      %s375 = sphi 0, %s373
      %s376 = sphi 0, %s375
      %s390 = sphi 0, %s376
      %s394 = sphi 0, %s394
      %s396 = sphi 0, %s394
      %s397 = sphi 0, %s396
      %s411 = sphi 0, %s397
      %s415 = sphi 0, %s415
      %s417 = sphi 0, %s415
      %s418 = sphi 0, %s417
      %s432 = sphi 0, %s418
      %s440 = sphi 0, %s442
      %s443 = sphi 0, %s440
      %s444 = sphi 0, %s443
      %s460 = sphi 0, %s444
      %s468 = sphi 0, %s470
      %s471 = sphi 0, %s468
      %s472 = sphi 0, %s471
      %s488 = sphi 0, %s472
    $region4: #{vector_attention.1} parent=1 // loop_header_branch
      %31 = sbr.rel (%p29) target = $region8
    $region5: #{vector_attention.1} parent=1 // loop_body
      %s33 = ssub.s32 %s28, 1
      %s34 = ssub.s32 %s28, 2
      %s41 = sadd.s32 1, %s36
      %p42 = scmp.ge.s32.totalorder %s41, 2
      %s43 = scalar_select %p42, 0, %s41
      %s44 = sadd.s32 1, %s35
      %s45 = scalar_select %p42, %s44, %s35
      %p46 = scmp.ge.s32.totalorder %s45, 2
      %s47 = scalar_select %p46, 0, %s45
      %s48 = ssub.s32 %s35, %s47
      %s49 = ssub.s32 %s36, %s43
      %s50 = sor.u32 %s48, %s49
      %p51 = scmp.eq.s32.totalorder %s50, 0
      %s53 = sadd.s32 %s52, 1
      %s54 = scalar_select %p51, %s52, %s53
      %p57 = pneg %p51
      %p58 = scmp.eq.s32.totalorder %s28, 3
      %p59 = por %p57, %p58
      %p60 = scmp.ne.s32.totalorder %s52, %s55
      %p61 = scmp.eq.s32.totalorder %s28, 0
      %p62 = por %p60, %p61
      %p63 = scmp.ne.s32.totalorder %s52, %s55
      %p64 = scmp.eq.s32.totalorder %s33, 3
      %p65 = por %p63, %p64
      %p66 = scmp.ne.s32.totalorder %s55, %s56
      %p67 = scmp.eq.s32.totalorder %s33, 0
      %p68 = por %p66, %p67
      %p69 = scmp.ne.s32.totalorder %s55, %s56
      %p70 = scmp.eq.s32.totalorder %s34, 3
      %p71 = por %p69, %p70
      %p73 = scmp.ne.s32.totalorder %s56, %s72
      %p74 = scmp.eq.s32.totalorder %s34, 0
      %p75 = por %p73, %p74
      %s76 = ssub.s32 %s35, %s47
      %p77 = scmp.eq.s32.totalorder %s76, 0
      %s79 = sadd.s32 %s78, 1
      %s80 = scalar_select %p77, %s78, %s79
      %p83 = pneg %p77
      %p84 = scmp.eq.s32.totalorder %s28, 3
      %p85 = por %p83, %p84
      %p86 = scmp.ne.s32.totalorder %s78, %s81
      %p87 = scmp.eq.s32.totalorder %s28, 0
      %p88 = por %p86, %p87
      %p89 = scmp.ne.s32.totalorder %s78, %s81
      %p90 = scmp.eq.s32.totalorder %s33, 3
      %p91 = por %p89, %p90
      %p92 = scmp.ne.s32.totalorder %s81, %s82
      %p93 = scmp.eq.s32.totalorder %s33, 0
      %p94 = por %p92, %p93
      %p95 = scmp.ne.s32.totalorder %s81, %s82
      %p96 = scmp.eq.s32.totalorder %s34, 3
      %p97 = por %p95, %p96
      %p99 = scmp.ne.s32.totalorder %s82, %s98
      %p100 = scmp.eq.s32.totalorder %s34, 0
      %p101 = por %p99, %p100
      %s102 = ssub.s32 %s35, %s47
      %s103 = ssub.s32 %s36, %s43
      %s104 = sor.u32 %s102, %s103
      %p105 = scmp.eq.s32.totalorder %s104, 0
      %s107 = sadd.s32 %s106, 1
      %s108 = scalar_select %p105, %s106, %s107
      %p111 = pneg %p105
      %p112 = scmp.eq.s32.totalorder %s28, 3
      %p113 = por %p111, %p112
      %p114 = scmp.ne.s32.totalorder %s106, %s109
      %p115 = scmp.eq.s32.totalorder %s28, 0
      %p116 = por %p114, %p115
      %p117 = scmp.ne.s32.totalorder %s106, %s109
      %p118 = scmp.eq.s32.totalorder %s33, 3
      %p119 = por %p117, %p118
      %p120 = scmp.ne.s32.totalorder %s109, %s110
      %p121 = scmp.eq.s32.totalorder %s33, 0
      %p122 = por %p120, %p121
      %p123 = scmp.ne.s32.totalorder %s109, %s110
      %p124 = scmp.eq.s32.totalorder %s34, 3
      %p125 = por %p123, %p124
      %p127 = scmp.ne.s32.totalorder %s110, %s126
      %p128 = scmp.eq.s32.totalorder %s34, 0
      %p129 = por %p127, %p128
      %s130 = ssub.s32 %s35, %s47
      %p131 = scmp.eq.s32.totalorder %s130, 0
      %s133 = sadd.s32 %s132, 1
      %s134 = scalar_select %p131, %s132, %s133
      %p137 = pneg %p131
      %p138 = scmp.eq.s32.totalorder %s28, 3
      %p139 = por %p137, %p138
      %p140 = scmp.ne.s32.totalorder %s132, %s135
      %p141 = scmp.eq.s32.totalorder %s28, 0
      %p142 = por %p140, %p141
      %p143 = scmp.ne.s32.totalorder %s132, %s135
      %p144 = scmp.eq.s32.totalorder %s33, 3
      %p145 = por %p143, %p144
      %p146 = scmp.ne.s32.totalorder %s135, %s136
      %p147 = scmp.eq.s32.totalorder %s33, 0
      %p148 = por %p146, %p147
      %p149 = scmp.ne.s32.totalorder %s135, %s136
      %p150 = scmp.eq.s32.totalorder %s34, 3
      %p151 = por %p149, %p150
      %p153 = scmp.ne.s32.totalorder %s136, %s152
      %p154 = scmp.eq.s32.totalorder %s34, 0
      %p155 = por %p153, %p154
      %s156 = ssub.s32 %s35, %s47
      %s157 = ssub.s32 %s36, %s43
      %s158 = sor.u32 %s156, %s157
      %p159 = scmp.eq.s32.totalorder %s158, 0
      %s161 = sadd.s32 %s160, 1
      %s162 = scalar_select %p159, %s160, %s161
      %p165 = pneg %p159
      %p166 = scmp.eq.s32.totalorder %s28, 3
      %p167 = por %p165, %p166
      %p168 = scmp.ne.s32.totalorder %s160, %s163
      %p169 = scmp.eq.s32.totalorder %s28, 0
      %p170 = por %p168, %p169
      %p171 = scmp.ne.s32.totalorder %s160, %s163
      %p172 = scmp.eq.s32.totalorder %s33, 3
      %p173 = por %p171, %p172
      %p174 = scmp.ne.s32.totalorder %s163, %s164
      %p175 = scmp.eq.s32.totalorder %s33, 0
      %p176 = por %p174, %p175
      %p177 = scmp.ne.s32.totalorder %s163, %s164
      %p178 = scmp.eq.s32.totalorder %s34, 3
      %p179 = por %p177, %p178
      %p181 = scmp.ne.s32.totalorder %s164, %s180
      %p182 = scmp.eq.s32.totalorder %s34, 0
      %p183 = por %p181, %p182
      %s185 = sadd.s32 %s184, 1
      %p188 = scmp.eq.s32.totalorder %s28, 3
      %p189 = scmp.ne.s32.totalorder %s184, %s186
      %p190 = scmp.eq.s32.totalorder %s28, 0
      %p191 = por %p189, %p190
      %p192 = scmp.ne.s32.totalorder %s184, %s186
      %p193 = scmp.eq.s32.totalorder %s33, 3
      %p194 = por %p192, %p193
      %p195 = scmp.ne.s32.totalorder %s186, %s187
      %p196 = scmp.eq.s32.totalorder %s33, 0
      %p197 = por %p195, %p196
      %p198 = scmp.ne.s32.totalorder %s186, %s187
      %p199 = scmp.eq.s32.totalorder %s34, 3
      %p200 = por %p198, %p199
      %p202 = scmp.ne.s32.totalorder %s187, %s201
      %p203 = scmp.eq.s32.totalorder %s34, 0
      %p204 = por %p202, %p203
      %s206 = sadd.s32 %s205, 1
      %p209 = scmp.eq.s32.totalorder %s28, 3
      %p210 = scmp.ne.s32.totalorder %s205, %s207
      %p211 = scmp.eq.s32.totalorder %s28, 0
      %p212 = por %p210, %p211
      %p213 = scmp.ne.s32.totalorder %s205, %s207
      %p214 = scmp.eq.s32.totalorder %s33, 3
      %p215 = por %p213, %p214
      %p216 = scmp.ne.s32.totalorder %s207, %s208
      %p217 = scmp.eq.s32.totalorder %s33, 0
      %p218 = por %p216, %p217
      %p219 = scmp.ne.s32.totalorder %s207, %s208
      %p220 = scmp.eq.s32.totalorder %s34, 3
      %p221 = por %p219, %p220
      %p223 = scmp.ne.s32.totalorder %s208, %s222
      %p224 = scmp.eq.s32.totalorder %s34, 0
      %p225 = por %p223, %p224
      %s227 = sadd.s32 %s226, 1
      %p230 = scmp.eq.s32.totalorder %s28, 3
      %p231 = scmp.ne.s32.totalorder %s226, %s228
      %p232 = scmp.eq.s32.totalorder %s28, 0
      %p233 = por %p231, %p232
      %p234 = scmp.ne.s32.totalorder %s226, %s228
      %p235 = scmp.eq.s32.totalorder %s33, 3
      %p236 = por %p234, %p235
      %p237 = scmp.ne.s32.totalorder %s228, %s229
      %p238 = scmp.eq.s32.totalorder %s33, 0
      %p239 = por %p237, %p238
      %p240 = scmp.ne.s32.totalorder %s228, %s229
      %p241 = scmp.eq.s32.totalorder %s34, 3
      %p242 = por %p240, %p241
      %p244 = scmp.ne.s32.totalorder %s229, %s243
      %p245 = scmp.eq.s32.totalorder %s34, 0
      %p246 = por %p244, %p245
      %s248 = sadd.s32 %s247, 1
      %p251 = scmp.eq.s32.totalorder %s28, 3
      %p252 = scmp.ne.s32.totalorder %s247, %s249
      %p253 = scmp.eq.s32.totalorder %s28, 0
      %p254 = por %p252, %p253
      %p255 = scmp.ne.s32.totalorder %s247, %s249
      %p256 = scmp.eq.s32.totalorder %s33, 3
      %p257 = por %p255, %p256
      %p258 = scmp.ne.s32.totalorder %s249, %s250
      %p259 = scmp.eq.s32.totalorder %s33, 0
      %p260 = por %p258, %p259
      %p261 = scmp.ne.s32.totalorder %s249, %s250
      %p262 = scmp.eq.s32.totalorder %s34, 3
      %p263 = por %p261, %p262
      %p265 = scmp.ne.s32.totalorder %s250, %s264
      %p266 = scmp.eq.s32.totalorder %s34, 0
      %p267 = por %p265, %p266
      %s269 = sadd.s32 %s268, 1
      %p272 = scmp.eq.s32.totalorder %s28, 3
      %p273 = scmp.ne.s32.totalorder %s268, %s270
      %p274 = scmp.eq.s32.totalorder %s28, 0
      %p275 = por %p273, %p274
      %p276 = scmp.ne.s32.totalorder %s268, %s270
      %p277 = scmp.eq.s32.totalorder %s33, 3
      %p278 = por %p276, %p277
      %p279 = scmp.ne.s32.totalorder %s270, %s271
      %p280 = scmp.eq.s32.totalorder %s33, 0
      %p281 = por %p279, %p280
      %p282 = scmp.ne.s32.totalorder %s270, %s271
      %p283 = scmp.eq.s32.totalorder %s34, 3
      %p284 = por %p282, %p283
      %p286 = scmp.ne.s32.totalorder %s271, %s285
      %p287 = scmp.eq.s32.totalorder %s34, 0
      %p288 = por %p286, %p287
      %s290 = sadd.s32 %s289, 1
      %p293 = scmp.eq.s32.totalorder %s28, 3
      %p294 = scmp.ne.s32.totalorder %s289, %s291
      %p295 = scmp.eq.s32.totalorder %s28, 0
      %p296 = por %p294, %p295
      %p297 = scmp.ne.s32.totalorder %s289, %s291
      %p298 = scmp.eq.s32.totalorder %s33, 3
      %p299 = por %p297, %p298
      %p300 = scmp.ne.s32.totalorder %s291, %s292
      %p301 = scmp.eq.s32.totalorder %s33, 0
      %p302 = por %p300, %p301
      %p303 = scmp.ne.s32.totalorder %s291, %s292
      %p304 = scmp.eq.s32.totalorder %s34, 3
      %p305 = por %p303, %p304
      %p307 = scmp.ne.s32.totalorder %s292, %s306
      %p308 = scmp.eq.s32.totalorder %s34, 0
      %p309 = por %p307, %p308
      %s311 = sadd.s32 %s310, 1
      %p314 = scmp.eq.s32.totalorder %s28, 3
      %p315 = scmp.ne.s32.totalorder %s310, %s312
      %p316 = scmp.eq.s32.totalorder %s28, 0
      %p317 = por %p315, %p316
      %p318 = scmp.ne.s32.totalorder %s310, %s312
      %p319 = scmp.eq.s32.totalorder %s33, 3
      %p320 = por %p318, %p319
      %p321 = scmp.ne.s32.totalorder %s312, %s313
      %p322 = scmp.eq.s32.totalorder %s33, 0
      %p323 = por %p321, %p322
      %p324 = scmp.ne.s32.totalorder %s312, %s313
      %p325 = scmp.eq.s32.totalorder %s34, 3
      %p326 = por %p324, %p325
      %p328 = scmp.ne.s32.totalorder %s313, %s327
      %p329 = scmp.eq.s32.totalorder %s34, 0
      %p330 = por %p328, %p329
      %s332 = sadd.s32 %s331, 1
      %p335 = scmp.eq.s32.totalorder %s28, 3
      %p336 = scmp.ne.s32.totalorder %s331, %s333
      %p337 = scmp.eq.s32.totalorder %s28, 0
      %p338 = por %p336, %p337
      %p339 = scmp.ne.s32.totalorder %s331, %s333
      %p340 = scmp.eq.s32.totalorder %s33, 3
      %p341 = por %p339, %p340
      %p342 = scmp.ne.s32.totalorder %s333, %s334
      %p343 = scmp.eq.s32.totalorder %s33, 0
      %p344 = por %p342, %p343
      %p345 = scmp.ne.s32.totalorder %s333, %s334
      %p346 = scmp.eq.s32.totalorder %s34, 3
      %p347 = por %p345, %p346
      %p349 = scmp.ne.s32.totalorder %s334, %s348
      %p350 = scmp.eq.s32.totalorder %s34, 0
      %p351 = por %p349, %p350
      %s353 = sadd.s32 %s352, 1
      %p356 = scmp.eq.s32.totalorder %s28, 3
      %p357 = scmp.ne.s32.totalorder %s352, %s354
      %p358 = scmp.eq.s32.totalorder %s28, 0
      %p359 = por %p357, %p358
      %p360 = scmp.ne.s32.totalorder %s352, %s354
      %p361 = scmp.eq.s32.totalorder %s33, 3
      %p362 = por %p360, %p361
      %p363 = scmp.ne.s32.totalorder %s354, %s355
      %p364 = scmp.eq.s32.totalorder %s33, 0
      %p365 = por %p363, %p364
      %p366 = scmp.ne.s32.totalorder %s354, %s355
      %p367 = scmp.eq.s32.totalorder %s34, 3
      %p368 = por %p366, %p367
      %p370 = scmp.ne.s32.totalorder %s355, %s369
      %p371 = scmp.eq.s32.totalorder %s34, 0
      %p372 = por %p370, %p371
      %s374 = sadd.s32 %s373, 1
      %p377 = scmp.eq.s32.totalorder %s28, 3
      %p378 = scmp.ne.s32.totalorder %s373, %s375
      %p379 = scmp.eq.s32.totalorder %s28, 0
      %p380 = por %p378, %p379
      %p381 = scmp.ne.s32.totalorder %s373, %s375
      %p382 = scmp.eq.s32.totalorder %s33, 3
      %p383 = por %p381, %p382
      %p384 = scmp.ne.s32.totalorder %s375, %s376
      %p385 = scmp.eq.s32.totalorder %s33, 0
      %p386 = por %p384, %p385
      %p387 = scmp.ne.s32.totalorder %s375, %s376
      %p388 = scmp.eq.s32.totalorder %s34, 3
      %p389 = por %p387, %p388
      %p391 = scmp.ne.s32.totalorder %s376, %s390
      %p392 = scmp.eq.s32.totalorder %s34, 0
      %p393 = por %p391, %p392
      %s395 = sadd.s32 %s394, 1
      %p398 = scmp.eq.s32.totalorder %s28, 3
      %p399 = scmp.ne.s32.totalorder %s394, %s396
      %p400 = scmp.eq.s32.totalorder %s28, 0
      %p401 = por %p399, %p400
      %p402 = scmp.ne.s32.totalorder %s394, %s396
      %p403 = scmp.eq.s32.totalorder %s33, 3
      %p404 = por %p402, %p403
      %p405 = scmp.ne.s32.totalorder %s396, %s397
      %p406 = scmp.eq.s32.totalorder %s33, 0
      %p407 = por %p405, %p406
      %p408 = scmp.ne.s32.totalorder %s396, %s397
      %p409 = scmp.eq.s32.totalorder %s34, 3
      %p410 = por %p408, %p409
      %p412 = scmp.ne.s32.totalorder %s397, %s411
      %p413 = scmp.eq.s32.totalorder %s34, 0
      %p414 = por %p412, %p413
      %s416 = sadd.s32 %s415, 1
      %p419 = scmp.eq.s32.totalorder %s28, 3
      %p420 = scmp.ne.s32.totalorder %s415, %s417
      %p421 = scmp.eq.s32.totalorder %s28, 0
      %p422 = por %p420, %p421
      %p423 = scmp.ne.s32.totalorder %s415, %s417
      %p424 = scmp.eq.s32.totalorder %s33, 3
      %p425 = por %p423, %p424
      %p426 = scmp.ne.s32.totalorder %s417, %s418
      %p427 = scmp.eq.s32.totalorder %s33, 0
      %p428 = por %p426, %p427
      %p429 = scmp.ne.s32.totalorder %s417, %s418
      %p430 = scmp.eq.s32.totalorder %s34, 3
      %p431 = por %p429, %p430
      %p433 = scmp.ne.s32.totalorder %s418, %s432
      %p434 = scmp.eq.s32.totalorder %s34, 0
      %p435 = por %p433, %p434
      %s436 = ssub.s32 %s35, %s47
      %s437 = ssub.s32 %s36, %s43
      %s438 = sor.u32 %s436, %s437
      %p439 = scmp.eq.s32.totalorder %s438, 0
      %s441 = sadd.s32 %s440, 1
      %s442 = scalar_select %p439, %s440, %s441
      %p445 = pneg %p439
      %p446 = scmp.eq.s32.totalorder %s28, 3
      %p447 = por %p445, %p446
      %p448 = scmp.ne.s32.totalorder %s440, %s443
      %p449 = scmp.eq.s32.totalorder %s28, 0
      %p450 = por %p448, %p449
      %p451 = scmp.ne.s32.totalorder %s440, %s443
      %p452 = scmp.eq.s32.totalorder %s33, 3
      %p453 = por %p451, %p452
      %p454 = scmp.ne.s32.totalorder %s443, %s444
      %p455 = scmp.eq.s32.totalorder %s33, 0
      %p456 = por %p454, %p455
      %p457 = scmp.ne.s32.totalorder %s443, %s444
      %p458 = scmp.eq.s32.totalorder %s34, 3
      %p459 = por %p457, %p458
      %p461 = scmp.ne.s32.totalorder %s444, %s460
      %p462 = scmp.eq.s32.totalorder %s34, 0
      %p463 = por %p461, %p462
      %s464 = ssub.s32 %s35, %s47
      %s465 = ssub.s32 %s36, %s43
      %s466 = sor.u32 %s464, %s465
      %p467 = scmp.eq.s32.totalorder %s466, 0
      %s469 = sadd.s32 %s468, 1
      %s470 = scalar_select %p467, %s468, %s469
      %p473 = pneg %p467
      %p474 = scmp.eq.s32.totalorder %s28, 3
      %p475 = por %p473, %p474
      %p476 = scmp.ne.s32.totalorder %s468, %s471
      %p477 = scmp.eq.s32.totalorder %s28, 0
      %p478 = por %p476, %p477
      %p479 = scmp.ne.s32.totalorder %s468, %s471
      %p480 = scmp.eq.s32.totalorder %s33, 3
      %p481 = por %p479, %p480
      %p482 = scmp.ne.s32.totalorder %s471, %s472
      %p483 = scmp.eq.s32.totalorder %s33, 0
      %p484 = por %p482, %p483
      %p485 = scmp.ne.s32.totalorder %s471, %s472
      %p486 = scmp.eq.s32.totalorder %s34, 3
      %p487 = por %p485, %p486
      %p489 = scmp.ne.s32.totalorder %s472, %s488
      %p490 = scmp.eq.s32.totalorder %s34, 0
      %p491 = por %p489, %p490
      %p492 = scmp.le.s32.totalorder 1, %s28
      %p493 = scmp.lt.s32.totalorder %s28, 5
      %p494 = pnand %p492, %p493
      %p495 = pneg %p494
      // Predicated region
      $region9: #{vector_attention.1} parent=5 // pred_check
        _
      $region10: #{vector_attention.1} parent=5 // pred_check_branch
        %497 = sbr.rel (%p494) target = $region12
      $region11: #{vector_attention.1} parent=5 // pred_region
        %s498 = ssub.s32 %s28, 1
        // Predicated region
        $region13: #{vector_attention.1} parent=11 // pred_check
          %p499 = pneg %p197
        $region14: #{vector_attention.1} parent=11 // pred_check_branch
          %501 = sbr.rel (%p499) target = $region16
        $region15: #{vector_attention.1} parent=11 // pred_region
          _
        $region16: #{vector_attention.1} parent=11 // pred_fallthru
          _
        // Predicated region
        $region17: #{vector_attention.1} parent=11 // pred_check
          %p502 = pneg %p218
        $region18: #{vector_attention.1} parent=11 // pred_check_branch
          %504 = sbr.rel (%p502) target = $region20
        $region19: #{vector_attention.1} parent=11 // pred_region
          _
        $region20: #{vector_attention.1} parent=11 // pred_fallthru
          _
        // Predicated region
        $region21: #{vector_attention.1} parent=11 // pred_check
          %p505 = pneg %p239
        $region22: #{vector_attention.1} parent=11 // pred_check_branch
          %507 = sbr.rel (%p505) target = $region24
        $region23: #{vector_attention.1} parent=11 // pred_region
          _
        $region24: #{vector_attention.1} parent=11 // pred_fallthru
          _
        // Predicated region
        $region25: #{vector_attention.1} parent=11 // pred_check
          %p508 = pneg %p260
        $region26: #{vector_attention.1} parent=11 // pred_check_branch
          %510 = sbr.rel (%p508) target = $region28
        $region27: #{vector_attention.1} parent=11 // pred_region
          _
        $region28: #{vector_attention.1} parent=11 // pred_fallthru
          _
        // Predicated region
        $region29: #{vector_attention.1} parent=11 // pred_check
          %p511 = pneg %p281
        $region30: #{vector_attention.1} parent=11 // pred_check_branch
          %513 = sbr.rel (%p511) target = $region32
        $region31: #{vector_attention.1} parent=11 // pred_region
          _
        $region32: #{vector_attention.1} parent=11 // pred_fallthru
          _
        // Predicated region
        $region33: #{vector_attention.1} parent=11 // pred_check
          %p514 = pneg %p302
        $region34: #{vector_attention.1} parent=11 // pred_check_branch
          %516 = sbr.rel (%p514) target = $region36
        $region35: #{vector_attention.1} parent=11 // pred_region
          _
        $region36: #{vector_attention.1} parent=11 // pred_fallthru
          _
        // Predicated region
        $region37: #{vector_attention.1} parent=11 // pred_check
          %p517 = pneg %p323
        $region38: #{vector_attention.1} parent=11 // pred_check_branch
          %519 = sbr.rel (%p517) target = $region40
        $region39: #{vector_attention.1} parent=11 // pred_region
          _
        $region40: #{vector_attention.1} parent=11 // pred_fallthru
          _
        // Predicated region
        $region41: #{vector_attention.1} parent=11 // pred_check
          %p520 = pneg %p344
        $region42: #{vector_attention.1} parent=11 // pred_check_branch
          %522 = sbr.rel (%p520) target = $region44
        $region43: #{vector_attention.1} parent=11 // pred_region
          _
        $region44: #{vector_attention.1} parent=11 // pred_fallthru
          _
        // Predicated region
        $region45: #{vector_attention.1} parent=11 // pred_check
          %p523 = pneg %p365
        $region46: #{vector_attention.1} parent=11 // pred_check_branch
          %525 = sbr.rel (%p523) target = $region48
        $region47: #{vector_attention.1} parent=11 // pred_region
          _
        $region48: #{vector_attention.1} parent=11 // pred_fallthru
          _
        // Predicated region
        $region49: #{vector_attention.1} parent=11 // pred_check
          %p526 = pneg %p386
        $region50: #{vector_attention.1} parent=11 // pred_check_branch
          %528 = sbr.rel (%p526) target = $region52
        $region51: #{vector_attention.1} parent=11 // pred_region
          _
        $region52: #{vector_attention.1} parent=11 // pred_fallthru
          _
        // Predicated region
        $region53: #{vector_attention.1} parent=11 // pred_check
          %p529 = pneg %p407
        $region54: #{vector_attention.1} parent=11 // pred_check_branch
          %531 = sbr.rel (%p529) target = $region56
        $region55: #{vector_attention.1} parent=11 // pred_region
          _
        $region56: #{vector_attention.1} parent=11 // pred_fallthru
          _
        // Predicated region
        $region57: #{vector_attention.1} parent=11 // pred_check
          %p532 = pneg %p428
        $region58: #{vector_attention.1} parent=11 // pred_check_branch
          %534 = sbr.rel (%p532) target = $region60
        $region59: #{vector_attention.1} parent=11 // pred_region
          _
        $region60: #{vector_attention.1} parent=11 // pred_fallthru
          _
      $region12: #{vector_attention.1} parent=5 // pred_fallthru
        _
      %p535 = scmp.lt.s32.totalorder %s28, 4
      // Predicated region
      $region61: #{vector_attention.1} parent=5 // pred_check
        %p536 = pneg %p535
      $region62: #{vector_attention.1} parent=5 // pred_check_branch
        %538 = sbr.rel (%p536) target = $region64
      $region63: #{vector_attention.1} parent=5 // pred_region
        // Predicated region
        $region65: #{vector_attention.1} parent=63 // pred_check
          %p539 = pneg %p62
        $region66: #{vector_attention.1} parent=63 // pred_check_branch
          %541 = sbr.rel (%p539) target = $region68
        $region67: #{vector_attention.1} parent=63 // pred_region
          %s542 = smul.u32 2, %s36
          %p543 = scmp.lt.s32.totalorder %s35, 1
          %s544 = scalar_select %p543, %s35, 1
          %p545 = scmp.lt.s32.totalorder %s542, 3
          %s546 = scalar_select %p545, %s542, 3
          %s547 = smul.addr %s544, 4
          %s548 = sadd.s32 %s546, %s547
          %s549 = smul.addr %s548, 8
          %s550 = scalar_lea.vmem %s0, %s549
          %s551 = smul.u32 2, %s36
        $region68: #{vector_attention.1} parent=63 // pred_fallthru
          _
        // Predicated region
        $region69: #{vector_attention.1} parent=63 // pred_check
          %p552 = pneg %p88
        $region70: #{vector_attention.1} parent=63 // pred_check_branch
          %554 = sbr.rel (%p552) target = $region72
        $region71: #{vector_attention.1} parent=63 // pred_region
          %p555 = scmp.lt.s32.totalorder %s35, 1
          %s556 = scalar_select %p555, %s35, 1
          %s557 = smul.addr %s556, 8
          %s558 = scalar_lea.vmem %s1, %s557
        $region72: #{vector_attention.1} parent=63 // pred_fallthru
          _
        // Predicated region
        $region73: #{vector_attention.1} parent=63 // pred_check
          %p559 = pneg %p116
        $region74: #{vector_attention.1} parent=63 // pred_check_branch
          %561 = sbr.rel (%p559) target = $region76
        $region75: #{vector_attention.1} parent=63 // pred_region
          %s562 = smul.u32 16, %s36
          %p563 = scmp.lt.s32.totalorder %s35, 1
          %s564 = scalar_select %p563, %s35, 1
          %p565 = scmp.lt.s32.totalorder %s562, 31
          %s566 = scalar_select %p565, %s562, 31
          %s567 = smul.addr %s564, 32
          %s568 = sadd.s32 %s566, %s567
          %s569 = smul.addr %s568, 4
          %s570 = scalar_lea.vmem %s2, %s569
          %s571 = smul.u32 16, %s36
        $region76: #{vector_attention.1} parent=63 // pred_fallthru
          _
        // Predicated region
        $region77: #{vector_attention.1} parent=63 // pred_check
          %p572 = pneg %p142
        $region78: #{vector_attention.1} parent=63 // pred_check_branch
          %574 = sbr.rel (%p572) target = $region80
        $region79: #{vector_attention.1} parent=63 // pred_region
          %p575 = scmp.lt.s32.totalorder %s35, 1
          %s576 = scalar_select %p575, %s35, 1
          %s577 = smul.addr %s576, 8
          %s578 = scalar_lea.vmem %s3, %s577
        $region80: #{vector_attention.1} parent=63 // pred_fallthru
          _
        // Predicated region
        $region81: #{vector_attention.1} parent=63 // pred_check
          %p579 = pneg %p170
        $region82: #{vector_attention.1} parent=63 // pred_check_branch
          %581 = sbr.rel (%p579) target = $region84
        $region83: #{vector_attention.1} parent=63 // pred_region
          %s582 = smul.u32 2, %s36
          %p583 = scmp.lt.s32.totalorder %s35, 1
          %s584 = scalar_select %p583, %s35, 1
          %p585 = scmp.lt.s32.totalorder %s582, 3
          %s586 = scalar_select %p585, %s582, 3
          %s587 = smul.addr %s584, 4
          %s588 = sadd.s32 %s586, %s587
          %s589 = smul.addr %s588, 8
          %s590 = scalar_lea.vmem %s4, %s589
          %s591 = smul.u32 2, %s36
        $region84: #{vector_attention.1} parent=63 // pred_fallthru
          _
      $region64: #{vector_attention.1} parent=5 // pred_fallthru
        _
      %p592 = scmp.le.s32.totalorder 1, %s28
      %p593 = scmp.lt.s32.totalorder %s28, 5
      %p594 = pnand %p592, %p593
      %p595 = pneg %p594
      // Predicated region
      $region85: #{vector_attention.1} parent=5 // pred_check
        _
      $region86: #{vector_attention.1} parent=5 // pred_check_branch
        %597 = sbr.rel (%p594) target = $region88
      $region87: #{vector_attention.1} parent=5 // pred_region
        %s598 = ssub.s32 %s28, 1
        %s599 = smul.u32 2, %s38
        %p600 = scmp.lt.s32.totalorder %s37, 1
        %s601 = scalar_select %p600, %s37, 1
        %p602 = scmp.lt.s32.totalorder %s599, 3
        %s603 = scalar_select %p602, %s599, 3
        %s604 = smul.addr %s601, 4
        %s605 = sadd.s32 %s603, %s604
        %s606 = smul.addr %s605, 8
        %s607 = scalar_lea.vmem %s0, %s606
        %p608 = pneg %p68
        %p609 = pneg %p65
        %p610 = scmp.lt.s32.totalorder %s37, 1
        %s611 = scalar_select %p610, %s37, 1
        %s612 = smul.addr %s611, 8
        %s613 = scalar_lea.vmem %s1, %s612
        %p614 = pneg %p94
        %p615 = pneg %p91
        %s616 = smul.u32 16, %s38
        %p617 = scmp.lt.s32.totalorder %s37, 1
        %s618 = scalar_select %p617, %s37, 1
        %p619 = scmp.lt.s32.totalorder %s616, 31
        %s620 = scalar_select %p619, %s616, 31
        %s621 = smul.addr %s618, 32
        %s622 = sadd.s32 %s620, %s621
        %s623 = smul.addr %s622, 4
        %s624 = scalar_lea.vmem %s2, %s623
        %p625 = pneg %p122
        %p626 = pneg %p119
        %p627 = scmp.lt.s32.totalorder %s37, 1
        %s628 = scalar_select %p627, %s37, 1
        %s629 = smul.addr %s628, 8
        %s630 = scalar_lea.vmem %s3, %s629
        %p631 = pneg %p148
        %p632 = pneg %p145
        %s633 = smul.u32 2, %s38
        %p634 = scmp.lt.s32.totalorder %s37, 1
        %s635 = scalar_select %p634, %s37, 1
        %p636 = scmp.lt.s32.totalorder %s633, 3
        %s637 = scalar_select %p636, %s633, 3
        %s638 = smul.addr %s635, 4
        %s639 = sadd.s32 %s637, %s638
        %s640 = smul.addr %s639, 8
        %s641 = scalar_lea.vmem %s4, %s640
        %p642 = pneg %p176
        %p643 = pneg %p173
        %p644 = pneg %p197
        %p645 = pneg %p194
        %p646 = pneg %p218
        %p647 = pneg %p215
        %p648 = pneg %p239
        %p649 = pneg %p236
        %p650 = pneg %p260
        %p651 = pneg %p257
        %p652 = pneg %p281
        %p653 = pneg %p278
        %p654 = pneg %p302
        %p655 = pneg %p299
        %p656 = pneg %p323
        %p657 = pneg %p320
        %p658 = pneg %p344
        %p659 = pneg %p341
        %p660 = pneg %p365
        %p661 = pneg %p362
        %p662 = pneg %p386
        %p663 = pneg %p383
        %p664 = pneg %p407
        %p665 = pneg %p404
        %p666 = pneg %p428
        %p667 = pneg %p425
        %p668 = pneg %p456
        %p669 = pneg %p453
        %s670 = sand.u32 %s443, 1
        %s671 = scalar_lea.sflag [#allocation3], %s670
        %s672 = sand.u32 %s443, 1
        %s673 = smul.addr %s672, 16
        %s674 = scalar_lea.vmem [#allocation2], %s673
        %p675 = pneg %p484
        %p676 = pneg %p481
        %s677 = smul.u32 16, %s38
        %p678 = scmp.lt.s32.totalorder %s37, 1
        %s679 = scalar_select %p678, %s37, 1
        %p680 = scmp.lt.s32.totalorder %s677, 31
        %s681 = scalar_select %p680, %s677, 31
        %s682 = smul.addr %s679, 32
        %s683 = sadd.s32 %s681, %s682
        %s684 = smul.addr %s683, 4
        %s685 = scalar_lea.vmem %s18, %s684
        %s686 = smul.u32 2, %s38
        %p687 = scmp.lt.s32.totalorder %s37, 1
        %s688 = scalar_select %p687, %s37, 1
        %p689 = scmp.lt.s32.totalorder %s686, 3
        %s690 = scalar_select %p689, %s686, 3
        %s691 = smul.addr %s688, 4
        %s692 = sadd.s32 %s690, %s691
        %s693 = smul.addr %s692, 8
        %s694 = scalar_lea.vmem %s0, %s693
        %s695 = smul.u32 2, %s38
        %p696 = scmp.lt.s32.totalorder %s37, 1
        %s697 = scalar_select %p696, %s37, 1
        %s698 = smul.addr %s697, 8
        %s699 = scalar_lea.vmem %s1, %s698
        %s700 = smul.u32 16, %s38
        %p701 = scmp.lt.s32.totalorder %s37, 1
        %s702 = scalar_select %p701, %s37, 1
        %p703 = scmp.lt.s32.totalorder %s700, 31
        %s704 = scalar_select %p703, %s700, 31
        %s705 = smul.addr %s702, 32
        %s706 = sadd.s32 %s704, %s705
        %s707 = smul.addr %s706, 4
        %s708 = scalar_lea.vmem %s2, %s707
        %s709 = smul.u32 16, %s38
        %p710 = scmp.lt.s32.totalorder %s37, 1
        %s711 = scalar_select %p710, %s37, 1
        %s712 = smul.addr %s711, 8
        %s713 = scalar_lea.vmem %s3, %s712
        %s714 = smul.u32 2, %s38
        %p715 = scmp.lt.s32.totalorder %s37, 1
        %s716 = scalar_select %p715, %s37, 1
        %p717 = scmp.lt.s32.totalorder %s714, 3
        %s718 = scalar_select %p717, %s714, 3
        %s719 = smul.addr %s716, 4
        %s720 = sadd.s32 %s718, %s719
        %s721 = smul.addr %s720, 8
        %s722 = scalar_lea.vmem %s4, %s721
        %s723 = smul.u32 2, %s38
        %s724 = smul.u32 2, %s38
        %s725 = smul.u32 16, %s38
        %p726 = scmp.lt.s32.totalorder %s37, 1
        %s727 = scalar_select %p726, %s37, 1
        %p728 = scmp.lt.s32.totalorder %s725, 31
        %s729 = scalar_select %p728, %s725, 31
        %s730 = smul.addr %s727, 32
        %s731 = sadd.s32 %s729, %s730
        %s732 = smul.addr %s731, 4
        %s733 = scalar_lea.vmem %s18, %s732
        %s734 = smul.u32 16, %s38
        %v736 = vld [vmem:[%s694] sm:$0xff]
        %v737 = vld [vmem:[%s694 + $0x8] sm:$0xff]
        %v738 = vld [vmem:[%s699] sm:$0xff]
        %v739 = vld [vmem:[%s713] sm:$0xff]
        %v740 = vld [vmem:[%s722] sm:$0xff]
        %v741 = vld [vmem:[%s722 + $0x8] sm:$0xff]
        %v742 = vld [vmem:[%s15] sm:$0xf]
        %v743 = vld [vmem:[%s15 + $0x4] sm:$0xf]
        %v744 = vld [vmem:[%s15 + $0x8] sm:$0xf]
        %v745 = vld [vmem:[%s15 + $0xc] sm:$0xf]
        %v746 = vld [vmem:[%s15 + $0x10] sm:$0xf]
        %v747 = vld [vmem:[%s15 + $0x14] sm:$0xf]
        %v748 = vld [vmem:[%s15 + $0x18] sm:$0xf]
        %v749 = vld [vmem:[%s15 + $0x1c] sm:$0xf]
        %v750 = vld [vmem:[%s15 + $0x20] sm:$0xf]
        %v751 = vld [vmem:[%s15 + $0x24] sm:$0xf]
        %v752 = vld [vmem:[%s15 + $0x28] sm:$0xf]
        %v753 = vld [vmem:[%s15 + $0x2c] sm:$0xf]
        %v754 = vld [vmem:[%s15 + $0x30] sm:$0xf]
        %v755 = vld [vmem:[%s15 + $0x34] sm:$0xf]
        %v756 = vld [vmem:[%s15 + $0x38] sm:$0xf]
        %v757 = vld [vmem:[%s15 + $0x3c] sm:$0xf]
        %v758 = vld [vmem:[%s16] sm:$0xff]
        %v759 = vld [vmem:[%s16 + $0x8] sm:$0xff]
        %v760 = vld [vmem:[%s16 + $0x10] sm:$0xff]
        %v761 = vld [vmem:[%s16 + $0x18] sm:$0xff]
        %v762 = vld [vmem:[%s16 + $0x20] sm:$0xff]
        %v763 = vld [vmem:[%s16 + $0x28] sm:$0xff]
        %v764 = vld [vmem:[%s16 + $0x30] sm:$0xff]
        %v765 = vld [vmem:[%s16 + $0x38] sm:$0xff]
        %v766 = vld [vmem:[%s16 + $0x40] sm:$0xff]
        %v767 = vld [vmem:[%s16 + $0x48] sm:$0xff]
        %v768 = vld [vmem:[%s16 + $0x50] sm:$0xff]
        %v769 = vld [vmem:[%s16 + $0x58] sm:$0xff]
        %v770 = vld [vmem:[%s16 + $0x60] sm:$0xff]
        %v771 = vld [vmem:[%s16 + $0x68] sm:$0xff]
        %v772 = vld [vmem:[%s16 + $0x70] sm:$0xff]
        %v773 = vld [vmem:[%s16 + $0x78] sm:$0xff]
        %v774 = vld [vmem:[%s16 + $0x80] sm:$0xff]
        %v775 = vld [vmem:[%s16 + $0x88] sm:$0xff]
        %v776 = vld [vmem:[%s16 + $0x90] sm:$0xff]
        %v777 = vld [vmem:[%s16 + $0x98] sm:$0xff]
        %v778 = vld [vmem:[%s16 + $0xa0] sm:$0xff]
        %v779 = vld [vmem:[%s16 + $0xa8] sm:$0xff]
        %v780 = vld [vmem:[%s16 + $0xb0] sm:$0xff]
        %v781 = vld [vmem:[%s16 + $0xb8] sm:$0xff]
        %v782 = vld [vmem:[%s16 + $0xc0] sm:$0xff]
        %v783 = vld [vmem:[%s16 + $0xc8] sm:$0xff]
        %v784 = vld [vmem:[%s16 + $0xd0] sm:$0xff]
        %v785 = vld [vmem:[%s16 + $0xd8] sm:$0xff]
        %v786 = vld [vmem:[%s16 + $0xe0] sm:$0xff]
        %v787 = vld [vmem:[%s16 + $0xe8] sm:$0xff]
        %v788 = vld [vmem:[%s16 + $0xf0] sm:$0xff]
        %v789 = vld [vmem:[%s16 + $0xf8] sm:$0xff]
        %v790 = vld [vmem:[%s6] sm:$0x7]
        %v791 = vld [vmem:[%s8] sm:$0xf]
        %v792 = vld [vmem:[%s10] sm:$0xff]
        %v793 = vld [vmem:[%s14] sm:$0xf]
        %v794 = vld [vmem:[%s5] sm:$0xff]
        %v795 = vld [vmem:[%s5 + $0x8] sm:$0xff]
        %v796 = vld [vmem:[%s5 + $0x10] sm:$0xff]
        %v797 = vld [vmem:[%s5 + $0x18] sm:$0xff]
        %v798 = vlaneseq
        %v799 = vshrl.u32 %v798, 7
        %v800 = vsub.s32 0, %v799
        %v801 = vrot.slane %v790, %v800
        %vm802 = vcmask 261120
        %v804 = vsel %vm802, %v736, 0
        %v807 = vsel %vm802, %v737, 0
        %809 = vmatprep.subr.mxu0 0.0
        %810 = vmatpush1.msra.mxu0 %v794
        %811 = vmatprep.subr.mxu0 0.0
        %812 = vmatpush1.msra.mxu0 %v795
        %813 = vmatprep.subr.mxu0 0.0
        %814 = vmatpush1.msra.mxu0 %v796
        %815 = vmatprep.subr.mxu0 0.0
        %816 = vmatpush1.msra.mxu0 %v797
        %817 = vmatprep.subr.mxu0 0.0
        %818 = vmatpush1.msra.mxu0 0.0
        %819 = vmatprep.subr.mxu0 0.0
        %820 = vmatpush1.msra.mxu0 0.0
        %821 = vmatprep.subr.mxu0 0.0
        %822 = vmatpush1.msra.mxu0 0.0
        %823 = vmatprep.subr.mxu0 0.0
        %824 = vmatpush1.msra.mxu0 0.0
        %825 = vmatprep.subr.mxu0 0.0
        %826 = vmatpush1.msra.mxu0 0.0
        %827 = vmatprep.subr.mxu0 0.0
        %828 = vmatpush1.msra.mxu0 0.0
        %829 = vmatprep.subr.mxu0 0.0
        %830 = vmatpush1.msra.mxu0 0.0
        %831 = vmatprep.subr.mxu0 0.0
        %832 = vmatpush1.msra.mxu0 0.0
        %833 = vmatprep.subr.mxu0 0.0
        %834 = vmatpush1.msra.mxu0 0.0
        %835 = vmatprep.subr.mxu0 0.0
        %836 = vmatpush1.msra.mxu0 0.0
        %837 = vmatprep.subr.mxu0 0.0
        %838 = vmatpush1.msra.mxu0 0.0
        %839 = vmatprep.subr.mxu0 0.0
        %840 = vmatpush1.msra.mxu0 0.0
        %841 = vmatprep.subr.mxu0 0.0
        %842 = vmatpush1.msra.mxu0 0.0
        %843 = vmatprep.subr.mxu0 0.0
        %844 = vmatpush1.msra.mxu0 0.0
        %845 = vmatprep.subr.mxu0 0.0
        %846 = vmatpush1.msra.mxu0 0.0
        %847 = vmatprep.subr.mxu0 0.0
        %848 = vmatpush1.msra.mxu0 0.0
        %849 = vmatprep.subr.mxu0 0.0
        %850 = vmatpush1.msra.mxu0 0.0
        %851 = vmatprep.subr.mxu0 0.0
        %852 = vmatpush1.msra.mxu0 0.0
        %853 = vmatprep.subr.mxu0 0.0
        %854 = vmatpush1.msra.mxu0 0.0
        %855 = vmatprep.subr.mxu0 0.0
        %856 = vmatpush1.msra.mxu0 0.0
        %857 = vmatprep.subr.mxu0 0.0
        %858 = vmatpush1.msra.mxu0 0.0
        %859 = vmatprep.subr.mxu0 0.0
        %860 = vmatpush1.msra.mxu0 0.0
        %861 = vmatprep.subr.mxu0 0.0
        %862 = vmatpush1.msra.mxu0 0.0
        %863 = vmatprep.subr.mxu0 0.0
        %864 = vmatpush1.msra.mxu0 0.0
        %865 = vmatprep.subr.mxu0 0.0
        %866 = vmatpush1.msra.mxu0 0.0
        %867 = vmatprep.subr.mxu0 0.0
        %868 = vmatpush1.msra.mxu0 0.0
        %869 = vmatprep.subr.mxu0 0.0
        %870 = vmatpush1.msra.mxu0 0.0
        %871 = vmatprep.subr.mxu0 0.0
        %872 = vmatpush1.msra.mxu0 0.0
        %873 = vmatprep.mubr.f32.mxu0 0.0
        %874 = vmatmul.mubr.f32.gmra.mrb[0].mxu0 %v804
        %v875 = vpop.f32.mrb[0].mxu0
        %v876 = vadd.f32 %v801, %v875
        %v877 = vpop.f32.mrb[0].mxu0
        %878 = vmatprep.mubr.f32.mxu0 0.0
        %879 = vmatmul.mubr.f32.gmra.mrb[0].mxu0 %v807
        %v880 = vpop.f32.mrb[0].mxu0
        %v881 = vadd.f32 %v801, %v880
        %v882 = vpop.f32.mrb[0].mxu0
        %883 = vdwg.mxu0
        %v884 = vsel %vm802, %v876, 0.0
        %885 = vadd.xlane.f32.xlu0 %v884
        %v886 = vpop.xlane.xlu0 %885
        %v887 = vsel %vm802, %v881, 0.0
        %888 = vadd.xlane.f32.xlu0 %v887
        %v889 = vpop.xlane.xlu0 %888
        %v890 = vrcp.pop 32.0
        %v891 = vmul.f32 %v886, %v890
        %v892 = vmul.f32 %v889, %v890
        %v893 = vsub.f32 %v876, %v891
        %v894 = vsub.f32 %v881, %v892
        %v895 = vmul.f32 %v893, %v893
        %v896 = vmul.f32 %v894, %v894
        %v897 = vsel %vm802, %v895, 0.0
        %898 = vadd.xlane.f32.xlu0 %v897
        %v899 = vpop.xlane.xlu0 %898
        %v900 = vsel %vm802, %v896, 0.0
        %901 = vadd.xlane.f32.xlu0 %v900
        %v902 = vpop.xlane.xlu0 %901
        %v903 = vmul.f32 %v899, %v890
        %v904 = vmul.f32 %v902, %v890
        %v905 = vadd.f32 %v903, 1e-05
        %v906 = vadd.f32 %v904, 1e-05
        %v907 = vrsqrt.pop %v905
        %v908 = vrsqrt.pop %v906
        %v909 = vmul.f32 %v893, %v907
        %v910 = vmul.f32 %v894, %v908
        %v911 = vlaneseq
        %v912 = vshrl.u32 %v911, 7
        %v913 = vsub.s32 1, %v912
        %v914 = vrot.slane %v790, %v913
        %v915 = vmul.f32 %v909, %v914
        %v916 = vmul.f32 %v910, %v914
        %v917 = vlaneseq
        %v918 = vshrl.u32 %v917, 7
        %v919 = vsub.s32 2, %v918
        %v920 = vrot.slane %v790, %v919
        %v921 = vadd.f32 %v915, %v920
        %v922 = vadd.f32 %v916, %v920
        %v923 = vand.u32 2147483647, %v921
        %v924 = vand.u32 2147483647, %v922
        %v925 = vsub.f32 0.0, %v923
        %v926 = vsub.f32 0.0, %v924
        %v927 = vpack.c.bf16 %v926, %v925
        %v929 = vmul.bf16 %v927, 1069105081
        %v930 = vpow.bf16.pop %v929
        %v931 = vunpack.c.l.bf16 %v930
        %v932 = vunpack.c.h.bf16 %v930
        %v933 = vmul.f32 %v931, %v931
        %v934 = vmul.f32 %v932, %v932
        %v935 = vmul.f32 %v931, 2.0
        %v936 = vmul.f32 %v932, 2.0
        %vm937 = vcmp.ge.f32.partialorder %v921, 0.0
        %vm938 = vcmp.ge.f32.partialorder %v922, 0.0
        %v939 = vadd.f32 %v935, 1.0
        %v940 = vadd.f32 %v936, 1.0
        %v941 = vadd.f32 %v933, %v935
        %v942 = vadd.f32 %v934, %v936
        %v943 = vsel %vm937, %v939, %v941
        %v944 = vsel %vm938, %v940, %v942
        %v945 = vmul.f32 %v933, 2.0
        %v946 = vmul.f32 %v934, 2.0
        %v947 = vadd.f32 %v939, %v945
        %v948 = vadd.f32 %v940, %v946
        %v949 = vadd.f32 %v941, 2.0
        %v950 = vadd.f32 %v942, 2.0
        %v951 = vsel %vm937, %v947, %v949
        %v952 = vsel %vm938, %v948, %v950
        %v953 = vmul.f32 %v921, %v943
        %v954 = vmul.f32 %v922, %v944
        %v955 = vrcp.pop %v951
        %v956 = vrcp.pop %v952
        %v957 = vmul.f32 %v953, %v955
        %v958 = vmul.f32 %v954, %v956
        %961 = vrot.lane.b32.xlu0 %v957, 32
        %v962 = vpop.permute.xlu0 %961
        %963 = vrot.lane.b32.xlu0 %v958, 32
        %v964 = vpop.permute.xlu0 %963
        %967 = vrot.lane.b32.xlu0 %v957, 64
        %v968 = vpop.permute.xlu0 %967
        %969 = vrot.lane.b32.xlu0 %v958, 64
        %v970 = vpop.permute.xlu0 %969
        %973 = vrot.lane.b32.xlu0 %v957, 96
        %v974 = vpop.permute.xlu0 %973
        %975 = vrot.lane.b32.xlu0 %v958, 96
        %v976 = vpop.permute.xlu0 %975
        %v979 = vsel %vm802, %v957, %v962
        %v980 = vsel %vm802, %v958, %v964
        %vm981 = vcmask 523264
        %v982 = vsel %vm981, %v979, %v968
        %v983 = vsel %vm981, %v980, %v970
        %vm984 = vcmask 785408
        %v985 = vsel %vm984, %v982, %v974
        %v986 = vsel %vm984, %v983, %v976
        %v987 = vld [vmem:[%s7] sm:$0xff]
        %v988 = vld [vmem:[%s7 + $0x8] sm:$0xff]
        %v989 = vld [vmem:[%s7 + $0x10] sm:$0xff]
        %v990 = vld [vmem:[%s7 + $0x18] sm:$0xff]
        %v991 = vld [vmem:[%s7 + $0x20] sm:$0xff]
        %v992 = vld [vmem:[%s7 + $0x28] sm:$0xff]
        %v993 = vld [vmem:[%s7 + $0x30] sm:$0xff]
        %v994 = vld [vmem:[%s7 + $0x38] sm:$0xff]
        %v995 = vld [vmem:[%s7 + $0x40] sm:$0xff]
        %v996 = vld [vmem:[%s7 + $0x48] sm:$0xff]
        %v997 = vld [vmem:[%s7 + $0x50] sm:$0xff]
        %v998 = vld [vmem:[%s7 + $0x58] sm:$0xff]
        %v999 = vld [vmem:[%s7 + $0x60] sm:$0xff]
        %v1000 = vld [vmem:[%s7 + $0x68] sm:$0xff]
        %v1001 = vld [vmem:[%s7 + $0x70] sm:$0xff]
        %v1002 = vld [vmem:[%s7 + $0x78] sm:$0xff]
        %v1003 = vld [vmem:[%s7 + $0x80] sm:$0xff]
        %v1004 = vld [vmem:[%s7 + $0x88] sm:$0xff]
        %v1005 = vld [vmem:[%s7 + $0x90] sm:$0xff]
        %v1006 = vld [vmem:[%s7 + $0x98] sm:$0xff]
        %v1007 = vld [vmem:[%s7 + $0xa0] sm:$0xff]
        %v1008 = vld [vmem:[%s7 + $0xa8] sm:$0xff]
        %v1009 = vld [vmem:[%s7 + $0xb0] sm:$0xff]
        %v1010 = vld [vmem:[%s7 + $0xb8] sm:$0xff]
        %v1011 = vld [vmem:[%s7 + $0xc0] sm:$0xff]
        %v1012 = vld [vmem:[%s7 + $0xc8] sm:$0xff]
        %v1013 = vld [vmem:[%s7 + $0xd0] sm:$0xff]
        %v1014 = vld [vmem:[%s7 + $0xd8] sm:$0xff]
        %v1015 = vld [vmem:[%s7 + $0xe0] sm:$0xff]
        %v1016 = vld [vmem:[%s7 + $0xe8] sm:$0xff]
        %v1017 = vld [vmem:[%s7 + $0xf0] sm:$0xff]
        %v1018 = vld [vmem:[%s7 + $0xf8] sm:$0xff]
        %1019 = vmatprep.subr.mxu0 %v988
        %1020 = vmatpush1.msra.mxu0 %v987
        %1021 = vmatprep.subr.mxu0 %v990
        %1022 = vmatpush1.msra.mxu0 %v989
        %1023 = vmatprep.subr.mxu0 %v992
        %1024 = vmatpush1.msra.mxu0 %v991
        %1025 = vmatprep.subr.mxu0 %v994
        %1026 = vmatpush1.msra.mxu0 %v993
        %1027 = vmatprep.subr.mxu0 %v996
        %1028 = vmatpush1.msra.mxu0 %v995
        %1029 = vmatprep.subr.mxu0 %v998
        %1030 = vmatpush1.msra.mxu0 %v997
        %1031 = vmatprep.subr.mxu0 %v1000
        %1032 = vmatpush1.msra.mxu0 %v999
        %1033 = vmatprep.subr.mxu0 %v1002
        %1034 = vmatpush1.msra.mxu0 %v1001
        %1035 = vmatprep.subr.mxu0 %v1004
        %1036 = vmatpush1.msra.mxu0 %v1003
        %1037 = vmatprep.subr.mxu0 %v1006
        %1038 = vmatpush1.msra.mxu0 %v1005
        %1039 = vmatprep.subr.mxu0 %v1008
        %1040 = vmatpush1.msra.mxu0 %v1007
        %1041 = vmatprep.subr.mxu0 %v1010
        %1042 = vmatpush1.msra.mxu0 %v1009
        %1043 = vmatprep.subr.mxu0 %v1012
        %1044 = vmatpush1.msra.mxu0 %v1011
        %1045 = vmatprep.subr.mxu0 %v1014
        %1046 = vmatpush1.msra.mxu0 %v1013
        %1047 = vmatprep.subr.mxu0 %v1016
        %1048 = vmatpush1.msra.mxu0 %v1015
        %1049 = vmatprep.subr.mxu0 %v1018
        %1050 = vmatpush1.msra.mxu0 %v1017
        %1051 = vmatprep.subr.mxu0 0.0
        %1052 = vmatpush1.msra.mxu0 0.0
        %1053 = vmatprep.subr.mxu0 0.0
        %1054 = vmatpush1.msra.mxu0 0.0
        %1055 = vmatprep.subr.mxu0 0.0
        %1056 = vmatpush1.msra.mxu0 0.0
        %1057 = vmatprep.subr.mxu0 0.0
        %1058 = vmatpush1.msra.mxu0 0.0
        %1059 = vmatprep.subr.mxu0 0.0
        %1060 = vmatpush1.msra.mxu0 0.0
        %1061 = vmatprep.subr.mxu0 0.0
        %1062 = vmatpush1.msra.mxu0 0.0
        %1063 = vmatprep.subr.mxu0 0.0
        %1064 = vmatpush1.msra.mxu0 0.0
        %1065 = vmatprep.subr.mxu0 0.0
        %1066 = vmatpush1.msra.mxu0 0.0
        %1067 = vmatprep.subr.mxu0 0.0
        %1068 = vmatpush1.msra.mxu0 0.0
        %1069 = vmatprep.subr.mxu0 0.0
        %1070 = vmatpush1.msra.mxu0 0.0
        %1071 = vmatprep.subr.mxu0 0.0
        %1072 = vmatpush1.msra.mxu0 0.0
        %1073 = vmatprep.subr.mxu0 0.0
        %1074 = vmatpush1.msra.mxu0 0.0
        %1075 = vmatprep.subr.mxu0 0.0
        %1076 = vmatpush1.msra.mxu0 0.0
        %1077 = vmatprep.subr.mxu0 0.0
        %1078 = vmatpush1.msra.mxu0 0.0
        %1079 = vmatprep.subr.mxu0 0.0
        %1080 = vmatpush1.msra.mxu0 0.0
        %1081 = vmatprep.subr.mxu0 0.0
        %1082 = vmatpush1.msra.mxu0 0.0
        %1083 = vmatprep.mubr.f32.mxu0 0.0
        %1084 = vmatmul.mubr.f32.gmra.mrb[0].mxu0 %v738
        %v1085 = vpop.f32.mrb[0].mxu0
        %v1086 = vadd.f32 0.0, %v1085
        %v1087 = vpop.f32.mrb[0].mxu0
        %v1088 = vadd.f32 0.0, %v1087
        %1089 = vdwg.mxu0
        %v1090 = vlaneseq
        %v1091 = vshrl.u32 %v1090, 7
        %v1092 = vsub.s32 0, %v1091
        %v1093 = vrot.slane %v791, %v1092
        %v1094 = vadd.f32 %v1086, %v1093
        %v1095 = vpack.c.bf16 %v1094, %v1094
        %v1112 = vunpack.c.l.b16 %v742
        %v1113 = vunpack.c.l.b16 %v743
        %v1114 = vunpack.c.l.b16 %v744
        %v1115 = vunpack.c.l.b16 %v745
        %v1116 = vunpack.c.l.b16 %v746
        %v1117 = vunpack.c.l.b16 %v747
        %v1118 = vunpack.c.l.b16 %v748
        %v1119 = vunpack.c.l.b16 %v749
        %v1120 = vunpack.c.l.b16 %v750
        %v1121 = vunpack.c.l.b16 %v751
        %v1122 = vunpack.c.l.b16 %v752
        %v1123 = vunpack.c.l.b16 %v753
        %v1124 = vunpack.c.l.b16 %v754
        %v1125 = vunpack.c.l.b16 %v755
        %v1126 = vunpack.c.l.b16 %v756
        %v1127 = vunpack.c.l.b16 %v757
        %v1128 = vpack.c.b16 %v1113, %v1112
        %v1129 = vpack.c.b16 %v1115, %v1114
        %v1130 = vpack.c.b16 %v1117, %v1116
        %v1131 = vpack.c.b16 %v1119, %v1118
        %v1132 = vpack.c.b16 %v1121, %v1120
        %v1133 = vpack.c.b16 %v1123, %v1122
        %v1134 = vpack.c.b16 %v1125, %v1124
        %v1135 = vpack.c.b16 %v1127, %v1126
        %1144 = vmatprep.subr.bf16.mxu0 0
        %1145 = vmatpush1.bf16.msra.mxu0 %v1128
        %1146 = vmatprep.subr.bf16.mxu0 0
        %1147 = vmatpush1.bf16.msra.mxu0 %v1129
        %1148 = vmatprep.subr.bf16.mxu0 0
        %1149 = vmatpush1.bf16.msra.mxu0 %v1130
        %1150 = vmatprep.subr.bf16.mxu0 0
        %1151 = vmatpush1.bf16.msra.mxu0 %v1131
        %1152 = vmatprep.subr.bf16.mxu0 0
        %1153 = vmatpush1.bf16.msra.mxu0 %v1132
        %1154 = vmatprep.subr.bf16.mxu0 0
        %1155 = vmatpush1.bf16.msra.mxu0 %v1133
        %1156 = vmatprep.subr.bf16.mxu0 0
        %1157 = vmatpush1.bf16.msra.mxu0 %v1134
        %1158 = vmatprep.subr.bf16.mxu0 0
        %1159 = vmatpush1.bf16.msra.mxu0 %v1135
        %1160 = vmatprep.subr.bf16.mxu0 0
        %1161 = vmatpush1.bf16.msra.mxu0 0
        %1162 = vmatprep.subr.bf16.mxu0 0
        %1163 = vmatpush1.bf16.msra.mxu0 0
        %1164 = vmatprep.subr.bf16.mxu0 0
        %1165 = vmatpush1.bf16.msra.mxu0 0
        %1166 = vmatprep.subr.bf16.mxu0 0
        %1167 = vmatpush1.bf16.msra.mxu0 0
        %1168 = vmatprep.subr.bf16.mxu0 0
        %1169 = vmatpush1.bf16.msra.mxu0 0
        %1170 = vmatprep.subr.bf16.mxu0 0
        %1171 = vmatpush1.bf16.msra.mxu0 0
        %1172 = vmatprep.subr.bf16.mxu0 0
        %1173 = vmatpush1.bf16.msra.mxu0 0
        %1174 = vmatprep.subr.bf16.mxu0 0
        %1175 = vmatpush1.bf16.msra.mxu0 0
        %1176 = vmatprep.mubr.bf16.mxu0 0
        %1177 = vmatmul.mubr.bf16.gmra.mrb[0].mxu0 %v1095
        %v1178 = vpop.f32.mrb[0].mxu0
        %v1179 = vadd.f32 0.0, %v1178
        %v1180 = vpop.f32.mrb[0].mxu0
        %v1181 = vpop.f32.mrb[0].mxu0
        %v1182 = vpop.f32.mrb[0].mxu0
        %1183 = vdwg.mxu0
        %v1184 = vsub.f32 %v1094, %v1179
        %v1185 = vmul.f32 %v1184, %v1184
        %v1186 = vpack.c.bf16 %v1185, %v1185
        %1187 = vmatprep.subr.bf16.mxu0 0
        %1188 = vmatpush1.bf16.msra.mxu0 %v1128
        %1189 = vmatprep.subr.bf16.mxu0 0
        %1190 = vmatpush1.bf16.msra.mxu0 %v1129
        %1191 = vmatprep.subr.bf16.mxu0 0
        %1192 = vmatpush1.bf16.msra.mxu0 %v1130
        %1193 = vmatprep.subr.bf16.mxu0 0
        %1194 = vmatpush1.bf16.msra.mxu0 %v1131
        %1195 = vmatprep.subr.bf16.mxu0 0
        %1196 = vmatpush1.bf16.msra.mxu0 %v1132
        %1197 = vmatprep.subr.bf16.mxu0 0
        %1198 = vmatpush1.bf16.msra.mxu0 %v1133
        %1199 = vmatprep.subr.bf16.mxu0 0
        %1200 = vmatpush1.bf16.msra.mxu0 %v1134
        %1201 = vmatprep.subr.bf16.mxu0 0
        %1202 = vmatpush1.bf16.msra.mxu0 %v1135
        %1203 = vmatprep.subr.bf16.mxu0 0
        %1204 = vmatpush1.bf16.msra.mxu0 0
        %1205 = vmatprep.subr.bf16.mxu0 0
        %1206 = vmatpush1.bf16.msra.mxu0 0
        %1207 = vmatprep.subr.bf16.mxu0 0
        %1208 = vmatpush1.bf16.msra.mxu0 0
        %1209 = vmatprep.subr.bf16.mxu0 0
        %1210 = vmatpush1.bf16.msra.mxu0 0
        %1211 = vmatprep.subr.bf16.mxu0 0
        %1212 = vmatpush1.bf16.msra.mxu0 0
        %1213 = vmatprep.subr.bf16.mxu0 0
        %1214 = vmatpush1.bf16.msra.mxu0 0
        %1215 = vmatprep.subr.bf16.mxu0 0
        %1216 = vmatpush1.bf16.msra.mxu0 0
        %1217 = vmatprep.subr.bf16.mxu0 0
        %1218 = vmatpush1.bf16.msra.mxu0 0
        %1219 = vmatprep.mubr.bf16.mxu0 0
        %1220 = vmatmul.mubr.bf16.gmra.mrb[0].mxu0 %v1186
        %v1221 = vpop.f32.mrb[0].mxu0
        %v1222 = vadd.f32 1e-05, %v1221
        %v1223 = vpop.f32.mrb[0].mxu0
        %v1224 = vpop.f32.mrb[0].mxu0
        %v1225 = vpop.f32.mrb[0].mxu0
        %1226 = vdwg.mxu0
        %v1227 = vrsqrt.pop %v1222
        %v1228 = vmul.f32 %v1184, %v1227
        %v1229 = vlaneseq
        %v1230 = vshrl.u32 %v1229, 7
        %v1231 = vsub.s32 2, %v1230
        %v1232 = vrot.slane %v791, %v1231
        %v1233 = vmul.f32 %v1228, %v1232
        %v1234 = vlaneseq
        %v1235 = vshrl.u32 %v1234, 7
        %v1236 = vsub.s32 3, %v1235
        %v1237 = vrot.slane %v791, %v1236
        %v1238 = vadd.f32 %v1233, %v1237
        %v1239 = vand.u32 2147483647, %v1238
        %v1240 = vsub.f32 0.0, %v1239
        %v1241 = vpack.c.bf16 %v1240, %v1240
        %v1243 = vmul.bf16 %v1241, 1069105081
        %v1244 = vpow.bf16.pop %v1243
        %v1245 = vunpack.c.l.bf16 %v1244
        %v1246 = vmul.f32 %v1245, %v1245
        %v1247 = vmul.f32 %v1245, 2.0
        %vm1248 = vcmp.ge.f32.partialorder %v1238, 0.0
        %v1249 = vadd.f32 %v1247, 1.0
        %v1250 = vadd.f32 %v1246, %v1247
        %v1251 = vsel %vm1248, %v1249, %v1250
        %v1252 = vmul.f32 %v1246, 2.0
        %v1253 = vadd.f32 %v1249, %v1252
        %v1254 = vadd.f32 %v1250, 2.0
        %v1255 = vsel %vm1248, %v1253, %v1254
        %v1256 = vmul.f32 %v1238, %v1251
        %v1257 = vrcp.pop %v1255
        %v1258 = vmul.f32 %v1256, %v1257
        %v1259 = vlaneseq
        %v1260 = vshrl.u32 %v1259, 7
        %v1261 = vsub.s32 1, %v1260
        %v1262 = vrot.slane %v791, %v1261
        %v1263 = vadd.f32 %v1088, %v1262
        %v1266 = vcombine.high %v985, %v985
        %v1268 = vunpack.c.l.s4 1966171168
        %v1269 = vunpack.c.0.s8 %v1268
        %v1270 = vlaneseq
        %v1271 = vshrl.u32 %v1270, 7
        %v1272 = vsub.s32 %v1269, %v1271
        %v1273 = vrot.slane %v985, %v1272
        %v1275 = vunpack.c.l.s4 1966171168
        %v1276 = vunpack.c.0.s8 %v1275
        %v1277 = vlaneseq
        %v1278 = vshrl.u32 %v1277, 7
        %v1279 = vsub.s32 %v1276, %v1278
        %v1280 = vrot.slane %v1266, %v1279
        %v1281 = vcombine.high %v1273, %v1273
        %v1282 = vcombine.high %v1280, %v1280
        %v1284 = vunpack.c.l.s4 1966171168
        %v1285 = vunpack.c.0.s8 %v1284
        %v1286 = vlaneseq
        %v1287 = vshrl.u32 %v1286, 7
        %v1288 = vsub.s32 %v1285, %v1287
        %v1289 = vrot.slane %v1273, %v1288
        %v1291 = vunpack.c.l.s4 1966171168
        %v1292 = vunpack.c.0.s8 %v1291
        %v1293 = vlaneseq
        %v1294 = vshrl.u32 %v1293, 7
        %v1295 = vsub.s32 %v1292, %v1294
        %v1296 = vrot.slane %v1280, %v1295
        %v1298 = vunpack.c.l.s4 1966171168
        %v1299 = vunpack.c.0.s8 %v1298
        %v1300 = vlaneseq
        %v1301 = vshrl.u32 %v1300, 7
        %v1302 = vsub.s32 %v1299, %v1301
        %v1303 = vrot.slane %v1281, %v1302
        %v1305 = vunpack.c.l.s4 1966171168
        %v1306 = vunpack.c.0.s8 %v1305
        %v1307 = vlaneseq
        %v1308 = vshrl.u32 %v1307, 7
        %v1309 = vsub.s32 %v1306, %v1308
        %v1310 = vrot.slane %v1282, %v1309
        %v1311 = vcombine.high %v1289, %v1289
        %v1312 = vcombine.high %v1296, %v1296
        %v1313 = vcombine.high %v1303, %v1303
        %v1314 = vcombine.high %v1310, %v1310
        %v1315 = vcombine.high %v986, %v986
        %v1317 = vunpack.c.l.s4 1966171168
        %v1318 = vunpack.c.0.s8 %v1317
        %v1319 = vlaneseq
        %v1320 = vshrl.u32 %v1319, 7
        %v1321 = vsub.s32 %v1318, %v1320
        %v1322 = vrot.slane %v986, %v1321
        %v1324 = vunpack.c.l.s4 1966171168
        %v1325 = vunpack.c.0.s8 %v1324
        %v1326 = vlaneseq
        %v1327 = vshrl.u32 %v1326, 7
        %v1328 = vsub.s32 %v1325, %v1327
        %v1329 = vrot.slane %v1315, %v1328
        %v1330 = vcombine.high %v1322, %v1322
        %v1331 = vcombine.high %v1329, %v1329
        %v1333 = vunpack.c.l.s4 1966171168
        %v1334 = vunpack.c.0.s8 %v1333
        %v1335 = vlaneseq
        %v1336 = vshrl.u32 %v1335, 7
        %v1337 = vsub.s32 %v1334, %v1336
        %v1338 = vrot.slane %v1322, %v1337
        %v1340 = vunpack.c.l.s4 1966171168
        %v1341 = vunpack.c.0.s8 %v1340
        %v1342 = vlaneseq
        %v1343 = vshrl.u32 %v1342, 7
        %v1344 = vsub.s32 %v1341, %v1343
        %v1345 = vrot.slane %v1329, %v1344
        %v1347 = vunpack.c.l.s4 1966171168
        %v1348 = vunpack.c.0.s8 %v1347
        %v1349 = vlaneseq
        %v1350 = vshrl.u32 %v1349, 7
        %v1351 = vsub.s32 %v1348, %v1350
        %v1352 = vrot.slane %v1330, %v1351
        %v1354 = vunpack.c.l.s4 1966171168
        %v1355 = vunpack.c.0.s8 %v1354
        %v1356 = vlaneseq
        %v1357 = vshrl.u32 %v1356, 7
        %v1358 = vsub.s32 %v1355, %v1357
        %v1359 = vrot.slane %v1331, %v1358
        %v1360 = vcombine.high %v1338, %v1338
        %v1361 = vcombine.high %v1345, %v1345
        %v1362 = vcombine.high %v1352, %v1352
        %v1363 = vcombine.high %v1359, %v1359
        %v1364 = vlaneseq
        %v1365 = vshrl.u32 %v1364, 7
        %v1366 = vsub.s32 0, %v1365
        %v1367 = vrot.slane %v1289, %v1366
        %v1368 = vlaneseq
        %v1369 = vshrl.u32 %v1368, 7
        %v1370 = vsub.s32 0, %v1369
        %v1371 = vrot.slane %v1303, %v1370
        %v1372 = vlaneseq
        %v1373 = vshrl.u32 %v1372, 7
        %v1374 = vsub.s32 0, %v1373
        %v1375 = vrot.slane %v1311, %v1374
        %v1376 = vlaneseq
        %v1377 = vshrl.u32 %v1376, 7
        %v1378 = vsub.s32 0, %v1377
        %v1379 = vrot.slane %v1313, %v1378
        %v1380 = vlaneseq
        %v1381 = vshrl.u32 %v1380, 7
        %v1382 = vsub.s32 0, %v1381
        %v1383 = vrot.slane %v1296, %v1382
        %v1384 = vlaneseq
        %v1385 = vshrl.u32 %v1384, 7
        %v1386 = vsub.s32 0, %v1385
        %v1387 = vrot.slane %v1310, %v1386
        %v1388 = vlaneseq
        %v1389 = vshrl.u32 %v1388, 7
        %v1390 = vsub.s32 0, %v1389
        %v1391 = vrot.slane %v1312, %v1390
        %v1392 = vlaneseq
        %v1393 = vshrl.u32 %v1392, 7
        %v1394 = vsub.s32 0, %v1393
        %v1395 = vrot.slane %v1314, %v1394
        %v1396 = vlaneseq
        %v1397 = vshrl.u32 %v1396, 7
        %v1398 = vsub.s32 0, %v1397
        %v1399 = vrot.slane %v1338, %v1398
        %v1400 = vlaneseq
        %v1401 = vshrl.u32 %v1400, 7
        %v1402 = vsub.s32 0, %v1401
        %v1403 = vrot.slane %v1352, %v1402
        %v1404 = vlaneseq
        %v1405 = vshrl.u32 %v1404, 7
        %v1406 = vsub.s32 0, %v1405
        %v1407 = vrot.slane %v1360, %v1406
        %v1408 = vlaneseq
        %v1409 = vshrl.u32 %v1408, 7
        %v1410 = vsub.s32 0, %v1409
        %v1411 = vrot.slane %v1362, %v1410
        %v1412 = vlaneseq
        %v1413 = vshrl.u32 %v1412, 7
        %v1414 = vsub.s32 0, %v1413
        %v1415 = vrot.slane %v1345, %v1414
        %v1416 = vlaneseq
        %v1417 = vshrl.u32 %v1416, 7
        %v1418 = vsub.s32 0, %v1417
        %v1419 = vrot.slane %v1359, %v1418
        %v1420 = vlaneseq
        %v1421 = vshrl.u32 %v1420, 7
        %v1422 = vsub.s32 0, %v1421
        %v1423 = vrot.slane %v1361, %v1422
        %v1424 = vlaneseq
        %v1425 = vshrl.u32 %v1424, 7
        %v1426 = vsub.s32 0, %v1425
        %v1427 = vrot.slane %v1363, %v1426
        %v1444 = vsub.f32 %v1258, %v1367
        %v1445 = vsub.f32 %v1258, %v1371
        %v1446 = vsub.f32 %v1258, %v1375
        %v1447 = vsub.f32 %v1258, %v1379
        %v1448 = vsub.f32 %v1258, %v1383
        %v1449 = vsub.f32 %v1258, %v1387
        %v1450 = vsub.f32 %v1258, %v1391
        %v1451 = vsub.f32 %v1258, %v1395
        %v1452 = vsub.f32 %v1258, %v1399
        %v1453 = vsub.f32 %v1258, %v1403
        %v1454 = vsub.f32 %v1258, %v1407
        %v1455 = vsub.f32 %v1258, %v1411
        %v1456 = vsub.f32 %v1258, %v1415
        %v1457 = vsub.f32 %v1258, %v1419
        %v1458 = vsub.f32 %v1258, %v1423
        %v1459 = vsub.f32 %v1258, %v1427
        %v1460 = vld [vmem:[%s708] sm:$0xf]
        %v1461 = vld [vmem:[%s708 + $0x4] sm:$0xf]
        %v1462 = vld [vmem:[%s708 + $0x8] sm:$0xf]
        %v1463 = vld [vmem:[%s708 + $0xc] sm:$0xf]
        %v1464 = vld [vmem:[%s708 + $0x10] sm:$0xf]
        %v1465 = vld [vmem:[%s708 + $0x14] sm:$0xf]
        %v1466 = vld [vmem:[%s708 + $0x18] sm:$0xf]
        %v1467 = vld [vmem:[%s708 + $0x1c] sm:$0xf]
        %v1468 = vld [vmem:[%s708 + $0x20] sm:$0xf]
        %v1469 = vld [vmem:[%s708 + $0x24] sm:$0xf]
        %v1470 = vld [vmem:[%s708 + $0x28] sm:$0xf]
        %v1471 = vld [vmem:[%s708 + $0x2c] sm:$0xf]
        %v1472 = vld [vmem:[%s708 + $0x30] sm:$0xf]
        %v1473 = vld [vmem:[%s708 + $0x34] sm:$0xf]
        %v1474 = vld [vmem:[%s708 + $0x38] sm:$0xf]
        %v1475 = vld [vmem:[%s708 + $0x3c] sm:$0xf]
        %v1476 = vld [vmem:[%s9] sm:$0xff]
        %v1477 = vld [vmem:[%s9 + $0x8] sm:$0xff]
        %v1478 = vld [vmem:[%s9 + $0x10] sm:$0xff]
        %v1479 = vld [vmem:[%s9 + $0x18] sm:$0xff]
        %v1480 = vld [vmem:[%s9 + $0x20] sm:$0xff]
        %v1481 = vld [vmem:[%s9 + $0x28] sm:$0xff]
        %v1482 = vld [vmem:[%s9 + $0x30] sm:$0xff]
        %v1483 = vld [vmem:[%s9 + $0x38] sm:$0xff]
        %v1484 = vld [vmem:[%s9 + $0x40] sm:$0xff]
        %v1485 = vld [vmem:[%s9 + $0x48] sm:$0xff]
        %v1486 = vld [vmem:[%s9 + $0x50] sm:$0xff]
        %v1487 = vld [vmem:[%s9 + $0x58] sm:$0xff]
        %v1488 = vld [vmem:[%s9 + $0x60] sm:$0xff]
        %v1489 = vld [vmem:[%s9 + $0x68] sm:$0xff]
        %v1490 = vld [vmem:[%s9 + $0x70] sm:$0xff]
        %v1491 = vld [vmem:[%s9 + $0x78] sm:$0xff]
        %v1493 = vlaneseq
        %v1494 = vshrl.u32 %v1493, 7
        %v1495 = vsub.s32 0, %v1494
        %v1496 = vrot.slane %v792, %v1495
        %v1497 = vlaneseq
        %v1498 = vshrl.u32 %v1497, 7
        %v1499 = vsub.s32 4, %v1498
        %v1500 = vrot.slane %v792, %v1499
        %v1503 = vlaneseq
        %v1504 = vshrl.u32 %v1503, 7
        %v1505 = vsub.s32 0, %v1504
        %v1506 = vrot.slane %v1496, %v1505
        %v1507 = vlaneseq
        %v1508 = vshrl.u32 %v1507, 7
        %v1509 = vsub.s32 0, %v1508
        %v1510 = vrot.slane %v1500, %v1509
        %v1527 = vunpack.c.l.b16 %v1460
        %v1528 = vunpack.c.l.b16 %v1461
        %v1529 = vunpack.c.l.b16 %v1462
        %v1530 = vunpack.c.l.b16 %v1463
        %v1531 = vunpack.c.l.b16 %v1464
        %v1532 = vunpack.c.l.b16 %v1465
        %v1533 = vunpack.c.l.b16 %v1466
        %v1534 = vunpack.c.l.b16 %v1467
        %v1535 = vunpack.c.l.b16 %v1468
        %v1536 = vunpack.c.l.b16 %v1469
        %v1537 = vunpack.c.l.b16 %v1470
        %v1538 = vunpack.c.l.b16 %v1471
        %v1539 = vunpack.c.l.b16 %v1472
        %v1540 = vunpack.c.l.b16 %v1473
        %v1541 = vunpack.c.l.b16 %v1474
        %v1542 = vunpack.c.l.b16 %v1475
        %v1543 = vpack.c.b16 %v1528, %v1527
        %v1544 = vpack.c.b16 %v1530, %v1529
        %v1545 = vpack.c.b16 %v1532, %v1531
        %v1546 = vpack.c.b16 %v1534, %v1533
        %v1547 = vpack.c.b16 %v1536, %v1535
        %v1548 = vpack.c.b16 %v1538, %v1537
        %v1549 = vpack.c.b16 %v1540, %v1539
        %v1550 = vpack.c.b16 %v1542, %v1541
        %v1575 = vunpack.c.l.b16 %v1476
        %v1576 = vunpack.c.h.b16 %v1476
        %v1577 = vunpack.c.l.b16 %v1477
        %v1578 = vunpack.c.h.b16 %v1477
        %v1579 = vunpack.c.l.b16 %v1478
        %v1580 = vunpack.c.h.b16 %v1478
        %v1581 = vunpack.c.l.b16 %v1479
        %v1582 = vunpack.c.h.b16 %v1479
        %v1583 = vunpack.c.l.b16 %v1480
        %v1584 = vunpack.c.h.b16 %v1480
        %v1585 = vunpack.c.l.b16 %v1481
        %v1586 = vunpack.c.h.b16 %v1481
        %v1587 = vunpack.c.l.b16 %v1482
        %v1588 = vunpack.c.h.b16 %v1482
        %v1589 = vunpack.c.l.b16 %v1483
        %v1590 = vunpack.c.h.b16 %v1483
        %v1591 = vunpack.c.l.b16 %v1484
        %v1592 = vunpack.c.h.b16 %v1484
        %v1593 = vunpack.c.l.b16 %v1485
        %v1594 = vunpack.c.h.b16 %v1485
        %v1595 = vunpack.c.l.b16 %v1486
        %v1596 = vunpack.c.h.b16 %v1486
        %v1597 = vunpack.c.l.b16 %v1487
        %v1598 = vunpack.c.h.b16 %v1487
        %v1599 = vunpack.c.l.b16 %v1488
        %v1600 = vunpack.c.h.b16 %v1488
        %v1601 = vunpack.c.l.b16 %v1489
        %v1602 = vunpack.c.h.b16 %v1489
        %v1603 = vunpack.c.l.b16 %v1490
        %v1604 = vunpack.c.h.b16 %v1490
        %v1605 = vunpack.c.l.b16 %v1491
        %v1606 = vunpack.c.h.b16 %v1491
        %v1607 = vpack.c.b16 %v1577, %v1575
        %v1608 = vpack.c.b16 %v1578, %v1576
        %v1609 = vpack.c.b16 %v1581, %v1579
        %v1610 = vpack.c.b16 %v1582, %v1580
        %v1611 = vpack.c.b16 %v1585, %v1583
        %v1612 = vpack.c.b16 %v1586, %v1584
        %v1613 = vpack.c.b16 %v1589, %v1587
        %v1614 = vpack.c.b16 %v1590, %v1588
        %v1615 = vpack.c.b16 %v1593, %v1591
        %v1616 = vpack.c.b16 %v1594, %v1592
        %v1617 = vpack.c.b16 %v1597, %v1595
        %v1618 = vpack.c.b16 %v1598, %v1596
        %v1619 = vpack.c.b16 %v1601, %v1599
        %v1620 = vpack.c.b16 %v1602, %v1600
        %v1621 = vpack.c.b16 %v1605, %v1603
        %v1622 = vpack.c.b16 %v1606, %v1604
        %1639 = vmatprep.subr.bf16.mxu0 %v1608
        %1640 = vmatpush1.bf16.msra.mxu0 %v1607
        %1641 = vmatprep.subr.bf16.mxu0 %v1610
        %1642 = vmatpush1.bf16.msra.mxu0 %v1609
        %1643 = vmatprep.subr.bf16.mxu0 %v1612
        %1644 = vmatpush1.bf16.msra.mxu0 %v1611
        %1645 = vmatprep.subr.bf16.mxu0 %v1614
        %1646 = vmatpush1.bf16.msra.mxu0 %v1613
        %1647 = vmatprep.subr.bf16.mxu0 %v1616
        %1648 = vmatpush1.bf16.msra.mxu0 %v1615
        %1649 = vmatprep.subr.bf16.mxu0 %v1618
        %1650 = vmatpush1.bf16.msra.mxu0 %v1617
        %1651 = vmatprep.subr.bf16.mxu0 %v1620
        %1652 = vmatpush1.bf16.msra.mxu0 %v1619
        %1653 = vmatprep.subr.bf16.mxu0 %v1622
        %1654 = vmatpush1.bf16.msra.mxu0 %v1621
        %1655 = vmatprep.subr.bf16.mxu0 0
        %1656 = vmatpush1.bf16.msra.mxu0 0
        %1657 = vmatprep.subr.bf16.mxu0 0
        %1658 = vmatpush1.bf16.msra.mxu0 0
        %1659 = vmatprep.subr.bf16.mxu0 0
        %1660 = vmatpush1.bf16.msra.mxu0 0
        %1661 = vmatprep.subr.bf16.mxu0 0
        %1662 = vmatpush1.bf16.msra.mxu0 0
        %1663 = vmatprep.subr.bf16.mxu0 0
        %1664 = vmatpush1.bf16.msra.mxu0 0
        %1665 = vmatprep.subr.bf16.mxu0 0
        %1666 = vmatpush1.bf16.msra.mxu0 0
        %1667 = vmatprep.subr.bf16.mxu0 0
        %1668 = vmatpush1.bf16.msra.mxu0 0
        %1669 = vmatprep.subr.bf16.mxu0 0
        %1670 = vmatpush1.bf16.msra.mxu0 0
        %1671 = vmatprep.mubr.bf16.mxu0 0
        %1672 = vmatmul.mubr.bf16.gmra.mrb[0].mxu0 %v1543
        %v1673 = vpop.f32.mrb[0].mxu0
        %v1674 = vadd.f32 %v1506, %v1673
        %v1675 = vpop.f32.mrb[0].mxu0
        %v1676 = vadd.f32 %v1510, %v1675
        %v1677 = vpop.f32.mrb[0].mxu0
        %v1678 = vadd.f32 %v1506, %v1677
        %v1679 = vpop.f32.mrb[0].mxu0
        %v1680 = vadd.f32 %v1510, %v1679
        %1681 = vmatprep.mubr.bf16.mxu0 0
        %1682 = vmatmul.mubr.bf16.gmra.mrb[0].mxu0 %v1544
        %v1683 = vpop.f32.mrb[0].mxu0
        %v1684 = vadd.f32 %v1506, %v1683
        %v1685 = vpop.f32.mrb[0].mxu0
        %v1686 = vadd.f32 %v1510, %v1685
        %v1687 = vpop.f32.mrb[0].mxu0
        %v1688 = vadd.f32 %v1506, %v1687
        %v1689 = vpop.f32.mrb[0].mxu0
        %v1690 = vadd.f32 %v1510, %v1689
        %1691 = vmatprep.mubr.bf16.mxu0 0
        %1692 = vmatmul.mubr.bf16.gmra.mrb[0].mxu0 %v1545
        %v1693 = vpop.f32.mrb[0].mxu0
        %v1694 = vadd.f32 %v1506, %v1693
        %v1695 = vpop.f32.mrb[0].mxu0
        %v1696 = vadd.f32 %v1510, %v1695
        %v1697 = vpop.f32.mrb[0].mxu0
        %v1698 = vadd.f32 %v1506, %v1697
        %v1699 = vpop.f32.mrb[0].mxu0
        %v1700 = vadd.f32 %v1510, %v1699
        %1701 = vmatprep.mubr.bf16.mxu0 0
        %1702 = vmatmul.mubr.bf16.gmra.mrb[0].mxu0 %v1546
        %v1703 = vpop.f32.mrb[0].mxu0
        %v1704 = vadd.f32 %v1506, %v1703
        %v1705 = vpop.f32.mrb[0].mxu0
        %v1706 = vadd.f32 %v1510, %v1705
        %v1707 = vpop.f32.mrb[0].mxu0
        %v1708 = vadd.f32 %v1506, %v1707
        %v1709 = vpop.f32.mrb[0].mxu0
        %v1710 = vadd.f32 %v1510, %v1709
        %1711 = vmatprep.mubr.bf16.mxu0 0
        %1712 = vmatmul.mubr.bf16.gmra.mrb[0].mxu0 %v1547
        %v1713 = vpop.f32.mrb[0].mxu0
        %v1714 = vadd.f32 %v1506, %v1713
        %v1715 = vpop.f32.mrb[0].mxu0
        %v1716 = vadd.f32 %v1510, %v1715
        %v1717 = vpop.f32.mrb[0].mxu0
        %v1718 = vadd.f32 %v1506, %v1717
        %v1719 = vpop.f32.mrb[0].mxu0
        %v1720 = vadd.f32 %v1510, %v1719
        %1721 = vmatprep.mubr.bf16.mxu0 0
        %1722 = vmatmul.mubr.bf16.gmra.mrb[0].mxu0 %v1548
        %v1723 = vpop.f32.mrb[0].mxu0
        %v1724 = vadd.f32 %v1506, %v1723
        %v1725 = vpop.f32.mrb[0].mxu0
        %v1726 = vadd.f32 %v1510, %v1725
        %v1727 = vpop.f32.mrb[0].mxu0
        %v1728 = vadd.f32 %v1506, %v1727
        %v1729 = vpop.f32.mrb[0].mxu0
        %v1730 = vadd.f32 %v1510, %v1729
        %1731 = vmatprep.mubr.bf16.mxu0 0
        %1732 = vmatmul.mubr.bf16.gmra.mrb[0].mxu0 %v1549
        %v1733 = vpop.f32.mrb[0].mxu0
        %v1734 = vadd.f32 %v1506, %v1733
        %v1735 = vpop.f32.mrb[0].mxu0
        %v1736 = vadd.f32 %v1510, %v1735
        %v1737 = vpop.f32.mrb[0].mxu0
        %v1738 = vadd.f32 %v1506, %v1737
        %v1739 = vpop.f32.mrb[0].mxu0
        %v1740 = vadd.f32 %v1510, %v1739
        %1741 = vmatprep.mubr.bf16.mxu0 0
        %1742 = vmatmul.mubr.bf16.gmra.mrb[0].mxu0 %v1550
        %v1743 = vpop.f32.mrb[0].mxu0
        %v1744 = vadd.f32 %v1506, %v1743
        %v1745 = vpop.f32.mrb[0].mxu0
        %v1746 = vadd.f32 %v1510, %v1745
        %v1747 = vpop.f32.mrb[0].mxu0
        %v1748 = vadd.f32 %v1506, %v1747
        %v1749 = vpop.f32.mrb[0].mxu0
        %v1750 = vadd.f32 %v1510, %v1749
        %1751 = vdwg.mxu0
        %v1752 = vpack.c.bf16 %v1678, %v1674
        %v1753 = vpack.c.bf16 %v1680, %v1676
        %v1754 = vpack.c.bf16 %v1688, %v1684
        %v1755 = vpack.c.bf16 %v1690, %v1686
        %v1756 = vpack.c.bf16 %v1698, %v1694
        %v1757 = vpack.c.bf16 %v1700, %v1696
        %v1758 = vpack.c.bf16 %v1708, %v1704
        %v1759 = vpack.c.bf16 %v1710, %v1706
        %v1760 = vpack.c.bf16 %v1718, %v1714
        %v1761 = vpack.c.bf16 %v1720, %v1716
        %v1762 = vpack.c.bf16 %v1728, %v1724
        %v1763 = vpack.c.bf16 %v1730, %v1726
        %v1764 = vpack.c.bf16 %v1738, %v1734
        %v1765 = vpack.c.bf16 %v1740, %v1736
        %v1766 = vpack.c.bf16 %v1748, %v1744
        %v1767 = vpack.c.bf16 %v1750, %v1746
        %v1800 = vunpack.c.l.b16 %v758
        %v1801 = vunpack.c.h.b16 %v758
        %v1802 = vunpack.c.l.b16 %v759
        %v1803 = vunpack.c.h.b16 %v759
        %v1804 = vunpack.c.l.b16 %v760
        %v1805 = vunpack.c.h.b16 %v760
        %v1806 = vunpack.c.l.b16 %v761
        %v1807 = vunpack.c.h.b16 %v761
        %v1808 = vunpack.c.l.b16 %v762
        %v1809 = vunpack.c.h.b16 %v762
        %v1810 = vunpack.c.l.b16 %v763
        %v1811 = vunpack.c.h.b16 %v763
        %v1812 = vunpack.c.l.b16 %v764
        %v1813 = vunpack.c.h.b16 %v764
        %v1814 = vunpack.c.l.b16 %v765
        %v1815 = vunpack.c.h.b16 %v765
        %v1816 = vunpack.c.l.b16 %v766
        %v1817 = vunpack.c.h.b16 %v766
        %v1818 = vunpack.c.l.b16 %v767
        %v1819 = vunpack.c.h.b16 %v767
        %v1820 = vunpack.c.l.b16 %v768
        %v1821 = vunpack.c.h.b16 %v768
        %v1822 = vunpack.c.l.b16 %v769
        %v1823 = vunpack.c.h.b16 %v769
        %v1824 = vunpack.c.l.b16 %v770
        %v1825 = vunpack.c.h.b16 %v770
        %v1826 = vunpack.c.l.b16 %v771
        %v1827 = vunpack.c.h.b16 %v771
        %v1828 = vunpack.c.l.b16 %v772
        %v1829 = vunpack.c.h.b16 %v772
        %v1830 = vunpack.c.l.b16 %v773
        %v1831 = vunpack.c.h.b16 %v773
        %v1832 = vunpack.c.l.b16 %v774
        %v1833 = vunpack.c.h.b16 %v774
        %v1834 = vunpack.c.l.b16 %v775
        %v1835 = vunpack.c.h.b16 %v775
        %v1836 = vunpack.c.l.b16 %v776
        %v1837 = vunpack.c.h.b16 %v776
        %v1838 = vunpack.c.l.b16 %v777
        %v1839 = vunpack.c.h.b16 %v777
        %v1840 = vunpack.c.l.b16 %v778
        %v1841 = vunpack.c.h.b16 %v778
        %v1842 = vunpack.c.l.b16 %v779
        %v1843 = vunpack.c.h.b16 %v779
        %v1844 = vunpack.c.l.b16 %v780
        %v1845 = vunpack.c.h.b16 %v780
        %v1846 = vunpack.c.l.b16 %v781
        %v1847 = vunpack.c.h.b16 %v781
        %v1848 = vunpack.c.l.b16 %v782
        %v1849 = vunpack.c.h.b16 %v782
        %v1850 = vunpack.c.l.b16 %v783
        %v1851 = vunpack.c.h.b16 %v783
        %v1852 = vunpack.c.l.b16 %v784
        %v1853 = vunpack.c.h.b16 %v784
        %v1854 = vunpack.c.l.b16 %v785
        %v1855 = vunpack.c.h.b16 %v785
        %v1856 = vunpack.c.l.b16 %v786
        %v1857 = vunpack.c.h.b16 %v786
        %v1858 = vunpack.c.l.b16 %v787
        %v1859 = vunpack.c.h.b16 %v787
        %v1860 = vunpack.c.l.b16 %v788
        %v1861 = vunpack.c.h.b16 %v788
        %v1862 = vunpack.c.l.b16 %v789
        %v1863 = vunpack.c.h.b16 %v789
        %v1864 = vpack.c.b16 %v1802, %v1800
        %v1865 = vpack.c.b16 %v1803, %v1801
        %v1866 = vpack.c.b16 %v1806, %v1804
        %v1867 = vpack.c.b16 %v1807, %v1805
        %v1868 = vpack.c.b16 %v1810, %v1808
        %v1869 = vpack.c.b16 %v1811, %v1809
        %v1870 = vpack.c.b16 %v1814, %v1812
        %v1871 = vpack.c.b16 %v1815, %v1813
        %v1872 = vpack.c.b16 %v1818, %v1816
        %v1873 = vpack.c.b16 %v1819, %v1817
        %v1874 = vpack.c.b16 %v1822, %v1820
        %v1875 = vpack.c.b16 %v1823, %v1821
        %v1876 = vpack.c.b16 %v1826, %v1824
        %v1877 = vpack.c.b16 %v1827, %v1825
        %v1878 = vpack.c.b16 %v1830, %v1828
        %v1879 = vpack.c.b16 %v1831, %v1829
        %v1880 = vpack.c.b16 %v1834, %v1832
        %v1881 = vpack.c.b16 %v1835, %v1833
        %v1882 = vpack.c.b16 %v1838, %v1836
        %v1883 = vpack.c.b16 %v1839, %v1837
        %v1884 = vpack.c.b16 %v1842, %v1840
        %v1885 = vpack.c.b16 %v1843, %v1841
        %v1886 = vpack.c.b16 %v1846, %v1844
        %v1887 = vpack.c.b16 %v1847, %v1845
        %v1888 = vpack.c.b16 %v1850, %v1848
        %v1889 = vpack.c.b16 %v1851, %v1849
        %v1890 = vpack.c.b16 %v1854, %v1852
        %v1891 = vpack.c.b16 %v1855, %v1853
        %v1892 = vpack.c.b16 %v1858, %v1856
        %v1893 = vpack.c.b16 %v1859, %v1857
        %v1894 = vpack.c.b16 %v1862, %v1860
        %v1895 = vpack.c.b16 %v1863, %v1861
        %1928 = vmatprep.subr.bf16.mxu0 %v1865
        %1929 = vmatpush1.bf16.msra.mxu0 %v1864
        %1930 = vmatprep.subr.bf16.mxu0 %v1867
        %1931 = vmatpush1.bf16.msra.mxu0 %v1866
        %1932 = vmatprep.subr.bf16.mxu0 %v1869
        %1933 = vmatpush1.bf16.msra.mxu0 %v1868
        %1934 = vmatprep.subr.bf16.mxu0 %v1871
        %1935 = vmatpush1.bf16.msra.mxu0 %v1870
        %1936 = vmatprep.subr.bf16.mxu0 %v1873
        %1937 = vmatpush1.bf16.msra.mxu0 %v1872
        %1938 = vmatprep.subr.bf16.mxu0 %v1875
        %1939 = vmatpush1.bf16.msra.mxu0 %v1874
        %1940 = vmatprep.subr.bf16.mxu0 %v1877
        %1941 = vmatpush1.bf16.msra.mxu0 %v1876
        %1942 = vmatprep.subr.bf16.mxu0 %v1879
        %1943 = vmatpush1.bf16.msra.mxu0 %v1878
        %1944 = vmatprep.subr.bf16.mxu0 %v1881
        %1945 = vmatpush1.bf16.msra.mxu0 %v1880
        %1946 = vmatprep.subr.bf16.mxu0 %v1883
        %1947 = vmatpush1.bf16.msra.mxu0 %v1882
        %1948 = vmatprep.subr.bf16.mxu0 %v1885
        %1949 = vmatpush1.bf16.msra.mxu0 %v1884
        %1950 = vmatprep.subr.bf16.mxu0 %v1887
        %1951 = vmatpush1.bf16.msra.mxu0 %v1886
        %1952 = vmatprep.subr.bf16.mxu0 %v1889
        %1953 = vmatpush1.bf16.msra.mxu0 %v1888
        %1954 = vmatprep.subr.bf16.mxu0 %v1891
        %1955 = vmatpush1.bf16.msra.mxu0 %v1890
        %1956 = vmatprep.subr.bf16.mxu0 %v1893
        %1957 = vmatpush1.bf16.msra.mxu0 %v1892
        %1958 = vmatprep.subr.bf16.mxu0 %v1895
        %1959 = vmatpush1.bf16.msra.mxu0 %v1894
        %1960 = vmatprep.mubr.bf16.mxu0 %v1753
        %1961 = vmatmul.mubr.bf16.gmra.mrb[0].mxu0 %v1752
        %v1962 = vpop.f32.mrb[0].mxu0
        %v1963 = vadd.f32 0.0, %v1962
        %v1964 = vpop.f32.mrb[0].mxu0
        %v1965 = vadd.f32 0.0, %v1964
        %v1966 = vpop.f32.mrb[0].mxu0
        %v1967 = vadd.f32 0.0, %v1966
        %v1968 = vpop.f32.mrb[0].mxu0
        %v1969 = vadd.f32 0.0, %v1968
        %1970 = vmatprep.mubr.bf16.mxu0 %v1755
        %1971 = vmatmul.mubr.bf16.gmra.mrb[0].mxu0 %v1754
        %v1972 = vpop.f32.mrb[0].mxu0
        %v1973 = vadd.f32 0.0, %v1972
        %v1974 = vpop.f32.mrb[0].mxu0
        %v1975 = vadd.f32 0.0, %v1974
        %v1976 = vpop.f32.mrb[0].mxu0
        %v1977 = vadd.f32 0.0, %v1976
        %v1978 = vpop.f32.mrb[0].mxu0
        %v1979 = vadd.f32 0.0, %v1978
        %1980 = vmatprep.mubr.bf16.mxu0 %v1757
        %1981 = vmatmul.mubr.bf16.gmra.mrb[0].mxu0 %v1756
        %v1982 = vpop.f32.mrb[0].mxu0
        %v1983 = vadd.f32 0.0, %v1982
        %v1984 = vpop.f32.mrb[0].mxu0
        %v1985 = vadd.f32 0.0, %v1984
        %v1986 = vpop.f32.mrb[0].mxu0
        %v1987 = vadd.f32 0.0, %v1986
        %v1988 = vpop.f32.mrb[0].mxu0
        %v1989 = vadd.f32 0.0, %v1988
        %1990 = vmatprep.mubr.bf16.mxu0 %v1759
        %1991 = vmatmul.mubr.bf16.gmra.mrb[0].mxu0 %v1758
        %v1992 = vpop.f32.mrb[0].mxu0
        %v1993 = vadd.f32 0.0, %v1992
        %v1994 = vpop.f32.mrb[0].mxu0
        %v1995 = vadd.f32 0.0, %v1994
        %v1996 = vpop.f32.mrb[0].mxu0
        %v1997 = vadd.f32 0.0, %v1996
        %v1998 = vpop.f32.mrb[0].mxu0
        %v1999 = vadd.f32 0.0, %v1998
        %2000 = vmatprep.mubr.bf16.mxu0 %v1761
        %2001 = vmatmul.mubr.bf16.gmra.mrb[0].mxu0 %v1760
        %v2002 = vpop.f32.mrb[0].mxu0
        %v2003 = vadd.f32 0.0, %v2002
        %v2004 = vpop.f32.mrb[0].mxu0
        %v2005 = vadd.f32 0.0, %v2004
        %v2006 = vpop.f32.mrb[0].mxu0
        %v2007 = vadd.f32 0.0, %v2006
        %v2008 = vpop.f32.mrb[0].mxu0
        %v2009 = vadd.f32 0.0, %v2008
        %2010 = vmatprep.mubr.bf16.mxu0 %v1763
        %2011 = vmatmul.mubr.bf16.gmra.mrb[0].mxu0 %v1762
        %v2012 = vpop.f32.mrb[0].mxu0
        %v2013 = vadd.f32 0.0, %v2012
        %v2014 = vpop.f32.mrb[0].mxu0
        %v2015 = vadd.f32 0.0, %v2014
        %v2016 = vpop.f32.mrb[0].mxu0
        %v2017 = vadd.f32 0.0, %v2016
        %v2018 = vpop.f32.mrb[0].mxu0
        %v2019 = vadd.f32 0.0, %v2018
        %2020 = vmatprep.mubr.bf16.mxu0 %v1765
        %2021 = vmatmul.mubr.bf16.gmra.mrb[0].mxu0 %v1764
        %v2022 = vpop.f32.mrb[0].mxu0
        %v2023 = vadd.f32 0.0, %v2022
        %v2024 = vpop.f32.mrb[0].mxu0
        %v2025 = vadd.f32 0.0, %v2024
        %v2026 = vpop.f32.mrb[0].mxu0
        %v2027 = vadd.f32 0.0, %v2026
        %v2028 = vpop.f32.mrb[0].mxu0
        %v2029 = vadd.f32 0.0, %v2028
        %2030 = vmatprep.mubr.bf16.mxu0 %v1767
        %2031 = vmatmul.mubr.bf16.gmra.mrb[0].mxu0 %v1766
        %v2032 = vpop.f32.mrb[0].mxu0
        %v2033 = vadd.f32 0.0, %v2032
        %v2034 = vpop.f32.mrb[0].mxu0
        %v2035 = vadd.f32 0.0, %v2034
        %v2036 = vpop.f32.mrb[0].mxu0
        %v2037 = vadd.f32 0.0, %v2036
        %v2038 = vpop.f32.mrb[0].mxu0
        %v2039 = vadd.f32 0.0, %v2038
        %2040 = vdwg.mxu0
        %v2041 = vsub.f32 %v1674, %v1963
        %v2042 = vsub.f32 %v1676, %v1965
        %v2043 = vsub.f32 %v1678, %v1967
        %v2044 = vsub.f32 %v1680, %v1969
        %v2045 = vsub.f32 %v1684, %v1973
        %v2046 = vsub.f32 %v1686, %v1975
        %v2047 = vsub.f32 %v1688, %v1977
        %v2048 = vsub.f32 %v1690, %v1979
        %v2049 = vsub.f32 %v1694, %v1983
        %v2050 = vsub.f32 %v1696, %v1985
        %v2051 = vsub.f32 %v1698, %v1987
        %v2052 = vsub.f32 %v1700, %v1989
        %v2053 = vsub.f32 %v1704, %v1993
        %v2054 = vsub.f32 %v1706, %v1995
        %v2055 = vsub.f32 %v1708, %v1997
        %v2056 = vsub.f32 %v1710, %v1999
        %v2057 = vsub.f32 %v1714, %v2003
        %v2058 = vsub.f32 %v1716, %v2005
        %v2059 = vsub.f32 %v1718, %v2007
        %v2060 = vsub.f32 %v1720, %v2009
        %v2061 = vsub.f32 %v1724, %v2013
        %v2062 = vsub.f32 %v1726, %v2015
        %v2063 = vsub.f32 %v1728, %v2017
        %v2064 = vsub.f32 %v1730, %v2019
        %v2065 = vsub.f32 %v1734, %v2023
        %v2066 = vsub.f32 %v1736, %v2025
        %v2067 = vsub.f32 %v1738, %v2027
        %v2068 = vsub.f32 %v1740, %v2029
        %v2069 = vsub.f32 %v1744, %v2033
        %v2070 = vsub.f32 %v1746, %v2035
        %v2071 = vsub.f32 %v1748, %v2037
        %v2072 = vsub.f32 %v1750, %v2039
        %v2073 = vmul.f32 %v2041, %v2041
        %v2074 = vmul.f32 %v2042, %v2042
        %v2075 = vmul.f32 %v2043, %v2043
        %v2076 = vmul.f32 %v2044, %v2044
        %v2077 = vmul.f32 %v2045, %v2045
        %v2078 = vmul.f32 %v2046, %v2046
        %v2079 = vmul.f32 %v2047, %v2047
        %v2080 = vmul.f32 %v2048, %v2048
        %v2081 = vmul.f32 %v2049, %v2049
        %v2082 = vmul.f32 %v2050, %v2050
        %v2083 = vmul.f32 %v2051, %v2051
        %v2084 = vmul.f32 %v2052, %v2052
        %v2085 = vmul.f32 %v2053, %v2053
        %v2086 = vmul.f32 %v2054, %v2054
        %v2087 = vmul.f32 %v2055, %v2055
        %v2088 = vmul.f32 %v2056, %v2056
        %v2089 = vmul.f32 %v2057, %v2057
        %v2090 = vmul.f32 %v2058, %v2058
        %v2091 = vmul.f32 %v2059, %v2059
        %v2092 = vmul.f32 %v2060, %v2060
        %v2093 = vmul.f32 %v2061, %v2061
        %v2094 = vmul.f32 %v2062, %v2062
        %v2095 = vmul.f32 %v2063, %v2063
        %v2096 = vmul.f32 %v2064, %v2064
        %v2097 = vmul.f32 %v2065, %v2065
        %v2098 = vmul.f32 %v2066, %v2066
        %v2099 = vmul.f32 %v2067, %v2067
        %v2100 = vmul.f32 %v2068, %v2068
        %v2101 = vmul.f32 %v2069, %v2069
        %v2102 = vmul.f32 %v2070, %v2070
        %v2103 = vmul.f32 %v2071, %v2071
        %v2104 = vmul.f32 %v2072, %v2072
        %v2105 = vpack.c.bf16 %v2075, %v2073
        %v2106 = vpack.c.bf16 %v2076, %v2074
        %v2107 = vpack.c.bf16 %v2079, %v2077
        %v2108 = vpack.c.bf16 %v2080, %v2078
        %v2109 = vpack.c.bf16 %v2083, %v2081
        %v2110 = vpack.c.bf16 %v2084, %v2082
        %v2111 = vpack.c.bf16 %v2087, %v2085
        %v2112 = vpack.c.bf16 %v2088, %v2086
        %v2113 = vpack.c.bf16 %v2091, %v2089
        %v2114 = vpack.c.bf16 %v2092, %v2090
        %v2115 = vpack.c.bf16 %v2095, %v2093
        %v2116 = vpack.c.bf16 %v2096, %v2094
        %v2117 = vpack.c.bf16 %v2099, %v2097
        %v2118 = vpack.c.bf16 %v2100, %v2098
        %v2119 = vpack.c.bf16 %v2103, %v2101
        %v2120 = vpack.c.bf16 %v2104, %v2102
        %2121 = vmatprep.subr.bf16.mxu0 %v1865
        %2122 = vmatpush1.bf16.msra.mxu0 %v1864
        %2123 = vmatprep.subr.bf16.mxu0 %v1867
        %2124 = vmatpush1.bf16.msra.mxu0 %v1866
        %2125 = vmatprep.subr.bf16.mxu0 %v1869
        %2126 = vmatpush1.bf16.msra.mxu0 %v1868
        %2127 = vmatprep.subr.bf16.mxu0 %v1871
        %2128 = vmatpush1.bf16.msra.mxu0 %v1870
        %2129 = vmatprep.subr.bf16.mxu0 %v1873
        %2130 = vmatpush1.bf16.msra.mxu0 %v1872
        %2131 = vmatprep.subr.bf16.mxu0 %v1875
        %2132 = vmatpush1.bf16.msra.mxu0 %v1874
        %2133 = vmatprep.subr.bf16.mxu0 %v1877
        %2134 = vmatpush1.bf16.msra.mxu0 %v1876
        %2135 = vmatprep.subr.bf16.mxu0 %v1879
        %2136 = vmatpush1.bf16.msra.mxu0 %v1878
        %2137 = vmatprep.subr.bf16.mxu0 %v1881
        %2138 = vmatpush1.bf16.msra.mxu0 %v1880
        %2139 = vmatprep.subr.bf16.mxu0 %v1883
        %2140 = vmatpush1.bf16.msra.mxu0 %v1882
        %2141 = vmatprep.subr.bf16.mxu0 %v1885
        %2142 = vmatpush1.bf16.msra.mxu0 %v1884
        %2143 = vmatprep.subr.bf16.mxu0 %v1887
        %2144 = vmatpush1.bf16.msra.mxu0 %v1886
        %2145 = vmatprep.subr.bf16.mxu0 %v1889
        %2146 = vmatpush1.bf16.msra.mxu0 %v1888
        %2147 = vmatprep.subr.bf16.mxu0 %v1891
        %2148 = vmatpush1.bf16.msra.mxu0 %v1890
        %2149 = vmatprep.subr.bf16.mxu0 %v1893
        %2150 = vmatpush1.bf16.msra.mxu0 %v1892
        %2151 = vmatprep.subr.bf16.mxu0 %v1895
        %2152 = vmatpush1.bf16.msra.mxu0 %v1894
        %2153 = vmatprep.mubr.bf16.mxu0 %v2106
        %2154 = vmatmul.mubr.bf16.gmra.mrb[0].mxu0 %v2105
        %v2155 = vpop.f32.mrb[0].mxu0
        %v2156 = vadd.f32 1e-05, %v2155
        %v2157 = vpop.f32.mrb[0].mxu0
        %v2158 = vadd.f32 1e-05, %v2157
        %v2159 = vpop.f32.mrb[0].mxu0
        %v2160 = vadd.f32 1e-05, %v2159
        %v2161 = vpop.f32.mrb[0].mxu0
        %v2162 = vadd.f32 1e-05, %v2161
        %2163 = vmatprep.mubr.bf16.mxu0 %v2108
        %2164 = vmatmul.mubr.bf16.gmra.mrb[0].mxu0 %v2107
        %v2165 = vpop.f32.mrb[0].mxu0
        %v2166 = vadd.f32 1e-05, %v2165
        %v2167 = vpop.f32.mrb[0].mxu0
        %v2168 = vadd.f32 1e-05, %v2167
        %v2169 = vpop.f32.mrb[0].mxu0
        %v2170 = vadd.f32 1e-05, %v2169
        %v2171 = vpop.f32.mrb[0].mxu0
        %v2172 = vadd.f32 1e-05, %v2171
        %2173 = vmatprep.mubr.bf16.mxu0 %v2110
        %2174 = vmatmul.mubr.bf16.gmra.mrb[0].mxu0 %v2109
        %v2175 = vpop.f32.mrb[0].mxu0
        %v2176 = vadd.f32 1e-05, %v2175
        %v2177 = vpop.f32.mrb[0].mxu0
        %v2178 = vadd.f32 1e-05, %v2177
        %v2179 = vpop.f32.mrb[0].mxu0
        %v2180 = vadd.f32 1e-05, %v2179
        %v2181 = vpop.f32.mrb[0].mxu0
        %v2182 = vadd.f32 1e-05, %v2181
        %2183 = vmatprep.mubr.bf16.mxu0 %v2112
        %2184 = vmatmul.mubr.bf16.gmra.mrb[0].mxu0 %v2111
        %v2185 = vpop.f32.mrb[0].mxu0
        %v2186 = vadd.f32 1e-05, %v2185
        %v2187 = vpop.f32.mrb[0].mxu0
        %v2188 = vadd.f32 1e-05, %v2187
        %v2189 = vpop.f32.mrb[0].mxu0
        %v2190 = vadd.f32 1e-05, %v2189
        %v2191 = vpop.f32.mrb[0].mxu0
        %v2192 = vadd.f32 1e-05, %v2191
        %2193 = vmatprep.mubr.bf16.mxu0 %v2114
        %2194 = vmatmul.mubr.bf16.gmra.mrb[0].mxu0 %v2113
        %v2195 = vpop.f32.mrb[0].mxu0
        %v2196 = vadd.f32 1e-05, %v2195
        %v2197 = vpop.f32.mrb[0].mxu0
        %v2198 = vadd.f32 1e-05, %v2197
        %v2199 = vpop.f32.mrb[0].mxu0
        %v2200 = vadd.f32 1e-05, %v2199
        %v2201 = vpop.f32.mrb[0].mxu0
        %v2202 = vadd.f32 1e-05, %v2201
        %2203 = vmatprep.mubr.bf16.mxu0 %v2116
        %2204 = vmatmul.mubr.bf16.gmra.mrb[0].mxu0 %v2115
        %v2205 = vpop.f32.mrb[0].mxu0
        %v2206 = vadd.f32 1e-05, %v2205
        %v2207 = vpop.f32.mrb[0].mxu0
        %v2208 = vadd.f32 1e-05, %v2207
        %v2209 = vpop.f32.mrb[0].mxu0
        %v2210 = vadd.f32 1e-05, %v2209
        %v2211 = vpop.f32.mrb[0].mxu0
        %v2212 = vadd.f32 1e-05, %v2211
        %2213 = vmatprep.mubr.bf16.mxu0 %v2118
        %2214 = vmatmul.mubr.bf16.gmra.mrb[0].mxu0 %v2117
        %v2215 = vpop.f32.mrb[0].mxu0
        %v2216 = vadd.f32 1e-05, %v2215
        %v2217 = vpop.f32.mrb[0].mxu0
        %v2218 = vadd.f32 1e-05, %v2217
        %v2219 = vpop.f32.mrb[0].mxu0
        %v2220 = vadd.f32 1e-05, %v2219
        %v2221 = vpop.f32.mrb[0].mxu0
        %v2222 = vadd.f32 1e-05, %v2221
        %2223 = vmatprep.mubr.bf16.mxu0 %v2120
        %2224 = vmatmul.mubr.bf16.gmra.mrb[0].mxu0 %v2119
        %v2225 = vpop.f32.mrb[0].mxu0
        %v2226 = vadd.f32 1e-05, %v2225
        %v2227 = vpop.f32.mrb[0].mxu0
        %v2228 = vadd.f32 1e-05, %v2227
        %v2229 = vpop.f32.mrb[0].mxu0
        %v2230 = vadd.f32 1e-05, %v2229
        %v2231 = vpop.f32.mrb[0].mxu0
        %v2232 = vadd.f32 1e-05, %v2231
        %2233 = vdwg.mxu0
        %v2234 = vrsqrt.pop %v2156
        %v2235 = vrsqrt.pop %v2158
        %v2236 = vrsqrt.pop %v2160
        %v2237 = vrsqrt.pop %v2162
        %v2238 = vrsqrt.pop %v2166
        %v2239 = vrsqrt.pop %v2168
        %v2240 = vrsqrt.pop %v2170
        %v2241 = vrsqrt.pop %v2172
        %v2242 = vrsqrt.pop %v2176
        %v2243 = vrsqrt.pop %v2178
        %v2244 = vrsqrt.pop %v2180
        %v2245 = vrsqrt.pop %v2182
        %v2246 = vrsqrt.pop %v2186
        %v2247 = vrsqrt.pop %v2188
        %v2248 = vrsqrt.pop %v2190
        %v2249 = vrsqrt.pop %v2192
        %v2250 = vrsqrt.pop %v2196
        %v2251 = vrsqrt.pop %v2198
        %v2252 = vrsqrt.pop %v2200
        %v2253 = vrsqrt.pop %v2202
        %v2254 = vrsqrt.pop %v2206
        %v2255 = vrsqrt.pop %v2208
        %v2256 = vrsqrt.pop %v2210
        %v2257 = vrsqrt.pop %v2212
        %v2258 = vrsqrt.pop %v2216
        %v2259 = vrsqrt.pop %v2218
        %v2260 = vrsqrt.pop %v2220
        %v2261 = vrsqrt.pop %v2222
        %v2262 = vrsqrt.pop %v2226
        %v2263 = vrsqrt.pop %v2228
        %v2264 = vrsqrt.pop %v2230
        %v2265 = vrsqrt.pop %v2232
        %v2266 = vmul.f32 %v2041, %v2234
        %v2267 = vmul.f32 %v2042, %v2235
        %v2268 = vmul.f32 %v2043, %v2236
        %v2269 = vmul.f32 %v2044, %v2237
        %v2270 = vmul.f32 %v2045, %v2238
        %v2271 = vmul.f32 %v2046, %v2239
        %v2272 = vmul.f32 %v2047, %v2240
        %v2273 = vmul.f32 %v2048, %v2241
        %v2274 = vmul.f32 %v2049, %v2242
        %v2275 = vmul.f32 %v2050, %v2243
        %v2276 = vmul.f32 %v2051, %v2244
        %v2277 = vmul.f32 %v2052, %v2245
        %v2278 = vmul.f32 %v2053, %v2246
        %v2279 = vmul.f32 %v2054, %v2247
        %v2280 = vmul.f32 %v2055, %v2248
        %v2281 = vmul.f32 %v2056, %v2249
        %v2282 = vmul.f32 %v2057, %v2250
        %v2283 = vmul.f32 %v2058, %v2251
        %v2284 = vmul.f32 %v2059, %v2252
        %v2285 = vmul.f32 %v2060, %v2253
        %v2286 = vmul.f32 %v2061, %v2254
        %v2287 = vmul.f32 %v2062, %v2255
        %v2288 = vmul.f32 %v2063, %v2256
        %v2289 = vmul.f32 %v2064, %v2257
        %v2290 = vmul.f32 %v2065, %v2258
        %v2291 = vmul.f32 %v2066, %v2259
        %v2292 = vmul.f32 %v2067, %v2260
        %v2293 = vmul.f32 %v2068, %v2261
        %v2294 = vmul.f32 %v2069, %v2262
        %v2295 = vmul.f32 %v2070, %v2263
        %v2296 = vmul.f32 %v2071, %v2264
        %v2297 = vmul.f32 %v2072, %v2265
        %v2298 = vlaneseq
        %v2299 = vshrl.u32 %v2298, 7
        %v2300 = vsub.s32 1, %v2299
        %v2301 = vrot.slane %v792, %v2300
        %v2302 = vlaneseq
        %v2303 = vshrl.u32 %v2302, 7
        %v2304 = vsub.s32 5, %v2303
        %v2305 = vrot.slane %v792, %v2304
        %v2308 = vlaneseq
        %v2309 = vshrl.u32 %v2308, 7
        %v2310 = vsub.s32 1, %v2309
        %v2311 = vrot.slane %v2301, %v2310
        %v2312 = vlaneseq
        %v2313 = vshrl.u32 %v2312, 7
        %v2314 = vsub.s32 1, %v2313
        %v2315 = vrot.slane %v2305, %v2314
        %v2316 = vmul.f32 %v2266, %v2311
        %v2317 = vmul.f32 %v2267, %v2315
        %v2318 = vmul.f32 %v2268, %v2311
        %v2319 = vmul.f32 %v2269, %v2315
        %v2320 = vmul.f32 %v2270, %v2311
        %v2321 = vmul.f32 %v2271, %v2315
        %v2322 = vmul.f32 %v2272, %v2311
        %v2323 = vmul.f32 %v2273, %v2315
        %v2324 = vmul.f32 %v2274, %v2311
        %v2325 = vmul.f32 %v2275, %v2315
        %v2326 = vmul.f32 %v2276, %v2311
        %v2327 = vmul.f32 %v2277, %v2315
        %v2328 = vmul.f32 %v2278, %v2311
        %v2329 = vmul.f32 %v2279, %v2315
        %v2330 = vmul.f32 %v2280, %v2311
        %v2331 = vmul.f32 %v2281, %v2315
        %v2332 = vmul.f32 %v2282, %v2311
        %v2333 = vmul.f32 %v2283, %v2315
        %v2334 = vmul.f32 %v2284, %v2311
        %v2335 = vmul.f32 %v2285, %v2315
        %v2336 = vmul.f32 %v2286, %v2311
        %v2337 = vmul.f32 %v2287, %v2315
        %v2338 = vmul.f32 %v2288, %v2311
        %v2339 = vmul.f32 %v2289, %v2315
        %v2340 = vmul.f32 %v2290, %v2311
        %v2341 = vmul.f32 %v2291, %v2315
        %v2342 = vmul.f32 %v2292, %v2311
        %v2343 = vmul.f32 %v2293, %v2315
        %v2344 = vmul.f32 %v2294, %v2311
        %v2345 = vmul.f32 %v2295, %v2315
        %v2346 = vmul.f32 %v2296, %v2311
        %v2347 = vmul.f32 %v2297, %v2315
        %v2348 = vlaneseq
        %v2349 = vshrl.u32 %v2348, 7
        %v2350 = vsub.s32 2, %v2349
        %v2351 = vrot.slane %v792, %v2350
        %v2352 = vlaneseq
        %v2353 = vshrl.u32 %v2352, 7
        %v2354 = vsub.s32 6, %v2353
        %v2355 = vrot.slane %v792, %v2354
        %v2358 = vlaneseq
        %v2359 = vshrl.u32 %v2358, 7
        %v2360 = vsub.s32 2, %v2359
        %v2361 = vrot.slane %v2351, %v2360
        %v2362 = vlaneseq
        %v2363 = vshrl.u32 %v2362, 7
        %v2364 = vsub.s32 2, %v2363
        %v2365 = vrot.slane %v2355, %v2364
        %v2366 = vadd.f32 %v2316, %v2361
        %v2367 = vadd.f32 %v2317, %v2365
        %v2368 = vadd.f32 %v2318, %v2361
        %v2369 = vadd.f32 %v2319, %v2365
        %v2370 = vadd.f32 %v2320, %v2361
        %v2371 = vadd.f32 %v2321, %v2365
        %v2372 = vadd.f32 %v2322, %v2361
        %v2373 = vadd.f32 %v2323, %v2365
        %v2374 = vadd.f32 %v2324, %v2361
        %v2375 = vadd.f32 %v2325, %v2365
        %v2376 = vadd.f32 %v2326, %v2361
        %v2377 = vadd.f32 %v2327, %v2365
        %v2378 = vadd.f32 %v2328, %v2361
        %v2379 = vadd.f32 %v2329, %v2365
        %v2380 = vadd.f32 %v2330, %v2361
        %v2381 = vadd.f32 %v2331, %v2365
        %v2382 = vadd.f32 %v2332, %v2361
        %v2383 = vadd.f32 %v2333, %v2365
        %v2384 = vadd.f32 %v2334, %v2361
        %v2385 = vadd.f32 %v2335, %v2365
        %v2386 = vadd.f32 %v2336, %v2361
        %v2387 = vadd.f32 %v2337, %v2365
        %v2388 = vadd.f32 %v2338, %v2361
        %v2389 = vadd.f32 %v2339, %v2365
        %v2390 = vadd.f32 %v2340, %v2361
        %v2391 = vadd.f32 %v2341, %v2365
        %v2392 = vadd.f32 %v2342, %v2361
        %v2393 = vadd.f32 %v2343, %v2365
        %v2394 = vadd.f32 %v2344, %v2361
        %v2395 = vadd.f32 %v2345, %v2365
        %v2396 = vadd.f32 %v2346, %v2361
        %v2397 = vadd.f32 %v2347, %v2365
        %v2398 = vand.u32 2147483647, %v2366
        %v2399 = vand.u32 2147483647, %v2367
        %v2400 = vand.u32 2147483647, %v2368
        %v2401 = vand.u32 2147483647, %v2369
        %v2402 = vand.u32 2147483647, %v2370
        %v2403 = vand.u32 2147483647, %v2371
        %v2404 = vand.u32 2147483647, %v2372
        %v2405 = vand.u32 2147483647, %v2373
        %v2406 = vand.u32 2147483647, %v2374
        %v2407 = vand.u32 2147483647, %v2375
        %v2408 = vand.u32 2147483647, %v2376
        %v2409 = vand.u32 2147483647, %v2377
        %v2410 = vand.u32 2147483647, %v2378
        %v2411 = vand.u32 2147483647, %v2379
        %v2412 = vand.u32 2147483647, %v2380
        %v2413 = vand.u32 2147483647, %v2381
        %v2414 = vand.u32 2147483647, %v2382
        %v2415 = vand.u32 2147483647, %v2383
        %v2416 = vand.u32 2147483647, %v2384
        %v2417 = vand.u32 2147483647, %v2385
        %v2418 = vand.u32 2147483647, %v2386
        %v2419 = vand.u32 2147483647, %v2387
        %v2420 = vand.u32 2147483647, %v2388
        %v2421 = vand.u32 2147483647, %v2389
        %v2422 = vand.u32 2147483647, %v2390
        %v2423 = vand.u32 2147483647, %v2391
        %v2424 = vand.u32 2147483647, %v2392
        %v2425 = vand.u32 2147483647, %v2393
        %v2426 = vand.u32 2147483647, %v2394
        %v2427 = vand.u32 2147483647, %v2395
        %v2428 = vand.u32 2147483647, %v2396
        %v2429 = vand.u32 2147483647, %v2397
        %v2430 = vsub.f32 0.0, %v2398
        %v2431 = vsub.f32 0.0, %v2399
        %v2432 = vsub.f32 0.0, %v2400
        %v2433 = vsub.f32 0.0, %v2401
        %v2434 = vsub.f32 0.0, %v2402
        %v2435 = vsub.f32 0.0, %v2403
        %v2436 = vsub.f32 0.0, %v2404
        %v2437 = vsub.f32 0.0, %v2405
        %v2438 = vsub.f32 0.0, %v2406
        %v2439 = vsub.f32 0.0, %v2407
        %v2440 = vsub.f32 0.0, %v2408
        %v2441 = vsub.f32 0.0, %v2409
        %v2442 = vsub.f32 0.0, %v2410
        %v2443 = vsub.f32 0.0, %v2411
        %v2444 = vsub.f32 0.0, %v2412
        %v2445 = vsub.f32 0.0, %v2413
        %v2446 = vsub.f32 0.0, %v2414
        %v2447 = vsub.f32 0.0, %v2415
        %v2448 = vsub.f32 0.0, %v2416
        %v2449 = vsub.f32 0.0, %v2417
        %v2450 = vsub.f32 0.0, %v2418
        %v2451 = vsub.f32 0.0, %v2419
        %v2452 = vsub.f32 0.0, %v2420
        %v2453 = vsub.f32 0.0, %v2421
        %v2454 = vsub.f32 0.0, %v2422
        %v2455 = vsub.f32 0.0, %v2423
        %v2456 = vsub.f32 0.0, %v2424
        %v2457 = vsub.f32 0.0, %v2425
        %v2458 = vsub.f32 0.0, %v2426
        %v2459 = vsub.f32 0.0, %v2427
        %v2460 = vsub.f32 0.0, %v2428
        %v2461 = vsub.f32 0.0, %v2429
        %v2462 = vpack.c.bf16 %v2432, %v2430
        %v2463 = vpack.c.bf16 %v2433, %v2431
        %v2464 = vpack.c.bf16 %v2436, %v2434
        %v2465 = vpack.c.bf16 %v2437, %v2435
        %v2466 = vpack.c.bf16 %v2440, %v2438
        %v2467 = vpack.c.bf16 %v2441, %v2439
        %v2468 = vpack.c.bf16 %v2444, %v2442
        %v2469 = vpack.c.bf16 %v2445, %v2443
        %v2470 = vpack.c.bf16 %v2448, %v2446
        %v2471 = vpack.c.bf16 %v2449, %v2447
        %v2472 = vpack.c.bf16 %v2452, %v2450
        %v2473 = vpack.c.bf16 %v2453, %v2451
        %v2474 = vpack.c.bf16 %v2456, %v2454
        %v2475 = vpack.c.bf16 %v2457, %v2455
        %v2476 = vpack.c.bf16 %v2460, %v2458
        %v2477 = vpack.c.bf16 %v2461, %v2459
        %v2479 = vmul.bf16 %v2462, 1069105081
        %v2480 = vpow.bf16.pop %v2479
        %v2482 = vmul.bf16 %v2463, 1069105081
        %v2483 = vpow.bf16.pop %v2482
        %v2485 = vmul.bf16 %v2464, 1069105081
        %v2486 = vpow.bf16.pop %v2485
        %v2488 = vmul.bf16 %v2465, 1069105081
        %v2489 = vpow.bf16.pop %v2488
        %v2491 = vmul.bf16 %v2466, 1069105081
        %v2492 = vpow.bf16.pop %v2491
        %v2494 = vmul.bf16 %v2467, 1069105081
        %v2495 = vpow.bf16.pop %v2494
        %v2497 = vmul.bf16 %v2468, 1069105081
        %v2498 = vpow.bf16.pop %v2497
        %v2500 = vmul.bf16 %v2469, 1069105081
        %v2501 = vpow.bf16.pop %v2500
        %v2503 = vmul.bf16 %v2470, 1069105081
        %v2504 = vpow.bf16.pop %v2503
        %v2506 = vmul.bf16 %v2471, 1069105081
        %v2507 = vpow.bf16.pop %v2506
        %v2509 = vmul.bf16 %v2472, 1069105081
        %v2510 = vpow.bf16.pop %v2509
        %v2512 = vmul.bf16 %v2473, 1069105081
        %v2513 = vpow.bf16.pop %v2512
        %v2515 = vmul.bf16 %v2474, 1069105081
        %v2516 = vpow.bf16.pop %v2515
        %v2518 = vmul.bf16 %v2475, 1069105081
        %v2519 = vpow.bf16.pop %v2518
        %v2521 = vmul.bf16 %v2476, 1069105081
        %v2522 = vpow.bf16.pop %v2521
        %v2524 = vmul.bf16 %v2477, 1069105081
        %v2525 = vpow.bf16.pop %v2524
        %v2526 = vunpack.c.l.bf16 %v2480
        %v2527 = vunpack.c.l.bf16 %v2483
        %v2528 = vunpack.c.h.bf16 %v2480
        %v2529 = vunpack.c.h.bf16 %v2483
        %v2530 = vunpack.c.l.bf16 %v2486
        %v2531 = vunpack.c.l.bf16 %v2489
        %v2532 = vunpack.c.h.bf16 %v2486
        %v2533 = vunpack.c.h.bf16 %v2489
        %v2534 = vunpack.c.l.bf16 %v2492
        %v2535 = vunpack.c.l.bf16 %v2495
        %v2536 = vunpack.c.h.bf16 %v2492
        %v2537 = vunpack.c.h.bf16 %v2495
        %v2538 = vunpack.c.l.bf16 %v2498
        %v2539 = vunpack.c.l.bf16 %v2501
        %v2540 = vunpack.c.h.bf16 %v2498
        %v2541 = vunpack.c.h.bf16 %v2501
        %v2542 = vunpack.c.l.bf16 %v2504
        %v2543 = vunpack.c.l.bf16 %v2507
        %v2544 = vunpack.c.h.bf16 %v2504
        %v2545 = vunpack.c.h.bf16 %v2507
        %v2546 = vunpack.c.l.bf16 %v2510
        %v2547 = vunpack.c.l.bf16 %v2513
        %v2548 = vunpack.c.h.bf16 %v2510
        %v2549 = vunpack.c.h.bf16 %v2513
        %v2550 = vunpack.c.l.bf16 %v2516
        %v2551 = vunpack.c.l.bf16 %v2519
        %v2552 = vunpack.c.h.bf16 %v2516
        %v2553 = vunpack.c.h.bf16 %v2519
        %v2554 = vunpack.c.l.bf16 %v2522
        %v2555 = vunpack.c.l.bf16 %v2525
        %v2556 = vunpack.c.h.bf16 %v2522
        %v2557 = vunpack.c.h.bf16 %v2525
        %v2558 = vmul.f32 %v2526, %v2526
        %v2559 = vmul.f32 %v2527, %v2527
        %v2560 = vmul.f32 %v2528, %v2528
        %v2561 = vmul.f32 %v2529, %v2529
        %v2562 = vmul.f32 %v2530, %v2530
        %v2563 = vmul.f32 %v2531, %v2531
        %v2564 = vmul.f32 %v2532, %v2532
        %v2565 = vmul.f32 %v2533, %v2533
        %v2566 = vmul.f32 %v2534, %v2534
        %v2567 = vmul.f32 %v2535, %v2535
        %v2568 = vmul.f32 %v2536, %v2536
        %v2569 = vmul.f32 %v2537, %v2537
        %v2570 = vmul.f32 %v2538, %v2538
        %v2571 = vmul.f32 %v2539, %v2539
        %v2572 = vmul.f32 %v2540, %v2540
        %v2573 = vmul.f32 %v2541, %v2541
        %v2574 = vmul.f32 %v2542, %v2542
        %v2575 = vmul.f32 %v2543, %v2543
        %v2576 = vmul.f32 %v2544, %v2544
        %v2577 = vmul.f32 %v2545, %v2545
        %v2578 = vmul.f32 %v2546, %v2546
        %v2579 = vmul.f32 %v2547, %v2547
        %v2580 = vmul.f32 %v2548, %v2548
        %v2581 = vmul.f32 %v2549, %v2549
        %v2582 = vmul.f32 %v2550, %v2550
        %v2583 = vmul.f32 %v2551, %v2551
        %v2584 = vmul.f32 %v2552, %v2552
        %v2585 = vmul.f32 %v2553, %v2553
        %v2586 = vmul.f32 %v2554, %v2554
        %v2587 = vmul.f32 %v2555, %v2555
        %v2588 = vmul.f32 %v2556, %v2556
        %v2589 = vmul.f32 %v2557, %v2557
        %v2590 = vmul.f32 %v2526, 2.0
        %v2591 = vmul.f32 %v2527, 2.0
        %v2592 = vmul.f32 %v2528, 2.0
        %v2593 = vmul.f32 %v2529, 2.0
        %v2594 = vmul.f32 %v2530, 2.0
        %v2595 = vmul.f32 %v2531, 2.0
        %v2596 = vmul.f32 %v2532, 2.0
        %v2597 = vmul.f32 %v2533, 2.0
        %v2598 = vmul.f32 %v2534, 2.0
        %v2599 = vmul.f32 %v2535, 2.0
        %v2600 = vmul.f32 %v2536, 2.0
        %v2601 = vmul.f32 %v2537, 2.0
        %v2602 = vmul.f32 %v2538, 2.0
        %v2603 = vmul.f32 %v2539, 2.0
        %v2604 = vmul.f32 %v2540, 2.0
        %v2605 = vmul.f32 %v2541, 2.0
        %v2606 = vmul.f32 %v2542, 2.0
        %v2607 = vmul.f32 %v2543, 2.0
        %v2608 = vmul.f32 %v2544, 2.0
        %v2609 = vmul.f32 %v2545, 2.0
        %v2610 = vmul.f32 %v2546, 2.0
        %v2611 = vmul.f32 %v2547, 2.0
        %v2612 = vmul.f32 %v2548, 2.0
        %v2613 = vmul.f32 %v2549, 2.0
        %v2614 = vmul.f32 %v2550, 2.0
        %v2615 = vmul.f32 %v2551, 2.0
        %v2616 = vmul.f32 %v2552, 2.0
        %v2617 = vmul.f32 %v2553, 2.0
        %v2618 = vmul.f32 %v2554, 2.0
        %v2619 = vmul.f32 %v2555, 2.0
        %v2620 = vmul.f32 %v2556, 2.0
        %v2621 = vmul.f32 %v2557, 2.0
        %vm2622 = vcmp.ge.f32.partialorder %v2366, 0.0
        %vm2623 = vcmp.ge.f32.partialorder %v2367, 0.0
        %vm2624 = vcmp.ge.f32.partialorder %v2368, 0.0
        %vm2625 = vcmp.ge.f32.partialorder %v2369, 0.0
        %vm2626 = vcmp.ge.f32.partialorder %v2370, 0.0
        %vm2627 = vcmp.ge.f32.partialorder %v2371, 0.0
        %vm2628 = vcmp.ge.f32.partialorder %v2372, 0.0
        %vm2629 = vcmp.ge.f32.partialorder %v2373, 0.0
        %vm2630 = vcmp.ge.f32.partialorder %v2374, 0.0
        %vm2631 = vcmp.ge.f32.partialorder %v2375, 0.0
        %vm2632 = vcmp.ge.f32.partialorder %v2376, 0.0
        %vm2633 = vcmp.ge.f32.partialorder %v2377, 0.0
        %vm2634 = vcmp.ge.f32.partialorder %v2378, 0.0
        %vm2635 = vcmp.ge.f32.partialorder %v2379, 0.0
        %vm2636 = vcmp.ge.f32.partialorder %v2380, 0.0
        %vm2637 = vcmp.ge.f32.partialorder %v2381, 0.0
        %vm2638 = vcmp.ge.f32.partialorder %v2382, 0.0
        %vm2639 = vcmp.ge.f32.partialorder %v2383, 0.0
        %vm2640 = vcmp.ge.f32.partialorder %v2384, 0.0
        %vm2641 = vcmp.ge.f32.partialorder %v2385, 0.0
        %vm2642 = vcmp.ge.f32.partialorder %v2386, 0.0
        %vm2643 = vcmp.ge.f32.partialorder %v2387, 0.0
        %vm2644 = vcmp.ge.f32.partialorder %v2388, 0.0
        %vm2645 = vcmp.ge.f32.partialorder %v2389, 0.0
        %vm2646 = vcmp.ge.f32.partialorder %v2390, 0.0
        %vm2647 = vcmp.ge.f32.partialorder %v2391, 0.0
        %vm2648 = vcmp.ge.f32.partialorder %v2392, 0.0
        %vm2649 = vcmp.ge.f32.partialorder %v2393, 0.0
        %vm2650 = vcmp.ge.f32.partialorder %v2394, 0.0
        %vm2651 = vcmp.ge.f32.partialorder %v2395, 0.0
        %vm2652 = vcmp.ge.f32.partialorder %v2396, 0.0
        %vm2653 = vcmp.ge.f32.partialorder %v2397, 0.0
        %v2654 = vadd.f32 %v2590, 1.0
        %v2655 = vadd.f32 %v2591, 1.0
        %v2656 = vadd.f32 %v2592, 1.0
        %v2657 = vadd.f32 %v2593, 1.0
        %v2658 = vadd.f32 %v2594, 1.0
        %v2659 = vadd.f32 %v2595, 1.0
        %v2660 = vadd.f32 %v2596, 1.0
        %v2661 = vadd.f32 %v2597, 1.0
        %v2662 = vadd.f32 %v2598, 1.0
        %v2663 = vadd.f32 %v2599, 1.0
        %v2664 = vadd.f32 %v2600, 1.0
        %v2665 = vadd.f32 %v2601, 1.0
        %v2666 = vadd.f32 %v2602, 1.0
        %v2667 = vadd.f32 %v2603, 1.0
        %v2668 = vadd.f32 %v2604, 1.0
        %v2669 = vadd.f32 %v2605, 1.0
        %v2670 = vadd.f32 %v2606, 1.0
        %v2671 = vadd.f32 %v2607, 1.0
        %v2672 = vadd.f32 %v2608, 1.0
        %v2673 = vadd.f32 %v2609, 1.0
        %v2674 = vadd.f32 %v2610, 1.0
        %v2675 = vadd.f32 %v2611, 1.0
        %v2676 = vadd.f32 %v2612, 1.0
        %v2677 = vadd.f32 %v2613, 1.0
        %v2678 = vadd.f32 %v2614, 1.0
        %v2679 = vadd.f32 %v2615, 1.0
        %v2680 = vadd.f32 %v2616, 1.0
        %v2681 = vadd.f32 %v2617, 1.0
        %v2682 = vadd.f32 %v2618, 1.0
        %v2683 = vadd.f32 %v2619, 1.0
        %v2684 = vadd.f32 %v2620, 1.0
        %v2685 = vadd.f32 %v2621, 1.0
        %v2686 = vadd.f32 %v2558, %v2590
        %v2687 = vadd.f32 %v2559, %v2591
        %v2688 = vadd.f32 %v2560, %v2592
        %v2689 = vadd.f32 %v2561, %v2593
        %v2690 = vadd.f32 %v2562, %v2594
        %v2691 = vadd.f32 %v2563, %v2595
        %v2692 = vadd.f32 %v2564, %v2596
        %v2693 = vadd.f32 %v2565, %v2597
        %v2694 = vadd.f32 %v2566, %v2598
        %v2695 = vadd.f32 %v2567, %v2599
        %v2696 = vadd.f32 %v2568, %v2600
        %v2697 = vadd.f32 %v2569, %v2601
        %v2698 = vadd.f32 %v2570, %v2602
        %v2699 = vadd.f32 %v2571, %v2603
        %v2700 = vadd.f32 %v2572, %v2604
        %v2701 = vadd.f32 %v2573, %v2605
        %v2702 = vadd.f32 %v2574, %v2606
        %v2703 = vadd.f32 %v2575, %v2607
        %v2704 = vadd.f32 %v2576, %v2608
        %v2705 = vadd.f32 %v2577, %v2609
        %v2706 = vadd.f32 %v2578, %v2610
        %v2707 = vadd.f32 %v2579, %v2611
        %v2708 = vadd.f32 %v2580, %v2612
        %v2709 = vadd.f32 %v2581, %v2613
        %v2710 = vadd.f32 %v2582, %v2614
        %v2711 = vadd.f32 %v2583, %v2615
        %v2712 = vadd.f32 %v2584, %v2616
        %v2713 = vadd.f32 %v2585, %v2617
        %v2714 = vadd.f32 %v2586, %v2618
        %v2715 = vadd.f32 %v2587, %v2619
        %v2716 = vadd.f32 %v2588, %v2620
        %v2717 = vadd.f32 %v2589, %v2621
        %v2718 = vsel %vm2622, %v2654, %v2686
        %v2719 = vsel %vm2623, %v2655, %v2687
        %v2720 = vsel %vm2624, %v2656, %v2688
        %v2721 = vsel %vm2625, %v2657, %v2689
        %v2722 = vsel %vm2626, %v2658, %v2690
        %v2723 = vsel %vm2627, %v2659, %v2691
        %v2724 = vsel %vm2628, %v2660, %v2692
        %v2725 = vsel %vm2629, %v2661, %v2693
        %v2726 = vsel %vm2630, %v2662, %v2694
        %v2727 = vsel %vm2631, %v2663, %v2695
        %v2728 = vsel %vm2632, %v2664, %v2696
        %v2729 = vsel %vm2633, %v2665, %v2697
        %v2730 = vsel %vm2634, %v2666, %v2698
        %v2731 = vsel %vm2635, %v2667, %v2699
        %v2732 = vsel %vm2636, %v2668, %v2700
        %v2733 = vsel %vm2637, %v2669, %v2701
        %v2734 = vsel %vm2638, %v2670, %v2702
        %v2735 = vsel %vm2639, %v2671, %v2703
        %v2736 = vsel %vm2640, %v2672, %v2704
        %v2737 = vsel %vm2641, %v2673, %v2705
        %v2738 = vsel %vm2642, %v2674, %v2706
        %v2739 = vsel %vm2643, %v2675, %v2707
        %v2740 = vsel %vm2644, %v2676, %v2708
        %v2741 = vsel %vm2645, %v2677, %v2709
        %v2742 = vsel %vm2646, %v2678, %v2710
        %v2743 = vsel %vm2647, %v2679, %v2711
        %v2744 = vsel %vm2648, %v2680, %v2712
        %v2745 = vsel %vm2649, %v2681, %v2713
        %v2746 = vsel %vm2650, %v2682, %v2714
        %v2747 = vsel %vm2651, %v2683, %v2715
        %v2748 = vsel %vm2652, %v2684, %v2716
        %v2749 = vsel %vm2653, %v2685, %v2717
        %v2750 = vmul.f32 %v2558, 2.0
        %v2751 = vmul.f32 %v2559, 2.0
        %v2752 = vmul.f32 %v2560, 2.0
        %v2753 = vmul.f32 %v2561, 2.0
        %v2754 = vmul.f32 %v2562, 2.0
        %v2755 = vmul.f32 %v2563, 2.0
        %v2756 = vmul.f32 %v2564, 2.0
        %v2757 = vmul.f32 %v2565, 2.0
        %v2758 = vmul.f32 %v2566, 2.0
        %v2759 = vmul.f32 %v2567, 2.0
        %v2760 = vmul.f32 %v2568, 2.0
        %v2761 = vmul.f32 %v2569, 2.0
        %v2762 = vmul.f32 %v2570, 2.0
        %v2763 = vmul.f32 %v2571, 2.0
        %v2764 = vmul.f32 %v2572, 2.0
        %v2765 = vmul.f32 %v2573, 2.0
        %v2766 = vmul.f32 %v2574, 2.0
        %v2767 = vmul.f32 %v2575, 2.0
        %v2768 = vmul.f32 %v2576, 2.0
        %v2769 = vmul.f32 %v2577, 2.0
        %v2770 = vmul.f32 %v2578, 2.0
        %v2771 = vmul.f32 %v2579, 2.0
        %v2772 = vmul.f32 %v2580, 2.0
        %v2773 = vmul.f32 %v2581, 2.0
        %v2774 = vmul.f32 %v2582, 2.0
        %v2775 = vmul.f32 %v2583, 2.0
        %v2776 = vmul.f32 %v2584, 2.0
        %v2777 = vmul.f32 %v2585, 2.0
        %v2778 = vmul.f32 %v2586, 2.0
        %v2779 = vmul.f32 %v2587, 2.0
        %v2780 = vmul.f32 %v2588, 2.0
        %v2781 = vmul.f32 %v2589, 2.0
        %v2782 = vadd.f32 %v2654, %v2750
        %v2783 = vadd.f32 %v2655, %v2751
        %v2784 = vadd.f32 %v2656, %v2752
        %v2785 = vadd.f32 %v2657, %v2753
        %v2786 = vadd.f32 %v2658, %v2754
        %v2787 = vadd.f32 %v2659, %v2755
        %v2788 = vadd.f32 %v2660, %v2756
        %v2789 = vadd.f32 %v2661, %v2757
        %v2790 = vadd.f32 %v2662, %v2758
        %v2791 = vadd.f32 %v2663, %v2759
        %v2792 = vadd.f32 %v2664, %v2760
        %v2793 = vadd.f32 %v2665, %v2761
        %v2794 = vadd.f32 %v2666, %v2762
        %v2795 = vadd.f32 %v2667, %v2763
        %v2796 = vadd.f32 %v2668, %v2764
        %v2797 = vadd.f32 %v2669, %v2765
        %v2798 = vadd.f32 %v2670, %v2766
        %v2799 = vadd.f32 %v2671, %v2767
        %v2800 = vadd.f32 %v2672, %v2768
        %v2801 = vadd.f32 %v2673, %v2769
        %v2802 = vadd.f32 %v2674, %v2770
        %v2803 = vadd.f32 %v2675, %v2771
        %v2804 = vadd.f32 %v2676, %v2772
        %v2805 = vadd.f32 %v2677, %v2773
        %v2806 = vadd.f32 %v2678, %v2774
        %v2807 = vadd.f32 %v2679, %v2775
        %v2808 = vadd.f32 %v2680, %v2776
        %v2809 = vadd.f32 %v2681, %v2777
        %v2810 = vadd.f32 %v2682, %v2778
        %v2811 = vadd.f32 %v2683, %v2779
        %v2812 = vadd.f32 %v2684, %v2780
        %v2813 = vadd.f32 %v2685, %v2781
        %v2814 = vadd.f32 %v2686, 2.0
        %v2815 = vadd.f32 %v2687, 2.0
        %v2816 = vadd.f32 %v2688, 2.0
        %v2817 = vadd.f32 %v2689, 2.0
        %v2818 = vadd.f32 %v2690, 2.0
        %v2819 = vadd.f32 %v2691, 2.0
        %v2820 = vadd.f32 %v2692, 2.0
        %v2821 = vadd.f32 %v2693, 2.0
        %v2822 = vadd.f32 %v2694, 2.0
        %v2823 = vadd.f32 %v2695, 2.0
        %v2824 = vadd.f32 %v2696, 2.0
        %v2825 = vadd.f32 %v2697, 2.0
        %v2826 = vadd.f32 %v2698, 2.0
        %v2827 = vadd.f32 %v2699, 2.0
        %v2828 = vadd.f32 %v2700, 2.0
        %v2829 = vadd.f32 %v2701, 2.0
        %v2830 = vadd.f32 %v2702, 2.0
        %v2831 = vadd.f32 %v2703, 2.0
        %v2832 = vadd.f32 %v2704, 2.0
        %v2833 = vadd.f32 %v2705, 2.0
        %v2834 = vadd.f32 %v2706, 2.0
        %v2835 = vadd.f32 %v2707, 2.0
        %v2836 = vadd.f32 %v2708, 2.0
        %v2837 = vadd.f32 %v2709, 2.0
        %v2838 = vadd.f32 %v2710, 2.0
        %v2839 = vadd.f32 %v2711, 2.0
        %v2840 = vadd.f32 %v2712, 2.0
        %v2841 = vadd.f32 %v2713, 2.0
        %v2842 = vadd.f32 %v2714, 2.0
        %v2843 = vadd.f32 %v2715, 2.0
        %v2844 = vadd.f32 %v2716, 2.0
        %v2845 = vadd.f32 %v2717, 2.0
        %v2846 = vsel %vm2622, %v2782, %v2814
        %v2847 = vsel %vm2623, %v2783, %v2815
        %v2848 = vsel %vm2624, %v2784, %v2816
        %v2849 = vsel %vm2625, %v2785, %v2817
        %v2850 = vsel %vm2626, %v2786, %v2818
        %v2851 = vsel %vm2627, %v2787, %v2819
        %v2852 = vsel %vm2628, %v2788, %v2820
        %v2853 = vsel %vm2629, %v2789, %v2821
        %v2854 = vsel %vm2630, %v2790, %v2822
        %v2855 = vsel %vm2631, %v2791, %v2823
        %v2856 = vsel %vm2632, %v2792, %v2824
        %v2857 = vsel %vm2633, %v2793, %v2825
        %v2858 = vsel %vm2634, %v2794, %v2826
        %v2859 = vsel %vm2635, %v2795, %v2827
        %v2860 = vsel %vm2636, %v2796, %v2828
        %v2861 = vsel %vm2637, %v2797, %v2829
        %v2862 = vsel %vm2638, %v2798, %v2830
        %v2863 = vsel %vm2639, %v2799, %v2831
        %v2864 = vsel %vm2640, %v2800, %v2832
        %v2865 = vsel %vm2641, %v2801, %v2833
        %v2866 = vsel %vm2642, %v2802, %v2834
        %v2867 = vsel %vm2643, %v2803, %v2835
        %v2868 = vsel %vm2644, %v2804, %v2836
        %v2869 = vsel %vm2645, %v2805, %v2837
        %v2870 = vsel %vm2646, %v2806, %v2838
        %v2871 = vsel %vm2647, %v2807, %v2839
        %v2872 = vsel %vm2648, %v2808, %v2840
        %v2873 = vsel %vm2649, %v2809, %v2841
        %v2874 = vsel %vm2650, %v2810, %v2842
        %v2875 = vsel %vm2651, %v2811, %v2843
        %v2876 = vsel %vm2652, %v2812, %v2844
        %v2877 = vsel %vm2653, %v2813, %v2845
        %v2878 = vmul.f32 %v2366, %v2718
        %v2879 = vmul.f32 %v2367, %v2719
        %v2880 = vmul.f32 %v2368, %v2720
        %v2881 = vmul.f32 %v2369, %v2721
        %v2882 = vmul.f32 %v2370, %v2722
        %v2883 = vmul.f32 %v2371, %v2723
        %v2884 = vmul.f32 %v2372, %v2724
        %v2885 = vmul.f32 %v2373, %v2725
        %v2886 = vmul.f32 %v2374, %v2726
        %v2887 = vmul.f32 %v2375, %v2727
        %v2888 = vmul.f32 %v2376, %v2728
        %v2889 = vmul.f32 %v2377, %v2729
        %v2890 = vmul.f32 %v2378, %v2730
        %v2891 = vmul.f32 %v2379, %v2731
        %v2892 = vmul.f32 %v2380, %v2732
        %v2893 = vmul.f32 %v2381, %v2733
        %v2894 = vmul.f32 %v2382, %v2734
        %v2895 = vmul.f32 %v2383, %v2735
        %v2896 = vmul.f32 %v2384, %v2736
        %v2897 = vmul.f32 %v2385, %v2737
        %v2898 = vmul.f32 %v2386, %v2738
        %v2899 = vmul.f32 %v2387, %v2739
        %v2900 = vmul.f32 %v2388, %v2740
        %v2901 = vmul.f32 %v2389, %v2741
        %v2902 = vmul.f32 %v2390, %v2742
        %v2903 = vmul.f32 %v2391, %v2743
        %v2904 = vmul.f32 %v2392, %v2744
        %v2905 = vmul.f32 %v2393, %v2745
        %v2906 = vmul.f32 %v2394, %v2746
        %v2907 = vmul.f32 %v2395, %v2747
        %v2908 = vmul.f32 %v2396, %v2748
        %v2909 = vmul.f32 %v2397, %v2749
        %v2910 = vrcp.pop %v2846
        %v2911 = vrcp.pop %v2847
        %v2912 = vrcp.pop %v2848
        %v2913 = vrcp.pop %v2849
        %v2914 = vrcp.pop %v2850
        %v2915 = vrcp.pop %v2851
        %v2916 = vrcp.pop %v2852
        %v2917 = vrcp.pop %v2853
        %v2918 = vrcp.pop %v2854
        %v2919 = vrcp.pop %v2855
        %v2920 = vrcp.pop %v2856
        %v2921 = vrcp.pop %v2857
        %v2922 = vrcp.pop %v2858
        %v2923 = vrcp.pop %v2859
        %v2924 = vrcp.pop %v2860
        %v2925 = vrcp.pop %v2861
        %v2926 = vrcp.pop %v2862
        %v2927 = vrcp.pop %v2863
        %v2928 = vrcp.pop %v2864
        %v2929 = vrcp.pop %v2865
        %v2930 = vrcp.pop %v2866
        %v2931 = vrcp.pop %v2867
        %v2932 = vrcp.pop %v2868
        %v2933 = vrcp.pop %v2869
        %v2934 = vrcp.pop %v2870
        %v2935 = vrcp.pop %v2871
        %v2936 = vrcp.pop %v2872
        %v2937 = vrcp.pop %v2873
        %v2938 = vrcp.pop %v2874
        %v2939 = vrcp.pop %v2875
        %v2940 = vrcp.pop %v2876
        %v2941 = vrcp.pop %v2877
        %v2942 = vmul.f32 %v2878, %v2910
        %v2943 = vmul.f32 %v2879, %v2911
        %v2944 = vmul.f32 %v2880, %v2912
        %v2945 = vmul.f32 %v2881, %v2913
        %v2946 = vmul.f32 %v2882, %v2914
        %v2947 = vmul.f32 %v2883, %v2915
        %v2948 = vmul.f32 %v2884, %v2916
        %v2949 = vmul.f32 %v2885, %v2917
        %v2950 = vmul.f32 %v2886, %v2918
        %v2951 = vmul.f32 %v2887, %v2919
        %v2952 = vmul.f32 %v2888, %v2920
        %v2953 = vmul.f32 %v2889, %v2921
        %v2954 = vmul.f32 %v2890, %v2922
        %v2955 = vmul.f32 %v2891, %v2923
        %v2956 = vmul.f32 %v2892, %v2924
        %v2957 = vmul.f32 %v2893, %v2925
        %v2958 = vmul.f32 %v2894, %v2926
        %v2959 = vmul.f32 %v2895, %v2927
        %v2960 = vmul.f32 %v2896, %v2928
        %v2961 = vmul.f32 %v2897, %v2929
        %v2962 = vmul.f32 %v2898, %v2930
        %v2963 = vmul.f32 %v2899, %v2931
        %v2964 = vmul.f32 %v2900, %v2932
        %v2965 = vmul.f32 %v2901, %v2933
        %v2966 = vmul.f32 %v2902, %v2934
        %v2967 = vmul.f32 %v2903, %v2935
        %v2968 = vmul.f32 %v2904, %v2936
        %v2969 = vmul.f32 %v2905, %v2937
        %v2970 = vmul.f32 %v2906, %v2938
        %v2971 = vmul.f32 %v2907, %v2939
        %v2972 = vmul.f32 %v2908, %v2940
        %v2973 = vmul.f32 %v2909, %v2941
        %v2974 = vpack.c.bf16 %v2944, %v2942
        %v2975 = vpack.c.bf16 %v2945, %v2943
        %v2976 = vpack.c.bf16 %v2948, %v2946
        %v2977 = vpack.c.bf16 %v2949, %v2947
        %v2978 = vpack.c.bf16 %v2952, %v2950
        %v2979 = vpack.c.bf16 %v2953, %v2951
        %v2980 = vpack.c.bf16 %v2956, %v2954
        %v2981 = vpack.c.bf16 %v2957, %v2955
        %v2982 = vpack.c.bf16 %v2960, %v2958
        %v2983 = vpack.c.bf16 %v2961, %v2959
        %v2984 = vpack.c.bf16 %v2964, %v2962
        %v2985 = vpack.c.bf16 %v2965, %v2963
        %v2986 = vpack.c.bf16 %v2968, %v2966
        %v2987 = vpack.c.bf16 %v2969, %v2967
        %v2988 = vpack.c.bf16 %v2972, %v2970
        %v2989 = vpack.c.bf16 %v2973, %v2971
        %v2990 = vld [vmem:[%s11] sm:$0xff]
        %v2991 = vld [vmem:[%s11 + $0x8] sm:$0xff]
        %v2992 = vld [vmem:[%s11 + $0x10] sm:$0xff]
        %v2993 = vld [vmem:[%s11 + $0x18] sm:$0xff]
        %v2994 = vld [vmem:[%s11 + $0x20] sm:$0xff]
        %v2995 = vld [vmem:[%s11 + $0x28] sm:$0xff]
        %v2996 = vld [vmem:[%s11 + $0x30] sm:$0xff]
        %v2997 = vld [vmem:[%s11 + $0x38] sm:$0xff]
        %v2998 = vld [vmem:[%s11 + $0x40] sm:$0xff]
        %v2999 = vld [vmem:[%s11 + $0x48] sm:$0xff]
        %v3000 = vld [vmem:[%s11 + $0x50] sm:$0xff]
        %v3001 = vld [vmem:[%s11 + $0x58] sm:$0xff]
        %v3002 = vld [vmem:[%s11 + $0x60] sm:$0xff]
        %v3003 = vld [vmem:[%s11 + $0x68] sm:$0xff]
        %v3004 = vld [vmem:[%s11 + $0x70] sm:$0xff]
        %v3005 = vld [vmem:[%s11 + $0x78] sm:$0xff]
        %v3006 = vld [vmem:[%s11 + $0x80] sm:$0xff]
        %v3007 = vld [vmem:[%s11 + $0x88] sm:$0xff]
        %v3008 = vld [vmem:[%s11 + $0x90] sm:$0xff]
        %v3009 = vld [vmem:[%s11 + $0x98] sm:$0xff]
        %v3010 = vld [vmem:[%s11 + $0xa0] sm:$0xff]
        %v3011 = vld [vmem:[%s11 + $0xa8] sm:$0xff]
        %v3012 = vld [vmem:[%s11 + $0xb0] sm:$0xff]
        %v3013 = vld [vmem:[%s11 + $0xb8] sm:$0xff]
        %v3014 = vld [vmem:[%s11 + $0xc0] sm:$0xff]
        %v3015 = vld [vmem:[%s11 + $0xc8] sm:$0xff]
        %v3016 = vld [vmem:[%s11 + $0xd0] sm:$0xff]
        %v3017 = vld [vmem:[%s11 + $0xd8] sm:$0xff]
        %v3018 = vld [vmem:[%s11 + $0xe0] sm:$0xff]
        %v3019 = vld [vmem:[%s11 + $0xe8] sm:$0xff]
        %v3020 = vld [vmem:[%s11 + $0xf0] sm:$0xff]
        %v3021 = vld [vmem:[%s11 + $0xf8] sm:$0xff]
        %v3022 = vlaneseq
        %v3023 = vshrl.u32 %v3022, 7
        %v3024 = vsub.s32 3, %v3023
        %v3025 = vrot.slane %v792, %v3024
        %v3026 = vlaneseq
        %v3027 = vshrl.u32 %v3026, 7
        %v3028 = vsub.s32 7, %v3027
        %v3029 = vrot.slane %v792, %v3028
        %v3032 = vlaneseq
        %v3033 = vshrl.u32 %v3032, 7
        %v3034 = vsub.s32 3, %v3033
        %v3035 = vrot.slane %v3025, %v3034
        %v3036 = vlaneseq
        %v3037 = vshrl.u32 %v3036, 7
        %v3038 = vsub.s32 3, %v3037
        %v3039 = vrot.slane %v3029, %v3038
        %v3072 = vunpack.c.l.b16 %v2990
        %v3073 = vunpack.c.h.b16 %v2990
        %v3074 = vunpack.c.l.b16 %v2991
        %v3075 = vunpack.c.h.b16 %v2991
        %v3076 = vunpack.c.l.b16 %v2992
        %v3077 = vunpack.c.h.b16 %v2992
        %v3078 = vunpack.c.l.b16 %v2993
        %v3079 = vunpack.c.h.b16 %v2993
        %v3080 = vunpack.c.l.b16 %v2994
        %v3081 = vunpack.c.h.b16 %v2994
        %v3082 = vunpack.c.l.b16 %v2995
        %v3083 = vunpack.c.h.b16 %v2995
        %v3084 = vunpack.c.l.b16 %v2996
        %v3085 = vunpack.c.h.b16 %v2996
        %v3086 = vunpack.c.l.b16 %v2997
        %v3087 = vunpack.c.h.b16 %v2997
        %v3088 = vunpack.c.l.b16 %v2998
        %v3089 = vunpack.c.h.b16 %v2998
        %v3090 = vunpack.c.l.b16 %v2999
        %v3091 = vunpack.c.h.b16 %v2999
        %v3092 = vunpack.c.l.b16 %v3000
        %v3093 = vunpack.c.h.b16 %v3000
        %v3094 = vunpack.c.l.b16 %v3001
        %v3095 = vunpack.c.h.b16 %v3001
        %v3096 = vunpack.c.l.b16 %v3002
        %v3097 = vunpack.c.h.b16 %v3002
        %v3098 = vunpack.c.l.b16 %v3003
        %v3099 = vunpack.c.h.b16 %v3003
        %v3100 = vunpack.c.l.b16 %v3004
        %v3101 = vunpack.c.h.b16 %v3004
        %v3102 = vunpack.c.l.b16 %v3005
        %v3103 = vunpack.c.h.b16 %v3005
        %v3104 = vunpack.c.l.b16 %v3006
        %v3105 = vunpack.c.h.b16 %v3006
        %v3106 = vunpack.c.l.b16 %v3007
        %v3107 = vunpack.c.h.b16 %v3007
        %v3108 = vunpack.c.l.b16 %v3008
        %v3109 = vunpack.c.h.b16 %v3008
        %v3110 = vunpack.c.l.b16 %v3009
        %v3111 = vunpack.c.h.b16 %v3009
        %v3112 = vunpack.c.l.b16 %v3010
        %v3113 = vunpack.c.h.b16 %v3010
        %v3114 = vunpack.c.l.b16 %v3011
        %v3115 = vunpack.c.h.b16 %v3011
        %v3116 = vunpack.c.l.b16 %v3012
        %v3117 = vunpack.c.h.b16 %v3012
        %v3118 = vunpack.c.l.b16 %v3013
        %v3119 = vunpack.c.h.b16 %v3013
        %v3120 = vunpack.c.l.b16 %v3014
        %v3121 = vunpack.c.h.b16 %v3014
        %v3122 = vunpack.c.l.b16 %v3015
        %v3123 = vunpack.c.h.b16 %v3015
        %v3124 = vunpack.c.l.b16 %v3016
        %v3125 = vunpack.c.h.b16 %v3016
        %v3126 = vunpack.c.l.b16 %v3017
        %v3127 = vunpack.c.h.b16 %v3017
        %v3128 = vunpack.c.l.b16 %v3018
        %v3129 = vunpack.c.h.b16 %v3018
        %v3130 = vunpack.c.l.b16 %v3019
        %v3131 = vunpack.c.h.b16 %v3019
        %v3132 = vunpack.c.l.b16 %v3020
        %v3133 = vunpack.c.h.b16 %v3020
        %v3134 = vunpack.c.l.b16 %v3021
        %v3135 = vunpack.c.h.b16 %v3021
        %v3136 = vpack.c.b16 %v3074, %v3072
        %v3137 = vpack.c.b16 %v3075, %v3073
        %v3138 = vpack.c.b16 %v3078, %v3076
        %v3139 = vpack.c.b16 %v3079, %v3077
        %v3140 = vpack.c.b16 %v3082, %v3080
        %v3141 = vpack.c.b16 %v3083, %v3081
        %v3142 = vpack.c.b16 %v3086, %v3084
        %v3143 = vpack.c.b16 %v3087, %v3085
        %v3144 = vpack.c.b16 %v3090, %v3088
        %v3145 = vpack.c.b16 %v3091, %v3089
        %v3146 = vpack.c.b16 %v3094, %v3092
        %v3147 = vpack.c.b16 %v3095, %v3093
        %v3148 = vpack.c.b16 %v3098, %v3096
        %v3149 = vpack.c.b16 %v3099, %v3097
        %v3150 = vpack.c.b16 %v3102, %v3100
        %v3151 = vpack.c.b16 %v3103, %v3101
        %v3152 = vpack.c.b16 %v3106, %v3104
        %v3153 = vpack.c.b16 %v3107, %v3105
        %v3154 = vpack.c.b16 %v3110, %v3108
        %v3155 = vpack.c.b16 %v3111, %v3109
        %v3156 = vpack.c.b16 %v3114, %v3112
        %v3157 = vpack.c.b16 %v3115, %v3113
        %v3158 = vpack.c.b16 %v3118, %v3116
        %v3159 = vpack.c.b16 %v3119, %v3117
        %v3160 = vpack.c.b16 %v3122, %v3120
        %v3161 = vpack.c.b16 %v3123, %v3121
        %v3162 = vpack.c.b16 %v3126, %v3124
        %v3163 = vpack.c.b16 %v3127, %v3125
        %v3164 = vpack.c.b16 %v3130, %v3128
        %v3165 = vpack.c.b16 %v3131, %v3129
        %v3166 = vpack.c.b16 %v3134, %v3132
        %v3167 = vpack.c.b16 %v3135, %v3133
        %3200 = vmatprep.subr.bf16.mxu0 %v3137
        %3201 = vmatpush1.bf16.msra.mxu0 %v3136
        %3202 = vmatprep.subr.bf16.mxu0 %v3139
        %3203 = vmatpush1.bf16.msra.mxu0 %v3138
        %3204 = vmatprep.subr.bf16.mxu0 %v3141
        %3205 = vmatpush1.bf16.msra.mxu0 %v3140
        %3206 = vmatprep.subr.bf16.mxu0 %v3143
        %3207 = vmatpush1.bf16.msra.mxu0 %v3142
        %3208 = vmatprep.subr.bf16.mxu0 %v3145
        %3209 = vmatpush1.bf16.msra.mxu0 %v3144
        %3210 = vmatprep.subr.bf16.mxu0 %v3147
        %3211 = vmatpush1.bf16.msra.mxu0 %v3146
        %3212 = vmatprep.subr.bf16.mxu0 %v3149
        %3213 = vmatpush1.bf16.msra.mxu0 %v3148
        %3214 = vmatprep.subr.bf16.mxu0 %v3151
        %3215 = vmatpush1.bf16.msra.mxu0 %v3150
        %3216 = vmatprep.subr.bf16.mxu0 %v3153
        %3217 = vmatpush1.bf16.msra.mxu0 %v3152
        %3218 = vmatprep.subr.bf16.mxu0 %v3155
        %3219 = vmatpush1.bf16.msra.mxu0 %v3154
        %3220 = vmatprep.subr.bf16.mxu0 %v3157
        %3221 = vmatpush1.bf16.msra.mxu0 %v3156
        %3222 = vmatprep.subr.bf16.mxu0 %v3159
        %3223 = vmatpush1.bf16.msra.mxu0 %v3158
        %3224 = vmatprep.subr.bf16.mxu0 %v3161
        %3225 = vmatpush1.bf16.msra.mxu0 %v3160
        %3226 = vmatprep.subr.bf16.mxu0 %v3163
        %3227 = vmatpush1.bf16.msra.mxu0 %v3162
        %3228 = vmatprep.subr.bf16.mxu0 %v3165
        %3229 = vmatpush1.bf16.msra.mxu0 %v3164
        %3230 = vmatprep.subr.bf16.mxu0 %v3167
        %3231 = vmatpush1.bf16.msra.mxu0 %v3166
        %3232 = vmatprep.mubr.bf16.mxu0 %v2975
        %3233 = vmatmul.mubr.bf16.gmra.mrb[0].mxu0 %v2974
        %v3234 = vpop.f32.mrb[0].mxu0
        %v3235 = vadd.f32 %v3035, %v3234
        %v3236 = vpop.f32.mrb[0].mxu0
        %v3237 = vadd.f32 %v3039, %v3236
        %v3238 = vpop.f32.mrb[0].mxu0
        %v3239 = vadd.f32 %v3035, %v3238
        %v3240 = vpop.f32.mrb[0].mxu0
        %v3241 = vadd.f32 %v3039, %v3240
        %3242 = vmatprep.mubr.bf16.mxu0 %v2977
        %3243 = vmatmul.mubr.bf16.gmra.mrb[0].mxu0 %v2976
        %v3244 = vpop.f32.mrb[0].mxu0
        %v3245 = vadd.f32 %v3035, %v3244
        %v3246 = vpop.f32.mrb[0].mxu0
        %v3247 = vadd.f32 %v3039, %v3246
        %v3248 = vpop.f32.mrb[0].mxu0
        %v3249 = vadd.f32 %v3035, %v3248
        %v3250 = vpop.f32.mrb[0].mxu0
        %v3251 = vadd.f32 %v3039, %v3250
        %3252 = vmatprep.mubr.bf16.mxu0 %v2979
        %3253 = vmatmul.mubr.bf16.gmra.mrb[0].mxu0 %v2978
        %v3254 = vpop.f32.mrb[0].mxu0
        %v3255 = vadd.f32 %v3035, %v3254
        %v3256 = vpop.f32.mrb[0].mxu0
        %v3257 = vadd.f32 %v3039, %v3256
        %v3258 = vpop.f32.mrb[0].mxu0
        %v3259 = vadd.f32 %v3035, %v3258
        %v3260 = vpop.f32.mrb[0].mxu0
        %v3261 = vadd.f32 %v3039, %v3260
        %3262 = vmatprep.mubr.bf16.mxu0 %v2981
        %3263 = vmatmul.mubr.bf16.gmra.mrb[0].mxu0 %v2980
        %v3264 = vpop.f32.mrb[0].mxu0
        %v3265 = vadd.f32 %v3035, %v3264
        %v3266 = vpop.f32.mrb[0].mxu0
        %v3267 = vadd.f32 %v3039, %v3266
        %v3268 = vpop.f32.mrb[0].mxu0
        %v3269 = vadd.f32 %v3035, %v3268
        %v3270 = vpop.f32.mrb[0].mxu0
        %v3271 = vadd.f32 %v3039, %v3270
        %3272 = vmatprep.mubr.bf16.mxu0 %v2983
        %3273 = vmatmul.mubr.bf16.gmra.mrb[0].mxu0 %v2982
        %v3274 = vpop.f32.mrb[0].mxu0
        %v3275 = vadd.f32 %v3035, %v3274
        %v3276 = vpop.f32.mrb[0].mxu0
        %v3277 = vadd.f32 %v3039, %v3276
        %v3278 = vpop.f32.mrb[0].mxu0
        %v3279 = vadd.f32 %v3035, %v3278
        %v3280 = vpop.f32.mrb[0].mxu0
        %v3281 = vadd.f32 %v3039, %v3280
        %3282 = vmatprep.mubr.bf16.mxu0 %v2985
        %3283 = vmatmul.mubr.bf16.gmra.mrb[0].mxu0 %v2984
        %v3284 = vpop.f32.mrb[0].mxu0
        %v3285 = vadd.f32 %v3035, %v3284
        %v3286 = vpop.f32.mrb[0].mxu0
        %v3287 = vadd.f32 %v3039, %v3286
        %v3288 = vpop.f32.mrb[0].mxu0
        %v3289 = vadd.f32 %v3035, %v3288
        %v3290 = vpop.f32.mrb[0].mxu0
        %v3291 = vadd.f32 %v3039, %v3290
        %3292 = vmatprep.mubr.bf16.mxu0 %v2987
        %3293 = vmatmul.mubr.bf16.gmra.mrb[0].mxu0 %v2986
        %v3294 = vpop.f32.mrb[0].mxu0
        %v3295 = vadd.f32 %v3035, %v3294
        %v3296 = vpop.f32.mrb[0].mxu0
        %v3297 = vadd.f32 %v3039, %v3296
        %v3298 = vpop.f32.mrb[0].mxu0
        %v3299 = vadd.f32 %v3035, %v3298
        %v3300 = vpop.f32.mrb[0].mxu0
        %v3301 = vadd.f32 %v3039, %v3300
        %3302 = vmatprep.mubr.bf16.mxu0 %v2989
        %3303 = vmatmul.mubr.bf16.gmra.mrb[0].mxu0 %v2988
        %v3304 = vpop.f32.mrb[0].mxu0
        %v3305 = vadd.f32 %v3035, %v3304
        %v3306 = vpop.f32.mrb[0].mxu0
        %v3307 = vadd.f32 %v3039, %v3306
        %v3308 = vpop.f32.mrb[0].mxu0
        %v3309 = vadd.f32 %v3035, %v3308
        %v3310 = vpop.f32.mrb[0].mxu0
        %v3311 = vadd.f32 %v3039, %v3310
        %3312 = vdwg.mxu0
        %v3313 = vmul.f32 %v1444, %v3235
        %v3314 = vmul.f32 %v1445, %v3239
        %v3315 = vmul.f32 %v1446, %v3245
        %v3316 = vmul.f32 %v1447, %v3249
        %v3317 = vmul.f32 %v1448, %v3255
        %v3318 = vmul.f32 %v1449, %v3259
        %v3319 = vmul.f32 %v1450, %v3265
        %v3320 = vmul.f32 %v1451, %v3269
        %v3321 = vmul.f32 %v1452, %v3275
        %v3322 = vmul.f32 %v1453, %v3279
        %v3323 = vmul.f32 %v1454, %v3285
        %v3324 = vmul.f32 %v1455, %v3289
        %v3325 = vmul.f32 %v1456, %v3295
        %v3326 = vmul.f32 %v1457, %v3299
        %v3327 = vmul.f32 %v1458, %v3305
        %v3328 = vmul.f32 %v1459, %v3309
        %v3329 = vadd.f32 %v3313, %v3237
        %v3330 = vadd.f32 %v3314, %v3241
        %v3331 = vadd.f32 %v3315, %v3247
        %v3332 = vadd.f32 %v3316, %v3251
        %v3333 = vadd.f32 %v3317, %v3257
        %v3334 = vadd.f32 %v3318, %v3261
        %v3335 = vadd.f32 %v3319, %v3267
        %v3336 = vadd.f32 %v3320, %v3271
        %v3337 = vadd.f32 %v3321, %v3277
        %v3338 = vadd.f32 %v3322, %v3281
        %v3339 = vadd.f32 %v3323, %v3287
        %v3340 = vadd.f32 %v3324, %v3291
        %v3341 = vadd.f32 %v3325, %v3297
        %v3342 = vadd.f32 %v3326, %v3301
        %v3343 = vadd.f32 %v3327, %v3307
        %v3344 = vadd.f32 %v3328, %v3311
        %v3345 = vpack.c.bf16 %v3330, %v3329
        %v3346 = vpack.c.bf16 %v3332, %v3331
        %v3347 = vpack.c.bf16 %v3334, %v3333
        %v3348 = vpack.c.bf16 %v3336, %v3335
        %v3349 = vpack.c.bf16 %v3338, %v3337
        %v3350 = vpack.c.bf16 %v3340, %v3339
        %v3351 = vpack.c.bf16 %v3342, %v3341
        %v3352 = vpack.c.bf16 %v3344, %v3343
        %v3361 = vunpack.c.l.b16 %v3345
        %v3362 = vunpack.c.h.b16 %v3345
        %v3363 = vunpack.c.l.b16 %v3346
        %v3364 = vunpack.c.h.b16 %v3346
        %v3365 = vunpack.c.l.b16 %v3347
        %v3366 = vunpack.c.h.b16 %v3347
        %v3367 = vunpack.c.l.b16 %v3348
        %v3368 = vunpack.c.h.b16 %v3348
        %v3369 = vunpack.c.l.b16 %v3349
        %v3370 = vunpack.c.h.b16 %v3349
        %v3371 = vunpack.c.l.b16 %v3350
        %v3372 = vunpack.c.h.b16 %v3350
        %v3373 = vunpack.c.l.b16 %v3351
        %v3374 = vunpack.c.h.b16 %v3351
        %v3375 = vunpack.c.l.b16 %v3352
        %v3376 = vunpack.c.h.b16 %v3352
        %v3377 = vpack.c.b16 %v3361, %v3361
        %v3378 = vpack.c.b16 %v3362, %v3362
        %v3379 = vpack.c.b16 %v3363, %v3363
        %v3380 = vpack.c.b16 %v3364, %v3364
        %v3381 = vpack.c.b16 %v3365, %v3365
        %v3382 = vpack.c.b16 %v3366, %v3366
        %v3383 = vpack.c.b16 %v3367, %v3367
        %v3384 = vpack.c.b16 %v3368, %v3368
        %v3385 = vpack.c.b16 %v3369, %v3369
        %v3386 = vpack.c.b16 %v3370, %v3370
        %v3387 = vpack.c.b16 %v3371, %v3371
        %v3388 = vpack.c.b16 %v3372, %v3372
        %v3389 = vpack.c.b16 %v3373, %v3373
        %v3390 = vpack.c.b16 %v3374, %v3374
        %v3391 = vpack.c.b16 %v3375, %v3375
        %v3392 = vpack.c.b16 %v3376, %v3376
        %3409 = vst [vmem:[%s733] sm:$0xf] %v3377
        %3410 = vst [vmem:[%s733 + $0x4] sm:$0xf] %v3378
        %3411 = vst [vmem:[%s733 + $0x8] sm:$0xf] %v3379
        %3412 = vst [vmem:[%s733 + $0xc] sm:$0xf] %v3380
        %3413 = vst [vmem:[%s733 + $0x10] sm:$0xf] %v3381
        %3414 = vst [vmem:[%s733 + $0x14] sm:$0xf] %v3382
        %3415 = vst [vmem:[%s733 + $0x18] sm:$0xf] %v3383
        %3416 = vst [vmem:[%s733 + $0x1c] sm:$0xf] %v3384
        %3417 = vst [vmem:[%s733 + $0x20] sm:$0xf] %v3385
        %3418 = vst [vmem:[%s733 + $0x24] sm:$0xf] %v3386
        %3419 = vst [vmem:[%s733 + $0x28] sm:$0xf] %v3387
        %3420 = vst [vmem:[%s733 + $0x2c] sm:$0xf] %v3388
        %3421 = vst [vmem:[%s733 + $0x30] sm:$0xf] %v3389
        %3422 = vst [vmem:[%s733 + $0x34] sm:$0xf] %v3390
        %3423 = vst [vmem:[%s733 + $0x38] sm:$0xf] %v3391
        %3424 = vst [vmem:[%s733 + $0x3c] sm:$0xf] %v3392
        %v3425 = vld [vmem:[%s12] sm:$0xf]
        %v3426 = vld [vmem:[%s12 + $0x4] sm:$0xf]
        %v3427 = vld [vmem:[%s12 + $0x8] sm:$0xf]
        %v3428 = vld [vmem:[%s12 + $0xc] sm:$0xf]
        %v3429 = vld [vmem:[%s12 + $0x10] sm:$0xf]
        %v3430 = vld [vmem:[%s12 + $0x14] sm:$0xf]
        %v3431 = vld [vmem:[%s12 + $0x18] sm:$0xf]
        %v3432 = vld [vmem:[%s12 + $0x1c] sm:$0xf]
        %v3433 = vld [vmem:[%s12 + $0x20] sm:$0xf]
        %v3434 = vld [vmem:[%s12 + $0x24] sm:$0xf]
        %v3435 = vld [vmem:[%s12 + $0x28] sm:$0xf]
        %v3436 = vld [vmem:[%s12 + $0x2c] sm:$0xf]
        %v3437 = vld [vmem:[%s12 + $0x30] sm:$0xf]
        %v3438 = vld [vmem:[%s12 + $0x34] sm:$0xf]
        %v3439 = vld [vmem:[%s12 + $0x38] sm:$0xf]
        %v3440 = vld [vmem:[%s12 + $0x3c] sm:$0xf]
        %v3441 = vlaneseq
        %v3442 = vshrl.u32 %v3441, 7
        %v3443 = vsub.s32 0, %v3442
        %v3444 = vrot.slane %v793, %v3443
        %v3461 = vunpack.c.l.b16 %v3425
        %v3462 = vunpack.c.l.b16 %v3426
        %v3463 = vunpack.c.l.b16 %v3427
        %v3464 = vunpack.c.l.b16 %v3428
        %v3465 = vunpack.c.l.b16 %v3429
        %v3466 = vunpack.c.l.b16 %v3430
        %v3467 = vunpack.c.l.b16 %v3431
        %v3468 = vunpack.c.l.b16 %v3432
        %v3469 = vunpack.c.l.b16 %v3433
        %v3470 = vunpack.c.l.b16 %v3434
        %v3471 = vunpack.c.l.b16 %v3435
        %v3472 = vunpack.c.l.b16 %v3436
        %v3473 = vunpack.c.l.b16 %v3437
        %v3474 = vunpack.c.l.b16 %v3438
        %v3475 = vunpack.c.l.b16 %v3439
        %v3476 = vunpack.c.l.b16 %v3440
        %v3477 = vpack.c.b16 %v3462, %v3461
        %v3478 = vpack.c.b16 %v3464, %v3463
        %v3479 = vpack.c.b16 %v3466, %v3465
        %v3480 = vpack.c.b16 %v3468, %v3467
        %v3481 = vpack.c.b16 %v3470, %v3469
        %v3482 = vpack.c.b16 %v3472, %v3471
        %v3483 = vpack.c.b16 %v3474, %v3473
        %v3484 = vpack.c.b16 %v3476, %v3475
        %3493 = vmatprep.subr.bf16.mxu0 0
        %3494 = vmatpush1.bf16.msra.mxu0 %v3477
        %3495 = vmatprep.subr.bf16.mxu0 0
        %3496 = vmatpush1.bf16.msra.mxu0 %v3478
        %3497 = vmatprep.subr.bf16.mxu0 0
        %3498 = vmatpush1.bf16.msra.mxu0 %v3479
        %3499 = vmatprep.subr.bf16.mxu0 0
        %3500 = vmatpush1.bf16.msra.mxu0 %v3480
        %3501 = vmatprep.subr.bf16.mxu0 0
        %3502 = vmatpush1.bf16.msra.mxu0 %v3481
        %3503 = vmatprep.subr.bf16.mxu0 0
        %3504 = vmatpush1.bf16.msra.mxu0 %v3482
        %3505 = vmatprep.subr.bf16.mxu0 0
        %3506 = vmatpush1.bf16.msra.mxu0 %v3483
        %3507 = vmatprep.subr.bf16.mxu0 0
        %3508 = vmatpush1.bf16.msra.mxu0 %v3484
        %3509 = vmatprep.subr.bf16.mxu0 0
        %3510 = vmatpush1.bf16.msra.mxu0 0
        %3511 = vmatprep.subr.bf16.mxu0 0
        %3512 = vmatpush1.bf16.msra.mxu0 0
        %3513 = vmatprep.subr.bf16.mxu0 0
        %3514 = vmatpush1.bf16.msra.mxu0 0
        %3515 = vmatprep.subr.bf16.mxu0 0
        %3516 = vmatpush1.bf16.msra.mxu0 0
        %3517 = vmatprep.subr.bf16.mxu0 0
        %3518 = vmatpush1.bf16.msra.mxu0 0
        %3519 = vmatprep.subr.bf16.mxu0 0
        %3520 = vmatpush1.bf16.msra.mxu0 0
        %3521 = vmatprep.subr.bf16.mxu0 0
        %3522 = vmatpush1.bf16.msra.mxu0 0
        %3523 = vmatprep.subr.bf16.mxu0 0
        %3524 = vmatpush1.bf16.msra.mxu0 0
        %3525 = vmatprep.mubr.bf16.mxu0 0
        %3526 = vmatmul.mubr.bf16.gmra.mrb[0].mxu0 %v3345
        %v3527 = vpop.f32.mrb[0].mxu0
        %v3528 = vadd.f32 %v3444, %v3527
        %v3529 = vpop.f32.mrb[0].mxu0
        %v3530 = vpop.f32.mrb[0].mxu0
        %v3531 = vadd.f32 %v3444, %v3530
        %v3532 = vpop.f32.mrb[0].mxu0
        %3533 = vmatprep.mubr.bf16.mxu0 0
        %3534 = vmatmul.mubr.bf16.gmra.mrb[0].mxu0 %v3346
        %v3535 = vpop.f32.mrb[0].mxu0
        %v3536 = vadd.f32 %v3444, %v3535
        %v3537 = vpop.f32.mrb[0].mxu0
        %v3538 = vpop.f32.mrb[0].mxu0
        %v3539 = vadd.f32 %v3444, %v3538
        %v3540 = vpop.f32.mrb[0].mxu0
        %3541 = vmatprep.mubr.bf16.mxu0 0
        %3542 = vmatmul.mubr.bf16.gmra.mrb[0].mxu0 %v3347
        %v3543 = vpop.f32.mrb[0].mxu0
        %v3544 = vadd.f32 %v3444, %v3543
        %v3545 = vpop.f32.mrb[0].mxu0
        %v3546 = vpop.f32.mrb[0].mxu0
        %v3547 = vadd.f32 %v3444, %v3546
        %v3548 = vpop.f32.mrb[0].mxu0
        %3549 = vmatprep.mubr.bf16.mxu0 0
        %3550 = vmatmul.mubr.bf16.gmra.mrb[0].mxu0 %v3348
        %v3551 = vpop.f32.mrb[0].mxu0
        %v3552 = vadd.f32 %v3444, %v3551
        %v3553 = vpop.f32.mrb[0].mxu0
        %v3554 = vpop.f32.mrb[0].mxu0
        %v3555 = vadd.f32 %v3444, %v3554
        %v3556 = vpop.f32.mrb[0].mxu0
        %3557 = vmatprep.mubr.bf16.mxu0 0
        %3558 = vmatmul.mubr.bf16.gmra.mrb[0].mxu0 %v3349
        %v3559 = vpop.f32.mrb[0].mxu0
        %v3560 = vadd.f32 %v3444, %v3559
        %v3561 = vpop.f32.mrb[0].mxu0
        %v3562 = vpop.f32.mrb[0].mxu0
        %v3563 = vadd.f32 %v3444, %v3562
        %v3564 = vpop.f32.mrb[0].mxu0
        %3565 = vmatprep.mubr.bf16.mxu0 0
        %3566 = vmatmul.mubr.bf16.gmra.mrb[0].mxu0 %v3350
        %v3567 = vpop.f32.mrb[0].mxu0
        %v3568 = vadd.f32 %v3444, %v3567
        %v3569 = vpop.f32.mrb[0].mxu0
        %v3570 = vpop.f32.mrb[0].mxu0
        %v3571 = vadd.f32 %v3444, %v3570
        %v3572 = vpop.f32.mrb[0].mxu0
        %3573 = vmatprep.mubr.bf16.mxu0 0
        %3574 = vmatmul.mubr.bf16.gmra.mrb[0].mxu0 %v3351
        %v3575 = vpop.f32.mrb[0].mxu0
        %v3576 = vadd.f32 %v3444, %v3575
        %v3577 = vpop.f32.mrb[0].mxu0
        %v3578 = vpop.f32.mrb[0].mxu0
        %v3579 = vadd.f32 %v3444, %v3578
        %v3580 = vpop.f32.mrb[0].mxu0
        %3581 = vmatprep.mubr.bf16.mxu0 0
        %3582 = vmatmul.mubr.bf16.gmra.mrb[0].mxu0 %v3352
        %v3583 = vpop.f32.mrb[0].mxu0
        %v3584 = vadd.f32 %v3444, %v3583
        %v3585 = vpop.f32.mrb[0].mxu0
        %v3586 = vpop.f32.mrb[0].mxu0
        %v3587 = vadd.f32 %v3444, %v3586
        %v3588 = vpop.f32.mrb[0].mxu0
        %3589 = vdwg.mxu0
        %v3590 = vpack.c.bf16 %v3531, %v3528
        %v3591 = vpack.c.bf16 %v3539, %v3536
        %v3592 = vpack.c.bf16 %v3547, %v3544
        %v3593 = vpack.c.bf16 %v3555, %v3552
        %v3594 = vpack.c.bf16 %v3563, %v3560
        %v3595 = vpack.c.bf16 %v3571, %v3568
        %v3596 = vpack.c.bf16 %v3579, %v3576
        %v3597 = vpack.c.bf16 %v3587, %v3584
        %3598 = vmatprep.subr.bf16.mxu0 0
        %3599 = vmatpush1.bf16.msra.mxu0 %v1128
        %3600 = vmatprep.subr.bf16.mxu0 0
        %3601 = vmatpush1.bf16.msra.mxu0 %v1129
        %3602 = vmatprep.subr.bf16.mxu0 0
        %3603 = vmatpush1.bf16.msra.mxu0 %v1130
        %3604 = vmatprep.subr.bf16.mxu0 0
        %3605 = vmatpush1.bf16.msra.mxu0 %v1131
        %3606 = vmatprep.subr.bf16.mxu0 0
        %3607 = vmatpush1.bf16.msra.mxu0 %v1132
        %3608 = vmatprep.subr.bf16.mxu0 0
        %3609 = vmatpush1.bf16.msra.mxu0 %v1133
        %3610 = vmatprep.subr.bf16.mxu0 0
        %3611 = vmatpush1.bf16.msra.mxu0 %v1134
        %3612 = vmatprep.subr.bf16.mxu0 0
        %3613 = vmatpush1.bf16.msra.mxu0 %v1135
        %3614 = vmatprep.subr.bf16.mxu0 0
        %3615 = vmatpush1.bf16.msra.mxu0 0
        %3616 = vmatprep.subr.bf16.mxu0 0
        %3617 = vmatpush1.bf16.msra.mxu0 0
        %3618 = vmatprep.subr.bf16.mxu0 0
        %3619 = vmatpush1.bf16.msra.mxu0 0
        %3620 = vmatprep.subr.bf16.mxu0 0
        %3621 = vmatpush1.bf16.msra.mxu0 0
        %3622 = vmatprep.subr.bf16.mxu0 0
        %3623 = vmatpush1.bf16.msra.mxu0 0
        %3624 = vmatprep.subr.bf16.mxu0 0
        %3625 = vmatpush1.bf16.msra.mxu0 0
        %3626 = vmatprep.subr.bf16.mxu0 0
        %3627 = vmatpush1.bf16.msra.mxu0 0
        %3628 = vmatprep.subr.bf16.mxu0 0
        %3629 = vmatpush1.bf16.msra.mxu0 0
        %3630 = vmatprep.mubr.bf16.mxu0 0
        %3631 = vmatmul.mubr.bf16.gmra.mrb[0].mxu0 %v3590
        %v3632 = vpop.f32.mrb[0].mxu0
        %v3633 = vadd.f32 0.0, %v3632
        %v3634 = vpop.f32.mrb[0].mxu0
        %v3635 = vpop.f32.mrb[0].mxu0
        %v3636 = vadd.f32 0.0, %v3635
        %v3637 = vpop.f32.mrb[0].mxu0
        %3638 = vmatprep.mubr.bf16.mxu0 0
        %3639 = vmatmul.mubr.bf16.gmra.mrb[0].mxu0 %v3591
        %v3640 = vpop.f32.mrb[0].mxu0
        %v3641 = vadd.f32 0.0, %v3640
        %v3642 = vpop.f32.mrb[0].mxu0
        %v3643 = vpop.f32.mrb[0].mxu0
        %v3644 = vadd.f32 0.0, %v3643
        %v3645 = vpop.f32.mrb[0].mxu0
        %3646 = vmatprep.mubr.bf16.mxu0 0
        %3647 = vmatmul.mubr.bf16.gmra.mrb[0].mxu0 %v3592
        %v3648 = vpop.f32.mrb[0].mxu0
        %v3649 = vadd.f32 0.0, %v3648
        %v3650 = vpop.f32.mrb[0].mxu0
        %v3651 = vpop.f32.mrb[0].mxu0
        %v3652 = vadd.f32 0.0, %v3651
        %v3653 = vpop.f32.mrb[0].mxu0
        %3654 = vmatprep.mubr.bf16.mxu0 0
        %3655 = vmatmul.mubr.bf16.gmra.mrb[0].mxu0 %v3593
        %v3656 = vpop.f32.mrb[0].mxu0
        %v3657 = vadd.f32 0.0, %v3656
        %v3658 = vpop.f32.mrb[0].mxu0
        %v3659 = vpop.f32.mrb[0].mxu0
        %v3660 = vadd.f32 0.0, %v3659
        %v3661 = vpop.f32.mrb[0].mxu0
        %3662 = vmatprep.mubr.bf16.mxu0 0
        %3663 = vmatmul.mubr.bf16.gmra.mrb[0].mxu0 %v3594
        %v3664 = vpop.f32.mrb[0].mxu0
        %v3665 = vadd.f32 0.0, %v3664
        %v3666 = vpop.f32.mrb[0].mxu0
        %v3667 = vpop.f32.mrb[0].mxu0
        %v3668 = vadd.f32 0.0, %v3667
        %v3669 = vpop.f32.mrb[0].mxu0
        %3670 = vmatprep.mubr.bf16.mxu0 0
        %3671 = vmatmul.mubr.bf16.gmra.mrb[0].mxu0 %v3595
        %v3672 = vpop.f32.mrb[0].mxu0
        %v3673 = vadd.f32 0.0, %v3672
        %v3674 = vpop.f32.mrb[0].mxu0
        %v3675 = vpop.f32.mrb[0].mxu0
        %v3676 = vadd.f32 0.0, %v3675
        %v3677 = vpop.f32.mrb[0].mxu0
        %3678 = vmatprep.mubr.bf16.mxu0 0
        %3679 = vmatmul.mubr.bf16.gmra.mrb[0].mxu0 %v3596
        %v3680 = vpop.f32.mrb[0].mxu0
        %v3681 = vadd.f32 0.0, %v3680
        %v3682 = vpop.f32.mrb[0].mxu0
        %v3683 = vpop.f32.mrb[0].mxu0
        %v3684 = vadd.f32 0.0, %v3683
        %v3685 = vpop.f32.mrb[0].mxu0
        %3686 = vmatprep.mubr.bf16.mxu0 0
        %3687 = vmatmul.mubr.bf16.gmra.mrb[0].mxu0 %v3597
        %v3688 = vpop.f32.mrb[0].mxu0
        %v3689 = vadd.f32 0.0, %v3688
        %v3690 = vpop.f32.mrb[0].mxu0
        %v3691 = vpop.f32.mrb[0].mxu0
        %v3692 = vadd.f32 0.0, %v3691
        %v3693 = vpop.f32.mrb[0].mxu0
        %3694 = vdwg.mxu0
        %v3695 = vsub.f32 %v3528, %v3633
        %v3696 = vsub.f32 %v3531, %v3636
        %v3697 = vsub.f32 %v3536, %v3641
        %v3698 = vsub.f32 %v3539, %v3644
        %v3699 = vsub.f32 %v3544, %v3649
        %v3700 = vsub.f32 %v3547, %v3652
        %v3701 = vsub.f32 %v3552, %v3657
        %v3702 = vsub.f32 %v3555, %v3660
        %v3703 = vsub.f32 %v3560, %v3665
        %v3704 = vsub.f32 %v3563, %v3668
        %v3705 = vsub.f32 %v3568, %v3673
        %v3706 = vsub.f32 %v3571, %v3676
        %v3707 = vsub.f32 %v3576, %v3681
        %v3708 = vsub.f32 %v3579, %v3684
        %v3709 = vsub.f32 %v3584, %v3689
        %v3710 = vsub.f32 %v3587, %v3692
        %v3711 = vmul.f32 %v3695, %v3695
        %v3712 = vmul.f32 %v3696, %v3696
        %v3713 = vmul.f32 %v3697, %v3697
        %v3714 = vmul.f32 %v3698, %v3698
        %v3715 = vmul.f32 %v3699, %v3699
        %v3716 = vmul.f32 %v3700, %v3700
        %v3717 = vmul.f32 %v3701, %v3701
        %v3718 = vmul.f32 %v3702, %v3702
        %v3719 = vmul.f32 %v3703, %v3703
        %v3720 = vmul.f32 %v3704, %v3704
        %v3721 = vmul.f32 %v3705, %v3705
        %v3722 = vmul.f32 %v3706, %v3706
        %v3723 = vmul.f32 %v3707, %v3707
        %v3724 = vmul.f32 %v3708, %v3708
        %v3725 = vmul.f32 %v3709, %v3709
        %v3726 = vmul.f32 %v3710, %v3710
        %v3727 = vpack.c.bf16 %v3712, %v3711
        %v3728 = vpack.c.bf16 %v3714, %v3713
        %v3729 = vpack.c.bf16 %v3716, %v3715
        %v3730 = vpack.c.bf16 %v3718, %v3717
        %v3731 = vpack.c.bf16 %v3720, %v3719
        %v3732 = vpack.c.bf16 %v3722, %v3721
        %v3733 = vpack.c.bf16 %v3724, %v3723
        %v3734 = vpack.c.bf16 %v3726, %v3725
        %3735 = vmatprep.subr.bf16.mxu0 0
        %3736 = vmatpush1.bf16.msra.mxu0 %v1128
        %3737 = vmatprep.subr.bf16.mxu0 0
        %3738 = vmatpush1.bf16.msra.mxu0 %v1129
        %3739 = vmatprep.subr.bf16.mxu0 0
        %3740 = vmatpush1.bf16.msra.mxu0 %v1130
        %3741 = vmatprep.subr.bf16.mxu0 0
        %3742 = vmatpush1.bf16.msra.mxu0 %v1131
        %3743 = vmatprep.subr.bf16.mxu0 0
        %3744 = vmatpush1.bf16.msra.mxu0 %v1132
        %3745 = vmatprep.subr.bf16.mxu0 0
        %3746 = vmatpush1.bf16.msra.mxu0 %v1133
        %3747 = vmatprep.subr.bf16.mxu0 0
        %3748 = vmatpush1.bf16.msra.mxu0 %v1134
        %3749 = vmatprep.subr.bf16.mxu0 0
        %3750 = vmatpush1.bf16.msra.mxu0 %v1135
        %3751 = vmatprep.subr.bf16.mxu0 0
        %3752 = vmatpush1.bf16.msra.mxu0 0
        %3753 = vmatprep.subr.bf16.mxu0 0
        %3754 = vmatpush1.bf16.msra.mxu0 0
        %3755 = vmatprep.subr.bf16.mxu0 0
        %3756 = vmatpush1.bf16.msra.mxu0 0
        %3757 = vmatprep.subr.bf16.mxu0 0
        %3758 = vmatpush1.bf16.msra.mxu0 0
        %3759 = vmatprep.subr.bf16.mxu0 0
        %3760 = vmatpush1.bf16.msra.mxu0 0
        %3761 = vmatprep.subr.bf16.mxu0 0
        %3762 = vmatpush1.bf16.msra.mxu0 0
        %3763 = vmatprep.subr.bf16.mxu0 0
        %3764 = vmatpush1.bf16.msra.mxu0 0
        %3765 = vmatprep.subr.bf16.mxu0 0
        %3766 = vmatpush1.bf16.msra.mxu0 0
        %3767 = vmatprep.mubr.bf16.mxu0 0
        %3768 = vmatmul.mubr.bf16.gmra.mrb[0].mxu0 %v3727
        %v3769 = vpop.f32.mrb[0].mxu0
        %v3770 = vadd.f32 1e-05, %v3769
        %v3771 = vpop.f32.mrb[0].mxu0
        %v3772 = vpop.f32.mrb[0].mxu0
        %v3773 = vadd.f32 1e-05, %v3772
        %v3774 = vpop.f32.mrb[0].mxu0
        %3775 = vmatprep.mubr.bf16.mxu0 0
        %3776 = vmatmul.mubr.bf16.gmra.mrb[0].mxu0 %v3728
        %v3777 = vpop.f32.mrb[0].mxu0
        %v3778 = vadd.f32 1e-05, %v3777
        %v3779 = vpop.f32.mrb[0].mxu0
        %v3780 = vpop.f32.mrb[0].mxu0
        %v3781 = vadd.f32 1e-05, %v3780
        %v3782 = vpop.f32.mrb[0].mxu0
        %3783 = vmatprep.mubr.bf16.mxu0 0
        %3784 = vmatmul.mubr.bf16.gmra.mrb[0].mxu0 %v3729
        %v3785 = vpop.f32.mrb[0].mxu0
        %v3786 = vadd.f32 1e-05, %v3785
        %v3787 = vpop.f32.mrb[0].mxu0
        %v3788 = vpop.f32.mrb[0].mxu0
        %v3789 = vadd.f32 1e-05, %v3788
        %v3790 = vpop.f32.mrb[0].mxu0
        %3791 = vmatprep.mubr.bf16.mxu0 0
        %3792 = vmatmul.mubr.bf16.gmra.mrb[0].mxu0 %v3730
        %v3793 = vpop.f32.mrb[0].mxu0
        %v3794 = vadd.f32 1e-05, %v3793
        %v3795 = vpop.f32.mrb[0].mxu0
        %v3796 = vpop.f32.mrb[0].mxu0
        %v3797 = vadd.f32 1e-05, %v3796
        %v3798 = vpop.f32.mrb[0].mxu0
        %3799 = vmatprep.mubr.bf16.mxu0 0
        %3800 = vmatmul.mubr.bf16.gmra.mrb[0].mxu0 %v3731
        %v3801 = vpop.f32.mrb[0].mxu0
        %v3802 = vadd.f32 1e-05, %v3801
        %v3803 = vpop.f32.mrb[0].mxu0
        %v3804 = vpop.f32.mrb[0].mxu0
        %v3805 = vadd.f32 1e-05, %v3804
        %v3806 = vpop.f32.mrb[0].mxu0
        %3807 = vmatprep.mubr.bf16.mxu0 0
        %3808 = vmatmul.mubr.bf16.gmra.mrb[0].mxu0 %v3732
        %v3809 = vpop.f32.mrb[0].mxu0
        %v3810 = vadd.f32 1e-05, %v3809
        %v3811 = vpop.f32.mrb[0].mxu0
        %v3812 = vpop.f32.mrb[0].mxu0
        %v3813 = vadd.f32 1e-05, %v3812
        %v3814 = vpop.f32.mrb[0].mxu0
        %3815 = vmatprep.mubr.bf16.mxu0 0
        %3816 = vmatmul.mubr.bf16.gmra.mrb[0].mxu0 %v3733
        %v3817 = vpop.f32.mrb[0].mxu0
        %v3818 = vadd.f32 1e-05, %v3817
        %v3819 = vpop.f32.mrb[0].mxu0
        %v3820 = vpop.f32.mrb[0].mxu0
        %v3821 = vadd.f32 1e-05, %v3820
        %v3822 = vpop.f32.mrb[0].mxu0
        %3823 = vmatprep.mubr.bf16.mxu0 0
        %3824 = vmatmul.mubr.bf16.gmra.mrb[0].mxu0 %v3734
        %v3825 = vpop.f32.mrb[0].mxu0
        %v3826 = vadd.f32 1e-05, %v3825
        %v3827 = vpop.f32.mrb[0].mxu0
        %v3828 = vpop.f32.mrb[0].mxu0
        %v3829 = vadd.f32 1e-05, %v3828
        %v3830 = vpop.f32.mrb[0].mxu0
        %3831 = vdwg.mxu0
        %v3832 = vrsqrt.pop %v3770
        %v3833 = vrsqrt.pop %v3773
        %v3834 = vrsqrt.pop %v3778
        %v3835 = vrsqrt.pop %v3781
        %v3836 = vrsqrt.pop %v3786
        %v3837 = vrsqrt.pop %v3789
        %v3838 = vrsqrt.pop %v3794
        %v3839 = vrsqrt.pop %v3797
        %v3840 = vrsqrt.pop %v3802
        %v3841 = vrsqrt.pop %v3805
        %v3842 = vrsqrt.pop %v3810
        %v3843 = vrsqrt.pop %v3813
        %v3844 = vrsqrt.pop %v3818
        %v3845 = vrsqrt.pop %v3821
        %v3846 = vrsqrt.pop %v3826
        %v3847 = vrsqrt.pop %v3829
        %v3848 = vmul.f32 %v3695, %v3832
        %v3849 = vmul.f32 %v3696, %v3833
        %v3850 = vmul.f32 %v3697, %v3834
        %v3851 = vmul.f32 %v3698, %v3835
        %v3852 = vmul.f32 %v3699, %v3836
        %v3853 = vmul.f32 %v3700, %v3837
        %v3854 = vmul.f32 %v3701, %v3838
        %v3855 = vmul.f32 %v3702, %v3839
        %v3856 = vmul.f32 %v3703, %v3840
        %v3857 = vmul.f32 %v3704, %v3841
        %v3858 = vmul.f32 %v3705, %v3842
        %v3859 = vmul.f32 %v3706, %v3843
        %v3860 = vmul.f32 %v3707, %v3844
        %v3861 = vmul.f32 %v3708, %v3845
        %v3862 = vmul.f32 %v3709, %v3846
        %v3863 = vmul.f32 %v3710, %v3847
        %v3864 = vlaneseq
        %v3865 = vshrl.u32 %v3864, 7
        %v3866 = vsub.s32 1, %v3865
        %v3867 = vrot.slane %v793, %v3866
        %v3868 = vmul.f32 %v3848, %v3867
        %v3869 = vmul.f32 %v3849, %v3867
        %v3870 = vmul.f32 %v3850, %v3867
        %v3871 = vmul.f32 %v3851, %v3867
        %v3872 = vmul.f32 %v3852, %v3867
        %v3873 = vmul.f32 %v3853, %v3867
        %v3874 = vmul.f32 %v3854, %v3867
        %v3875 = vmul.f32 %v3855, %v3867
        %v3876 = vmul.f32 %v3856, %v3867
        %v3877 = vmul.f32 %v3857, %v3867
        %v3878 = vmul.f32 %v3858, %v3867
        %v3879 = vmul.f32 %v3859, %v3867
        %v3880 = vmul.f32 %v3860, %v3867
        %v3881 = vmul.f32 %v3861, %v3867
        %v3882 = vmul.f32 %v3862, %v3867
        %v3883 = vmul.f32 %v3863, %v3867
        %v3884 = vlaneseq
        %v3885 = vshrl.u32 %v3884, 7
        %v3886 = vsub.s32 2, %v3885
        %v3887 = vrot.slane %v793, %v3886
        %v3888 = vadd.f32 %v3868, %v3887
        %v3889 = vadd.f32 %v3869, %v3887
        %v3890 = vadd.f32 %v3870, %v3887
        %v3891 = vadd.f32 %v3871, %v3887
        %v3892 = vadd.f32 %v3872, %v3887
        %v3893 = vadd.f32 %v3873, %v3887
        %v3894 = vadd.f32 %v3874, %v3887
        %v3895 = vadd.f32 %v3875, %v3887
        %v3896 = vadd.f32 %v3876, %v3887
        %v3897 = vadd.f32 %v3877, %v3887
        %v3898 = vadd.f32 %v3878, %v3887
        %v3899 = vadd.f32 %v3879, %v3887
        %v3900 = vadd.f32 %v3880, %v3887
        %v3901 = vadd.f32 %v3881, %v3887
        %v3902 = vadd.f32 %v3882, %v3887
        %v3903 = vadd.f32 %v3883, %v3887
        %v3904 = vand.u32 2147483647, %v3888
        %v3905 = vand.u32 2147483647, %v3889
        %v3906 = vand.u32 2147483647, %v3890
        %v3907 = vand.u32 2147483647, %v3891
        %v3908 = vand.u32 2147483647, %v3892
        %v3909 = vand.u32 2147483647, %v3893
        %v3910 = vand.u32 2147483647, %v3894
        %v3911 = vand.u32 2147483647, %v3895
        %v3912 = vand.u32 2147483647, %v3896
        %v3913 = vand.u32 2147483647, %v3897
        %v3914 = vand.u32 2147483647, %v3898
        %v3915 = vand.u32 2147483647, %v3899
        %v3916 = vand.u32 2147483647, %v3900
        %v3917 = vand.u32 2147483647, %v3901
        %v3918 = vand.u32 2147483647, %v3902
        %v3919 = vand.u32 2147483647, %v3903
        %v3920 = vsub.f32 0.0, %v3904
        %v3921 = vsub.f32 0.0, %v3905
        %v3922 = vsub.f32 0.0, %v3906
        %v3923 = vsub.f32 0.0, %v3907
        %v3924 = vsub.f32 0.0, %v3908
        %v3925 = vsub.f32 0.0, %v3909
        %v3926 = vsub.f32 0.0, %v3910
        %v3927 = vsub.f32 0.0, %v3911
        %v3928 = vsub.f32 0.0, %v3912
        %v3929 = vsub.f32 0.0, %v3913
        %v3930 = vsub.f32 0.0, %v3914
        %v3931 = vsub.f32 0.0, %v3915
        %v3932 = vsub.f32 0.0, %v3916
        %v3933 = vsub.f32 0.0, %v3917
        %v3934 = vsub.f32 0.0, %v3918
        %v3935 = vsub.f32 0.0, %v3919
        %v3936 = vpack.c.bf16 %v3921, %v3920
        %v3937 = vpack.c.bf16 %v3923, %v3922
        %v3938 = vpack.c.bf16 %v3925, %v3924
        %v3939 = vpack.c.bf16 %v3927, %v3926
        %v3940 = vpack.c.bf16 %v3929, %v3928
        %v3941 = vpack.c.bf16 %v3931, %v3930
        %v3942 = vpack.c.bf16 %v3933, %v3932
        %v3943 = vpack.c.bf16 %v3935, %v3934
        %v3945 = vmul.bf16 %v3936, 1069105081
        %v3946 = vpow.bf16.pop %v3945
        %v3948 = vmul.bf16 %v3937, 1069105081
        %v3949 = vpow.bf16.pop %v3948
        %v3951 = vmul.bf16 %v3938, 1069105081
        %v3952 = vpow.bf16.pop %v3951
        %v3954 = vmul.bf16 %v3939, 1069105081
        %v3955 = vpow.bf16.pop %v3954
        %v3957 = vmul.bf16 %v3940, 1069105081
        %v3958 = vpow.bf16.pop %v3957
        %v3960 = vmul.bf16 %v3941, 1069105081
        %v3961 = vpow.bf16.pop %v3960
        %v3963 = vmul.bf16 %v3942, 1069105081
        %v3964 = vpow.bf16.pop %v3963
        %v3966 = vmul.bf16 %v3943, 1069105081
        %v3967 = vpow.bf16.pop %v3966
        %v3968 = vunpack.c.l.bf16 %v3946
        %v3969 = vunpack.c.h.bf16 %v3946
        %v3970 = vunpack.c.l.bf16 %v3949
        %v3971 = vunpack.c.h.bf16 %v3949
        %v3972 = vunpack.c.l.bf16 %v3952
        %v3973 = vunpack.c.h.bf16 %v3952
        %v3974 = vunpack.c.l.bf16 %v3955
        %v3975 = vunpack.c.h.bf16 %v3955
        %v3976 = vunpack.c.l.bf16 %v3958
        %v3977 = vunpack.c.h.bf16 %v3958
        %v3978 = vunpack.c.l.bf16 %v3961
        %v3979 = vunpack.c.h.bf16 %v3961
        %v3980 = vunpack.c.l.bf16 %v3964
        %v3981 = vunpack.c.h.bf16 %v3964
        %v3982 = vunpack.c.l.bf16 %v3967
        %v3983 = vunpack.c.h.bf16 %v3967
        %v3984 = vmul.f32 %v3968, %v3968
        %v3985 = vmul.f32 %v3969, %v3969
        %v3986 = vmul.f32 %v3970, %v3970
        %v3987 = vmul.f32 %v3971, %v3971
        %v3988 = vmul.f32 %v3972, %v3972
        %v3989 = vmul.f32 %v3973, %v3973
        %v3990 = vmul.f32 %v3974, %v3974
        %v3991 = vmul.f32 %v3975, %v3975
        %v3992 = vmul.f32 %v3976, %v3976
        %v3993 = vmul.f32 %v3977, %v3977
        %v3994 = vmul.f32 %v3978, %v3978
        %v3995 = vmul.f32 %v3979, %v3979
        %v3996 = vmul.f32 %v3980, %v3980
        %v3997 = vmul.f32 %v3981, %v3981
        %v3998 = vmul.f32 %v3982, %v3982
        %v3999 = vmul.f32 %v3983, %v3983
        %v4000 = vmul.f32 %v3968, 2.0
        %v4001 = vmul.f32 %v3969, 2.0
        %v4002 = vmul.f32 %v3970, 2.0
        %v4003 = vmul.f32 %v3971, 2.0
        %v4004 = vmul.f32 %v3972, 2.0
        %v4005 = vmul.f32 %v3973, 2.0
        %v4006 = vmul.f32 %v3974, 2.0
        %v4007 = vmul.f32 %v3975, 2.0
        %v4008 = vmul.f32 %v3976, 2.0
        %v4009 = vmul.f32 %v3977, 2.0
        %v4010 = vmul.f32 %v3978, 2.0
        %v4011 = vmul.f32 %v3979, 2.0
        %v4012 = vmul.f32 %v3980, 2.0
        %v4013 = vmul.f32 %v3981, 2.0
        %v4014 = vmul.f32 %v3982, 2.0
        %v4015 = vmul.f32 %v3983, 2.0
        %vm4016 = vcmp.ge.f32.partialorder %v3888, 0.0
        %vm4017 = vcmp.ge.f32.partialorder %v3889, 0.0
        %vm4018 = vcmp.ge.f32.partialorder %v3890, 0.0
        %vm4019 = vcmp.ge.f32.partialorder %v3891, 0.0
        %vm4020 = vcmp.ge.f32.partialorder %v3892, 0.0
        %vm4021 = vcmp.ge.f32.partialorder %v3893, 0.0
        %vm4022 = vcmp.ge.f32.partialorder %v3894, 0.0
        %vm4023 = vcmp.ge.f32.partialorder %v3895, 0.0
        %vm4024 = vcmp.ge.f32.partialorder %v3896, 0.0
        %vm4025 = vcmp.ge.f32.partialorder %v3897, 0.0
        %vm4026 = vcmp.ge.f32.partialorder %v3898, 0.0
        %vm4027 = vcmp.ge.f32.partialorder %v3899, 0.0
        %vm4028 = vcmp.ge.f32.partialorder %v3900, 0.0
        %vm4029 = vcmp.ge.f32.partialorder %v3901, 0.0
        %vm4030 = vcmp.ge.f32.partialorder %v3902, 0.0
        %vm4031 = vcmp.ge.f32.partialorder %v3903, 0.0
        %v4032 = vadd.f32 %v4000, 1.0
        %v4033 = vadd.f32 %v4001, 1.0
        %v4034 = vadd.f32 %v4002, 1.0
        %v4035 = vadd.f32 %v4003, 1.0
        %v4036 = vadd.f32 %v4004, 1.0
        %v4037 = vadd.f32 %v4005, 1.0
        %v4038 = vadd.f32 %v4006, 1.0
        %v4039 = vadd.f32 %v4007, 1.0
        %v4040 = vadd.f32 %v4008, 1.0
        %v4041 = vadd.f32 %v4009, 1.0
        %v4042 = vadd.f32 %v4010, 1.0
        %v4043 = vadd.f32 %v4011, 1.0
        %v4044 = vadd.f32 %v4012, 1.0
        %v4045 = vadd.f32 %v4013, 1.0
        %v4046 = vadd.f32 %v4014, 1.0
        %v4047 = vadd.f32 %v4015, 1.0
        %v4048 = vadd.f32 %v3984, %v4000
        %v4049 = vadd.f32 %v3985, %v4001
        %v4050 = vadd.f32 %v3986, %v4002
        %v4051 = vadd.f32 %v3987, %v4003
        %v4052 = vadd.f32 %v3988, %v4004
        %v4053 = vadd.f32 %v3989, %v4005
        %v4054 = vadd.f32 %v3990, %v4006
        %v4055 = vadd.f32 %v3991, %v4007
        %v4056 = vadd.f32 %v3992, %v4008
        %v4057 = vadd.f32 %v3993, %v4009
        %v4058 = vadd.f32 %v3994, %v4010
        %v4059 = vadd.f32 %v3995, %v4011
        %v4060 = vadd.f32 %v3996, %v4012
        %v4061 = vadd.f32 %v3997, %v4013
        %v4062 = vadd.f32 %v3998, %v4014
        %v4063 = vadd.f32 %v3999, %v4015
        %v4064 = vsel %vm4016, %v4032, %v4048
        %v4065 = vsel %vm4017, %v4033, %v4049
        %v4066 = vsel %vm4018, %v4034, %v4050
        %v4067 = vsel %vm4019, %v4035, %v4051
        %v4068 = vsel %vm4020, %v4036, %v4052
        %v4069 = vsel %vm4021, %v4037, %v4053
        %v4070 = vsel %vm4022, %v4038, %v4054
        %v4071 = vsel %vm4023, %v4039, %v4055
        %v4072 = vsel %vm4024, %v4040, %v4056
        %v4073 = vsel %vm4025, %v4041, %v4057
        %v4074 = vsel %vm4026, %v4042, %v4058
        %v4075 = vsel %vm4027, %v4043, %v4059
        %v4076 = vsel %vm4028, %v4044, %v4060
        %v4077 = vsel %vm4029, %v4045, %v4061
        %v4078 = vsel %vm4030, %v4046, %v4062
        %v4079 = vsel %vm4031, %v4047, %v4063
        %v4080 = vmul.f32 %v3984, 2.0
        %v4081 = vmul.f32 %v3985, 2.0
        %v4082 = vmul.f32 %v3986, 2.0
        %v4083 = vmul.f32 %v3987, 2.0
        %v4084 = vmul.f32 %v3988, 2.0
        %v4085 = vmul.f32 %v3989, 2.0
        %v4086 = vmul.f32 %v3990, 2.0
        %v4087 = vmul.f32 %v3991, 2.0
        %v4088 = vmul.f32 %v3992, 2.0
        %v4089 = vmul.f32 %v3993, 2.0
        %v4090 = vmul.f32 %v3994, 2.0
        %v4091 = vmul.f32 %v3995, 2.0
        %v4092 = vmul.f32 %v3996, 2.0
        %v4093 = vmul.f32 %v3997, 2.0
        %v4094 = vmul.f32 %v3998, 2.0
        %v4095 = vmul.f32 %v3999, 2.0
        %v4096 = vadd.f32 %v4032, %v4080
        %v4097 = vadd.f32 %v4033, %v4081
        %v4098 = vadd.f32 %v4034, %v4082
        %v4099 = vadd.f32 %v4035, %v4083
        %v4100 = vadd.f32 %v4036, %v4084
        %v4101 = vadd.f32 %v4037, %v4085
        %v4102 = vadd.f32 %v4038, %v4086
        %v4103 = vadd.f32 %v4039, %v4087
        %v4104 = vadd.f32 %v4040, %v4088
        %v4105 = vadd.f32 %v4041, %v4089
        %v4106 = vadd.f32 %v4042, %v4090
        %v4107 = vadd.f32 %v4043, %v4091
        %v4108 = vadd.f32 %v4044, %v4092
        %v4109 = vadd.f32 %v4045, %v4093
        %v4110 = vadd.f32 %v4046, %v4094
        %v4111 = vadd.f32 %v4047, %v4095
        %v4112 = vadd.f32 %v4048, 2.0
        %v4113 = vadd.f32 %v4049, 2.0
        %v4114 = vadd.f32 %v4050, 2.0
        %v4115 = vadd.f32 %v4051, 2.0
        %v4116 = vadd.f32 %v4052, 2.0
        %v4117 = vadd.f32 %v4053, 2.0
        %v4118 = vadd.f32 %v4054, 2.0
        %v4119 = vadd.f32 %v4055, 2.0
        %v4120 = vadd.f32 %v4056, 2.0
        %v4121 = vadd.f32 %v4057, 2.0
        %v4122 = vadd.f32 %v4058, 2.0
        %v4123 = vadd.f32 %v4059, 2.0
        %v4124 = vadd.f32 %v4060, 2.0
        %v4125 = vadd.f32 %v4061, 2.0
        %v4126 = vadd.f32 %v4062, 2.0
        %v4127 = vadd.f32 %v4063, 2.0
        %v4128 = vsel %vm4016, %v4096, %v4112
        %v4129 = vsel %vm4017, %v4097, %v4113
        %v4130 = vsel %vm4018, %v4098, %v4114
        %v4131 = vsel %vm4019, %v4099, %v4115
        %v4132 = vsel %vm4020, %v4100, %v4116
        %v4133 = vsel %vm4021, %v4101, %v4117
        %v4134 = vsel %vm4022, %v4102, %v4118
        %v4135 = vsel %vm4023, %v4103, %v4119
        %v4136 = vsel %vm4024, %v4104, %v4120
        %v4137 = vsel %vm4025, %v4105, %v4121
        %v4138 = vsel %vm4026, %v4106, %v4122
        %v4139 = vsel %vm4027, %v4107, %v4123
        %v4140 = vsel %vm4028, %v4108, %v4124
        %v4141 = vsel %vm4029, %v4109, %v4125
        %v4142 = vsel %vm4030, %v4110, %v4126
        %v4143 = vsel %vm4031, %v4111, %v4127
        %v4144 = vmul.f32 %v3888, %v4064
        %v4145 = vmul.f32 %v3889, %v4065
        %v4146 = vmul.f32 %v3890, %v4066
        %v4147 = vmul.f32 %v3891, %v4067
        %v4148 = vmul.f32 %v3892, %v4068
        %v4149 = vmul.f32 %v3893, %v4069
        %v4150 = vmul.f32 %v3894, %v4070
        %v4151 = vmul.f32 %v3895, %v4071
        %v4152 = vmul.f32 %v3896, %v4072
        %v4153 = vmul.f32 %v3897, %v4073
        %v4154 = vmul.f32 %v3898, %v4074
        %v4155 = vmul.f32 %v3899, %v4075
        %v4156 = vmul.f32 %v3900, %v4076
        %v4157 = vmul.f32 %v3901, %v4077
        %v4158 = vmul.f32 %v3902, %v4078
        %v4159 = vmul.f32 %v3903, %v4079
        %v4160 = vrcp.pop %v4128
        %v4161 = vrcp.pop %v4129
        %v4162 = vrcp.pop %v4130
        %v4163 = vrcp.pop %v4131
        %v4164 = vrcp.pop %v4132
        %v4165 = vrcp.pop %v4133
        %v4166 = vrcp.pop %v4134
        %v4167 = vrcp.pop %v4135
        %v4168 = vrcp.pop %v4136
        %v4169 = vrcp.pop %v4137
        %v4170 = vrcp.pop %v4138
        %v4171 = vrcp.pop %v4139
        %v4172 = vrcp.pop %v4140
        %v4173 = vrcp.pop %v4141
        %v4174 = vrcp.pop %v4142
        %v4175 = vrcp.pop %v4143
        %v4176 = vmul.f32 %v4144, %v4160
        %v4177 = vmul.f32 %v4145, %v4161
        %v4178 = vmul.f32 %v4146, %v4162
        %v4179 = vmul.f32 %v4147, %v4163
        %v4180 = vmul.f32 %v4148, %v4164
        %v4181 = vmul.f32 %v4149, %v4165
        %v4182 = vmul.f32 %v4150, %v4166
        %v4183 = vmul.f32 %v4151, %v4167
        %v4184 = vmul.f32 %v4152, %v4168
        %v4185 = vmul.f32 %v4153, %v4169
        %v4186 = vmul.f32 %v4154, %v4170
        %v4187 = vmul.f32 %v4155, %v4171
        %v4188 = vmul.f32 %v4156, %v4172
        %v4189 = vmul.f32 %v4157, %v4173
        %v4190 = vmul.f32 %v4158, %v4174
        %v4191 = vmul.f32 %v4159, %v4175
        %v4192 = vpack.c.bf16 %v4177, %v4176
        %v4193 = vpack.c.bf16 %v4179, %v4178
        %v4194 = vpack.c.bf16 %v4181, %v4180
        %v4195 = vpack.c.bf16 %v4183, %v4182
        %v4196 = vpack.c.bf16 %v4185, %v4184
        %v4197 = vpack.c.bf16 %v4187, %v4186
        %v4198 = vpack.c.bf16 %v4189, %v4188
        %v4199 = vpack.c.bf16 %v4191, %v4190
        %v4200 = vld [vmem:[%s13] sm:$0xf]
        %v4201 = vld [vmem:[%s13 + $0x4] sm:$0xf]
        %v4202 = vld [vmem:[%s13 + $0x8] sm:$0xf]
        %v4203 = vld [vmem:[%s13 + $0xc] sm:$0xf]
        %v4204 = vld [vmem:[%s13 + $0x10] sm:$0xf]
        %v4205 = vld [vmem:[%s13 + $0x14] sm:$0xf]
        %v4206 = vld [vmem:[%s13 + $0x18] sm:$0xf]
        %v4207 = vld [vmem:[%s13 + $0x1c] sm:$0xf]
        %v4208 = vld [vmem:[%s13 + $0x20] sm:$0xf]
        %v4209 = vld [vmem:[%s13 + $0x24] sm:$0xf]
        %v4210 = vld [vmem:[%s13 + $0x28] sm:$0xf]
        %v4211 = vld [vmem:[%s13 + $0x2c] sm:$0xf]
        %v4212 = vld [vmem:[%s13 + $0x30] sm:$0xf]
        %v4213 = vld [vmem:[%s13 + $0x34] sm:$0xf]
        %v4214 = vld [vmem:[%s13 + $0x38] sm:$0xf]
        %v4215 = vld [vmem:[%s13 + $0x3c] sm:$0xf]
        %v4216 = vlaneseq
        %v4217 = vshrl.u32 %v4216, 7
        %v4218 = vsub.s32 3, %v4217
        %v4219 = vrot.slane %v793, %v4218
        %v4236 = vunpack.c.l.b16 %v4200
        %v4237 = vunpack.c.l.b16 %v4201
        %v4238 = vunpack.c.l.b16 %v4202
        %v4239 = vunpack.c.l.b16 %v4203
        %v4240 = vunpack.c.l.b16 %v4204
        %v4241 = vunpack.c.l.b16 %v4205
        %v4242 = vunpack.c.l.b16 %v4206
        %v4243 = vunpack.c.l.b16 %v4207
        %v4244 = vunpack.c.l.b16 %v4208
        %v4245 = vunpack.c.l.b16 %v4209
        %v4246 = vunpack.c.l.b16 %v4210
        %v4247 = vunpack.c.l.b16 %v4211
        %v4248 = vunpack.c.l.b16 %v4212
        %v4249 = vunpack.c.l.b16 %v4213
        %v4250 = vunpack.c.l.b16 %v4214
        %v4251 = vunpack.c.l.b16 %v4215
        %v4252 = vpack.c.b16 %v4237, %v4236
        %v4253 = vpack.c.b16 %v4239, %v4238
        %v4254 = vpack.c.b16 %v4241, %v4240
        %v4255 = vpack.c.b16 %v4243, %v4242
        %v4256 = vpack.c.b16 %v4245, %v4244
        %v4257 = vpack.c.b16 %v4247, %v4246
        %v4258 = vpack.c.b16 %v4249, %v4248
        %v4259 = vpack.c.b16 %v4251, %v4250
        %4268 = vmatprep.subr.bf16.mxu0 0
        %4269 = vmatpush1.bf16.msra.mxu0 %v4252
        %4270 = vmatprep.subr.bf16.mxu0 0
        %4271 = vmatpush1.bf16.msra.mxu0 %v4253
        %4272 = vmatprep.subr.bf16.mxu0 0
        %4273 = vmatpush1.bf16.msra.mxu0 %v4254
        %4274 = vmatprep.subr.bf16.mxu0 0
        %4275 = vmatpush1.bf16.msra.mxu0 %v4255
        %4276 = vmatprep.subr.bf16.mxu0 0
        %4277 = vmatpush1.bf16.msra.mxu0 %v4256
        %4278 = vmatprep.subr.bf16.mxu0 0
        %4279 = vmatpush1.bf16.msra.mxu0 %v4257
        %4280 = vmatprep.subr.bf16.mxu0 0
        %4281 = vmatpush1.bf16.msra.mxu0 %v4258
        %4282 = vmatprep.subr.bf16.mxu0 0
        %4283 = vmatpush1.bf16.msra.mxu0 %v4259
        %4284 = vmatprep.subr.bf16.mxu0 0
        %4285 = vmatpush1.bf16.msra.mxu0 0
        %4286 = vmatprep.subr.bf16.mxu0 0
        %4287 = vmatpush1.bf16.msra.mxu0 0
        %4288 = vmatprep.subr.bf16.mxu0 0
        %4289 = vmatpush1.bf16.msra.mxu0 0
        %4290 = vmatprep.subr.bf16.mxu0 0
        %4291 = vmatpush1.bf16.msra.mxu0 0
        %4292 = vmatprep.subr.bf16.mxu0 0
        %4293 = vmatpush1.bf16.msra.mxu0 0
        %4294 = vmatprep.subr.bf16.mxu0 0
        %4295 = vmatpush1.bf16.msra.mxu0 0
        %4296 = vmatprep.subr.bf16.mxu0 0
        %4297 = vmatpush1.bf16.msra.mxu0 0
        %4298 = vmatprep.subr.bf16.mxu0 0
        %4299 = vmatpush1.bf16.msra.mxu0 0
        %4300 = vmatprep.mubr.bf16.mxu0 0
        %4301 = vmatmul.mubr.bf16.gmra.mrb[0].mxu0 %v4192
        %v4302 = vpop.f32.mrb[0].mxu0
        %v4303 = vadd.f32 %v4219, %v4302
        %v4304 = vpop.f32.mrb[0].mxu0
        %v4305 = vpop.f32.mrb[0].mxu0
        %v4306 = vadd.f32 %v4219, %v4305
        %v4307 = vpop.f32.mrb[0].mxu0
        %4308 = vmatprep.mubr.bf16.mxu0 0
        %4309 = vmatmul.mubr.bf16.gmra.mrb[0].mxu0 %v4193
        %v4310 = vpop.f32.mrb[0].mxu0
        %v4311 = vadd.f32 %v4219, %v4310
        %v4312 = vpop.f32.mrb[0].mxu0
        %v4313 = vpop.f32.mrb[0].mxu0
        %v4314 = vadd.f32 %v4219, %v4313
        %v4315 = vpop.f32.mrb[0].mxu0
        %4316 = vmatprep.mubr.bf16.mxu0 0
        %4317 = vmatmul.mubr.bf16.gmra.mrb[0].mxu0 %v4194
        %v4318 = vpop.f32.mrb[0].mxu0
        %v4319 = vadd.f32 %v4219, %v4318
        %v4320 = vpop.f32.mrb[0].mxu0
        %v4321 = vpop.f32.mrb[0].mxu0
        %v4322 = vadd.f32 %v4219, %v4321
        %v4323 = vpop.f32.mrb[0].mxu0
        %4324 = vmatprep.mubr.bf16.mxu0 0
        %4325 = vmatmul.mubr.bf16.gmra.mrb[0].mxu0 %v4195
        %v4326 = vpop.f32.mrb[0].mxu0
        %v4327 = vadd.f32 %v4219, %v4326
        %v4328 = vpop.f32.mrb[0].mxu0
        %v4329 = vpop.f32.mrb[0].mxu0
        %v4330 = vadd.f32 %v4219, %v4329
        %v4331 = vpop.f32.mrb[0].mxu0
        %4332 = vmatprep.mubr.bf16.mxu0 0
        %4333 = vmatmul.mubr.bf16.gmra.mrb[0].mxu0 %v4196
        %v4334 = vpop.f32.mrb[0].mxu0
        %v4335 = vadd.f32 %v4219, %v4334
        %v4336 = vpop.f32.mrb[0].mxu0
        %v4337 = vpop.f32.mrb[0].mxu0
        %v4338 = vadd.f32 %v4219, %v4337
        %v4339 = vpop.f32.mrb[0].mxu0
        %4340 = vmatprep.mubr.bf16.mxu0 0
        %4341 = vmatmul.mubr.bf16.gmra.mrb[0].mxu0 %v4197
        %v4342 = vpop.f32.mrb[0].mxu0
        %v4343 = vadd.f32 %v4219, %v4342
        %v4344 = vpop.f32.mrb[0].mxu0
        %v4345 = vpop.f32.mrb[0].mxu0
        %v4346 = vadd.f32 %v4219, %v4345
        %v4347 = vpop.f32.mrb[0].mxu0
        %4348 = vmatprep.mubr.bf16.mxu0 0
        %4349 = vmatmul.mubr.bf16.gmra.mrb[0].mxu0 %v4198
        %v4350 = vpop.f32.mrb[0].mxu0
        %v4351 = vadd.f32 %v4219, %v4350
        %v4352 = vpop.f32.mrb[0].mxu0
        %v4353 = vpop.f32.mrb[0].mxu0
        %v4354 = vadd.f32 %v4219, %v4353
        %v4355 = vpop.f32.mrb[0].mxu0
        %4356 = vmatprep.mubr.bf16.mxu0 0
        %4357 = vmatmul.mubr.bf16.gmra.mrb[0].mxu0 %v4199
        %v4358 = vpop.f32.mrb[0].mxu0
        %v4359 = vadd.f32 %v4219, %v4358
        %v4360 = vpop.f32.mrb[0].mxu0
        %v4361 = vpop.f32.mrb[0].mxu0
        %v4362 = vadd.f32 %v4219, %v4361
        %v4363 = vpop.f32.mrb[0].mxu0
        %4364 = vdwg.mxu0
        %v4365 = vrot.slane %v4303, 4
        %v4366 = vmax.f32 %v4303, %v4365
        %v4367 = vrot.slane %v4366, 2
        %v4368 = vmax.f32 %v4366, %v4367
        %v4369 = vrot.slane %v4368, 1
        %v4370 = vmax.f32 %v4368, %v4369
        %v4371 = vrot.slane %v4306, 4
        %v4372 = vmax.f32 %v4306, %v4371
        %v4373 = vrot.slane %v4372, 2
        %v4374 = vmax.f32 %v4372, %v4373
        %v4375 = vrot.slane %v4374, 1
        %v4376 = vmax.f32 %v4374, %v4375
        %v4377 = vrot.slane %v4311, 4
        %v4378 = vmax.f32 %v4311, %v4377
        %v4379 = vrot.slane %v4378, 2
        %v4380 = vmax.f32 %v4378, %v4379
        %v4381 = vrot.slane %v4380, 1
        %v4382 = vmax.f32 %v4380, %v4381
        %v4383 = vrot.slane %v4314, 4
        %v4384 = vmax.f32 %v4314, %v4383
        %v4385 = vrot.slane %v4384, 2
        %v4386 = vmax.f32 %v4384, %v4385
        %v4387 = vrot.slane %v4386, 1
        %v4388 = vmax.f32 %v4386, %v4387
        %v4389 = vrot.slane %v4319, 4
        %v4390 = vmax.f32 %v4319, %v4389
        %v4391 = vrot.slane %v4390, 2
        %v4392 = vmax.f32 %v4390, %v4391
        %v4393 = vrot.slane %v4392, 1
        %v4394 = vmax.f32 %v4392, %v4393
        %v4395 = vrot.slane %v4322, 4
        %v4396 = vmax.f32 %v4322, %v4395
        %v4397 = vrot.slane %v4396, 2
        %v4398 = vmax.f32 %v4396, %v4397
        %v4399 = vrot.slane %v4398, 1
        %v4400 = vmax.f32 %v4398, %v4399
        %v4401 = vrot.slane %v4327, 4
        %v4402 = vmax.f32 %v4327, %v4401
        %v4403 = vrot.slane %v4402, 2
        %v4404 = vmax.f32 %v4402, %v4403
        %v4405 = vrot.slane %v4404, 1
        %v4406 = vmax.f32 %v4404, %v4405
        %v4407 = vrot.slane %v4330, 4
        %v4408 = vmax.f32 %v4330, %v4407
        %v4409 = vrot.slane %v4408, 2
        %v4410 = vmax.f32 %v4408, %v4409
        %v4411 = vrot.slane %v4410, 1
        %v4412 = vmax.f32 %v4410, %v4411
        %v4413 = vrot.slane %v4335, 4
        %v4414 = vmax.f32 %v4335, %v4413
        %v4415 = vrot.slane %v4414, 2
        %v4416 = vmax.f32 %v4414, %v4415
        %v4417 = vrot.slane %v4416, 1
        %v4418 = vmax.f32 %v4416, %v4417
        %v4419 = vrot.slane %v4338, 4
        %v4420 = vmax.f32 %v4338, %v4419
        %v4421 = vrot.slane %v4420, 2
        %v4422 = vmax.f32 %v4420, %v4421
        %v4423 = vrot.slane %v4422, 1
        %v4424 = vmax.f32 %v4422, %v4423
        %v4425 = vrot.slane %v4343, 4
        %v4426 = vmax.f32 %v4343, %v4425
        %v4427 = vrot.slane %v4426, 2
        %v4428 = vmax.f32 %v4426, %v4427
        %v4429 = vrot.slane %v4428, 1
        %v4430 = vmax.f32 %v4428, %v4429
        %v4431 = vrot.slane %v4346, 4
        %v4432 = vmax.f32 %v4346, %v4431
        %v4433 = vrot.slane %v4432, 2
        %v4434 = vmax.f32 %v4432, %v4433
        %v4435 = vrot.slane %v4434, 1
        %v4436 = vmax.f32 %v4434, %v4435
        %v4437 = vrot.slane %v4351, 4
        %v4438 = vmax.f32 %v4351, %v4437
        %v4439 = vrot.slane %v4438, 2
        %v4440 = vmax.f32 %v4438, %v4439
        %v4441 = vrot.slane %v4440, 1
        %v4442 = vmax.f32 %v4440, %v4441
        %v4443 = vrot.slane %v4354, 4
        %v4444 = vmax.f32 %v4354, %v4443
        %v4445 = vrot.slane %v4444, 2
        %v4446 = vmax.f32 %v4444, %v4445
        %v4447 = vrot.slane %v4446, 1
        %v4448 = vmax.f32 %v4446, %v4447
        %v4449 = vrot.slane %v4359, 4
        %v4450 = vmax.f32 %v4359, %v4449
        %v4451 = vrot.slane %v4450, 2
        %v4452 = vmax.f32 %v4450, %v4451
        %v4453 = vrot.slane %v4452, 1
        %v4454 = vmax.f32 %v4452, %v4453
        %v4455 = vrot.slane %v4362, 4
        %v4456 = vmax.f32 %v4362, %v4455
        %v4457 = vrot.slane %v4456, 2
        %v4458 = vmax.f32 %v4456, %v4457
        %v4459 = vrot.slane %v4458, 1
        %v4460 = vmax.f32 %v4458, %v4459
        %vm4477 = vcmask 1041409
        %v4478 = vsel %vm4477, %v4376, %v4370
        %vm4479 = vcmask 1042434
        %v4480 = vsel %vm4479, %v4382, %v4478
        %vm4481 = vcmask 1043459
        %v4482 = vsel %vm4481, %v4388, %v4480
        %vm4483 = vcmask 1044484
        %v4484 = vsel %vm4483, %v4394, %v4482
        %vm4485 = vcmask 1045509
        %v4486 = vsel %vm4485, %v4400, %v4484
        %vm4487 = vcmask 1046534
        %v4488 = vsel %vm4487, %v4406, %v4486
        %vm4489 = vcmask 1047559
        %v4490 = vsel %vm4489, %v4412, %v4488
        %v4491 = vsel %vm4477, %v4424, %v4418
        %v4492 = vsel %vm4479, %v4430, %v4491
        %v4493 = vsel %vm4481, %v4436, %v4492
        %v4494 = vsel %vm4483, %v4442, %v4493
        %v4495 = vsel %vm4485, %v4448, %v4494
        %v4496 = vsel %vm4487, %v4454, %v4495
        %v4497 = vsel %vm4489, %v4460, %v4496
        %4500 = vrot.lane.b32.xlu0 %v4490, 32
        %v4501 = vpop.permute.xlu0 %4500
        %4502 = vrot.lane.b32.xlu0 %v4497, 32
        %v4503 = vpop.permute.xlu0 %4502
        %v4506 = vrot.slane %v4501, 1
        %v4507 = vrot.slane %v4501, 2
        %v4508 = vrot.slane %v4501, 3
        %v4509 = vrot.slane %v4501, 4
        %v4510 = vrot.slane %v4501, 5
        %v4511 = vrot.slane %v4501, 6
        %v4512 = vrot.slane %v4501, 7
        %v4513 = vrot.slane %v4503, 1
        %v4514 = vrot.slane %v4503, 2
        %v4515 = vrot.slane %v4503, 3
        %v4516 = vrot.slane %v4503, 4
        %v4517 = vrot.slane %v4503, 5
        %v4518 = vrot.slane %v4503, 6
        %v4519 = vrot.slane %v4503, 7
        %v4536 = vmax.f32 %v4370, %v4501
        %v4537 = vmax.f32 %v4376, %v4506
        %v4538 = vmax.f32 %v4382, %v4507
        %v4539 = vmax.f32 %v4388, %v4508
        %v4540 = vmax.f32 %v4394, %v4509
        %v4541 = vmax.f32 %v4400, %v4510
        %v4542 = vmax.f32 %v4406, %v4511
        %v4543 = vmax.f32 %v4412, %v4512
        %v4544 = vmax.f32 %v4418, %v4503
        %v4545 = vmax.f32 %v4424, %v4513
        %v4546 = vmax.f32 %v4430, %v4514
        %v4547 = vmax.f32 %v4436, %v4515
        %v4548 = vmax.f32 %v4442, %v4516
        %v4549 = vmax.f32 %v4448, %v4517
        %v4550 = vmax.f32 %v4454, %v4518
        %v4551 = vmax.f32 %v4460, %v4519
        %v4568 = vrot.slane %v4537, 7
        %v4569 = vsel %vm4477, %v4568, %v4536
        %v4570 = vrot.slane %v4538, 6
        %v4571 = vsel %vm4479, %v4570, %v4569
        %v4572 = vrot.slane %v4539, 5
        %v4573 = vsel %vm4481, %v4572, %v4571
        %v4574 = vrot.slane %v4540, 4
        %v4575 = vsel %vm4483, %v4574, %v4573
        %v4576 = vrot.slane %v4541, 3
        %v4577 = vsel %vm4485, %v4576, %v4575
        %v4578 = vrot.slane %v4542, 2
        %v4579 = vsel %vm4487, %v4578, %v4577
        %v4580 = vrot.slane %v4543, 1
        %v4581 = vsel %vm4489, %v4580, %v4579
        %v4582 = vrot.slane %v4545, 7
        %v4583 = vsel %vm4477, %v4582, %v4544
        %v4584 = vrot.slane %v4546, 6
        %v4585 = vsel %vm4479, %v4584, %v4583
        %v4586 = vrot.slane %v4547, 5
        %v4587 = vsel %vm4481, %v4586, %v4585
        %v4588 = vrot.slane %v4548, 4
        %v4589 = vsel %vm4483, %v4588, %v4587
        %v4590 = vrot.slane %v4549, 3
        %v4591 = vsel %vm4485, %v4590, %v4589
        %v4592 = vrot.slane %v4550, 2
        %v4593 = vsel %vm4487, %v4592, %v4591
        %v4594 = vrot.slane %v4551, 1
        %v4595 = vsel %vm4489, %v4594, %v4593
        %4598 = vrot.lane.b32.xlu0 %v4581, 64
        %v4599 = vpop.permute.xlu0 %4598
        %4600 = vrot.lane.b32.xlu0 %v4595, 64
        %v4601 = vpop.permute.xlu0 %4600
        %v4604 = vrot.slane %v4599, 1
        %v4605 = vrot.slane %v4599, 2
        %v4606 = vrot.slane %v4599, 3
        %v4607 = vrot.slane %v4599, 4
        %v4608 = vrot.slane %v4599, 5
        %v4609 = vrot.slane %v4599, 6
        %v4610 = vrot.slane %v4599, 7
        %v4611 = vrot.slane %v4601, 1
        %v4612 = vrot.slane %v4601, 2
        %v4613 = vrot.slane %v4601, 3
        %v4614 = vrot.slane %v4601, 4
        %v4615 = vrot.slane %v4601, 5
        %v4616 = vrot.slane %v4601, 6
        %v4617 = vrot.slane %v4601, 7
        %v4634 = vmax.f32 %v4536, %v4599
        %v4635 = vmax.f32 %v4537, %v4604
        %v4636 = vmax.f32 %v4538, %v4605
        %v4637 = vmax.f32 %v4539, %v4606
        %v4638 = vmax.f32 %v4540, %v4607
        %v4639 = vmax.f32 %v4541, %v4608
        %v4640 = vmax.f32 %v4542, %v4609
        %v4641 = vmax.f32 %v4543, %v4610
        %v4642 = vmax.f32 %v4544, %v4601
        %v4643 = vmax.f32 %v4545, %v4611
        %v4644 = vmax.f32 %v4546, %v4612
        %v4645 = vmax.f32 %v4547, %v4613
        %v4646 = vmax.f32 %v4548, %v4614
        %v4647 = vmax.f32 %v4549, %v4615
        %v4648 = vmax.f32 %v4550, %v4616
        %v4649 = vmax.f32 %v4551, %v4617
        %v4650 = vlaneseq
        %v4651 = vshrl.u32 %v4650, 7
        %v4652 = vsub.s32 0, %v4651
        %v4653 = vrot.slane %v4634, %v4652
        %v4654 = vlaneseq
        %v4655 = vshrl.u32 %v4654, 7
        %v4656 = vsub.s32 0, %v4655
        %v4657 = vrot.slane %v4635, %v4656
        %v4658 = vlaneseq
        %v4659 = vshrl.u32 %v4658, 7
        %v4660 = vsub.s32 0, %v4659
        %v4661 = vrot.slane %v4636, %v4660
        %v4662 = vlaneseq
        %v4663 = vshrl.u32 %v4662, 7
        %v4664 = vsub.s32 0, %v4663
        %v4665 = vrot.slane %v4637, %v4664
        %v4666 = vlaneseq
        %v4667 = vshrl.u32 %v4666, 7
        %v4668 = vsub.s32 0, %v4667
        %v4669 = vrot.slane %v4638, %v4668
        %v4670 = vlaneseq
        %v4671 = vshrl.u32 %v4670, 7
        %v4672 = vsub.s32 0, %v4671
        %v4673 = vrot.slane %v4639, %v4672
        %v4674 = vlaneseq
        %v4675 = vshrl.u32 %v4674, 7
        %v4676 = vsub.s32 0, %v4675
        %v4677 = vrot.slane %v4640, %v4676
        %v4678 = vlaneseq
        %v4679 = vshrl.u32 %v4678, 7
        %v4680 = vsub.s32 0, %v4679
        %v4681 = vrot.slane %v4641, %v4680
        %v4682 = vlaneseq
        %v4683 = vshrl.u32 %v4682, 7
        %v4684 = vsub.s32 0, %v4683
        %v4685 = vrot.slane %v4642, %v4684
        %v4686 = vlaneseq
        %v4687 = vshrl.u32 %v4686, 7
        %v4688 = vsub.s32 0, %v4687
        %v4689 = vrot.slane %v4643, %v4688
        %v4690 = vlaneseq
        %v4691 = vshrl.u32 %v4690, 7
        %v4692 = vsub.s32 0, %v4691
        %v4693 = vrot.slane %v4644, %v4692
        %v4694 = vlaneseq
        %v4695 = vshrl.u32 %v4694, 7
        %v4696 = vsub.s32 0, %v4695
        %v4697 = vrot.slane %v4645, %v4696
        %v4698 = vlaneseq
        %v4699 = vshrl.u32 %v4698, 7
        %v4700 = vsub.s32 0, %v4699
        %v4701 = vrot.slane %v4646, %v4700
        %v4702 = vlaneseq
        %v4703 = vshrl.u32 %v4702, 7
        %v4704 = vsub.s32 0, %v4703
        %v4705 = vrot.slane %v4647, %v4704
        %v4706 = vlaneseq
        %v4707 = vshrl.u32 %v4706, 7
        %v4708 = vsub.s32 0, %v4707
        %v4709 = vrot.slane %v4648, %v4708
        %v4710 = vlaneseq
        %v4711 = vshrl.u32 %v4710, 7
        %v4712 = vsub.s32 0, %v4711
        %v4713 = vrot.slane %v4649, %v4712
        %v4714 = vsub.f32 %v4303, %v4653
        %v4715 = vsub.f32 %v4306, %v4657
        %v4716 = vsub.f32 %v4311, %v4661
        %v4717 = vsub.f32 %v4314, %v4665
        %v4718 = vsub.f32 %v4319, %v4669
        %v4719 = vsub.f32 %v4322, %v4673
        %v4720 = vsub.f32 %v4327, %v4677
        %v4721 = vsub.f32 %v4330, %v4681
        %v4722 = vsub.f32 %v4335, %v4685
        %v4723 = vsub.f32 %v4338, %v4689
        %v4724 = vsub.f32 %v4343, %v4693
        %v4725 = vsub.f32 %v4346, %v4697
        %v4726 = vsub.f32 %v4351, %v4701
        %v4727 = vsub.f32 %v4354, %v4705
        %v4728 = vsub.f32 %v4359, %v4709
        %v4729 = vsub.f32 %v4362, %v4713
        %v4730 = vmul.f32 %v4714, 1.442695
        %v4731 = vpow.pop %v4730
        %v4732 = vmul.f32 %v4715, 1.442695
        %v4733 = vpow.pop %v4732
        %v4734 = vmul.f32 %v4716, 1.442695
        %v4735 = vpow.pop %v4734
        %v4736 = vmul.f32 %v4717, 1.442695
        %v4737 = vpow.pop %v4736
        %v4738 = vmul.f32 %v4718, 1.442695
        %v4739 = vpow.pop %v4738
        %v4740 = vmul.f32 %v4719, 1.442695
        %v4741 = vpow.pop %v4740
        %v4742 = vmul.f32 %v4720, 1.442695
        %v4743 = vpow.pop %v4742
        %v4744 = vmul.f32 %v4721, 1.442695
        %v4745 = vpow.pop %v4744
        %v4746 = vmul.f32 %v4722, 1.442695
        %v4747 = vpow.pop %v4746
        %v4748 = vmul.f32 %v4723, 1.442695
        %v4749 = vpow.pop %v4748
        %v4750 = vmul.f32 %v4724, 1.442695
        %v4751 = vpow.pop %v4750
        %v4752 = vmul.f32 %v4725, 1.442695
        %v4753 = vpow.pop %v4752
        %v4754 = vmul.f32 %v4726, 1.442695
        %v4755 = vpow.pop %v4754
        %v4756 = vmul.f32 %v4727, 1.442695
        %v4757 = vpow.pop %v4756
        %v4758 = vmul.f32 %v4728, 1.442695
        %v4759 = vpow.pop %v4758
        %v4760 = vmul.f32 %v4729, 1.442695
        %v4761 = vpow.pop %v4760
        %v4762 = vmul.f32 %v4731, %v739
        %v4763 = vmul.f32 %v4733, %v739
        %v4764 = vmul.f32 %v4735, %v739
        %v4765 = vmul.f32 %v4737, %v739
        %v4766 = vmul.f32 %v4739, %v739
        %v4767 = vmul.f32 %v4741, %v739
        %v4768 = vmul.f32 %v4743, %v739
        %v4769 = vmul.f32 %v4745, %v739
        %v4770 = vmul.f32 %v4747, %v739
        %v4771 = vmul.f32 %v4749, %v739
        %v4772 = vmul.f32 %v4751, %v739
        %v4773 = vmul.f32 %v4753, %v739
        %v4774 = vmul.f32 %v4755, %v739
        %v4775 = vmul.f32 %v4757, %v739
        %v4776 = vmul.f32 %v4759, %v739
        %v4777 = vmul.f32 %v4761, %v739
        %v4778 = vrot.slane %v4762, 4
        %v4779 = vadd.f32 %v4762, %v4778
        %v4780 = vrot.slane %v4779, 2
        %v4781 = vadd.f32 %v4779, %v4780
        %v4782 = vrot.slane %v4781, 1
        %v4783 = vadd.f32 %v4781, %v4782
        %v4784 = vrot.slane %v4763, 4
        %v4785 = vadd.f32 %v4763, %v4784
        %v4786 = vrot.slane %v4785, 2
        %v4787 = vadd.f32 %v4785, %v4786
        %v4788 = vrot.slane %v4787, 1
        %v4789 = vadd.f32 %v4787, %v4788
        %v4790 = vrot.slane %v4764, 4
        %v4791 = vadd.f32 %v4764, %v4790
        %v4792 = vrot.slane %v4791, 2
        %v4793 = vadd.f32 %v4791, %v4792
        %v4794 = vrot.slane %v4793, 1
        %v4795 = vadd.f32 %v4793, %v4794
        %v4796 = vrot.slane %v4765, 4
        %v4797 = vadd.f32 %v4765, %v4796
        %v4798 = vrot.slane %v4797, 2
        %v4799 = vadd.f32 %v4797, %v4798
        %v4800 = vrot.slane %v4799, 1
        %v4801 = vadd.f32 %v4799, %v4800
        %v4802 = vrot.slane %v4766, 4
        %v4803 = vadd.f32 %v4766, %v4802
        %v4804 = vrot.slane %v4803, 2
        %v4805 = vadd.f32 %v4803, %v4804
        %v4806 = vrot.slane %v4805, 1
        %v4807 = vadd.f32 %v4805, %v4806
        %v4808 = vrot.slane %v4767, 4
        %v4809 = vadd.f32 %v4767, %v4808
        %v4810 = vrot.slane %v4809, 2
        %v4811 = vadd.f32 %v4809, %v4810
        %v4812 = vrot.slane %v4811, 1
        %v4813 = vadd.f32 %v4811, %v4812
        %v4814 = vrot.slane %v4768, 4
        %v4815 = vadd.f32 %v4768, %v4814
        %v4816 = vrot.slane %v4815, 2
        %v4817 = vadd.f32 %v4815, %v4816
        %v4818 = vrot.slane %v4817, 1
        %v4819 = vadd.f32 %v4817, %v4818
        %v4820 = vrot.slane %v4769, 4
        %v4821 = vadd.f32 %v4769, %v4820
        %v4822 = vrot.slane %v4821, 2
        %v4823 = vadd.f32 %v4821, %v4822
        %v4824 = vrot.slane %v4823, 1
        %v4825 = vadd.f32 %v4823, %v4824
        %v4826 = vrot.slane %v4770, 4
        %v4827 = vadd.f32 %v4770, %v4826
        %v4828 = vrot.slane %v4827, 2
        %v4829 = vadd.f32 %v4827, %v4828
        %v4830 = vrot.slane %v4829, 1
        %v4831 = vadd.f32 %v4829, %v4830
        %v4832 = vrot.slane %v4771, 4
        %v4833 = vadd.f32 %v4771, %v4832
        %v4834 = vrot.slane %v4833, 2
        %v4835 = vadd.f32 %v4833, %v4834
        %v4836 = vrot.slane %v4835, 1
        %v4837 = vadd.f32 %v4835, %v4836
        %v4838 = vrot.slane %v4772, 4
        %v4839 = vadd.f32 %v4772, %v4838
        %v4840 = vrot.slane %v4839, 2
        %v4841 = vadd.f32 %v4839, %v4840
        %v4842 = vrot.slane %v4841, 1
        %v4843 = vadd.f32 %v4841, %v4842
        %v4844 = vrot.slane %v4773, 4
        %v4845 = vadd.f32 %v4773, %v4844
        %v4846 = vrot.slane %v4845, 2
        %v4847 = vadd.f32 %v4845, %v4846
        %v4848 = vrot.slane %v4847, 1
        %v4849 = vadd.f32 %v4847, %v4848
        %v4850 = vrot.slane %v4774, 4
        %v4851 = vadd.f32 %v4774, %v4850
        %v4852 = vrot.slane %v4851, 2
        %v4853 = vadd.f32 %v4851, %v4852
        %v4854 = vrot.slane %v4853, 1
        %v4855 = vadd.f32 %v4853, %v4854
        %v4856 = vrot.slane %v4775, 4
        %v4857 = vadd.f32 %v4775, %v4856
        %v4858 = vrot.slane %v4857, 2
        %v4859 = vadd.f32 %v4857, %v4858
        %v4860 = vrot.slane %v4859, 1
        %v4861 = vadd.f32 %v4859, %v4860
        %v4862 = vrot.slane %v4776, 4
        %v4863 = vadd.f32 %v4776, %v4862
        %v4864 = vrot.slane %v4863, 2
        %v4865 = vadd.f32 %v4863, %v4864
        %v4866 = vrot.slane %v4865, 1
        %v4867 = vadd.f32 %v4865, %v4866
        %v4868 = vrot.slane %v4777, 4
        %v4869 = vadd.f32 %v4777, %v4868
        %v4870 = vrot.slane %v4869, 2
        %v4871 = vadd.f32 %v4869, %v4870
        %v4872 = vrot.slane %v4871, 1
        %v4873 = vadd.f32 %v4871, %v4872
        %v4890 = vsel %vm4477, %v4789, %v4783
        %v4891 = vsel %vm4479, %v4795, %v4890
        %v4892 = vsel %vm4481, %v4801, %v4891
        %v4893 = vsel %vm4483, %v4807, %v4892
        %v4894 = vsel %vm4485, %v4813, %v4893
        %v4895 = vsel %vm4487, %v4819, %v4894
        %v4896 = vsel %vm4489, %v4825, %v4895
        %v4897 = vsel %vm4477, %v4837, %v4831
        %v4898 = vsel %vm4479, %v4843, %v4897
        %v4899 = vsel %vm4481, %v4849, %v4898
        %v4900 = vsel %vm4483, %v4855, %v4899
        %v4901 = vsel %vm4485, %v4861, %v4900
        %v4902 = vsel %vm4487, %v4867, %v4901
        %v4903 = vsel %vm4489, %v4873, %v4902
        %4906 = vrot.lane.b32.xlu0 %v4896, 32
        %v4907 = vpop.permute.xlu0 %4906
        %4908 = vrot.lane.b32.xlu0 %v4903, 32
        %v4909 = vpop.permute.xlu0 %4908
        %v4912 = vrot.slane %v4907, 1
        %v4913 = vrot.slane %v4907, 2
        %v4914 = vrot.slane %v4907, 3
        %v4915 = vrot.slane %v4907, 4
        %v4916 = vrot.slane %v4907, 5
        %v4917 = vrot.slane %v4907, 6
        %v4918 = vrot.slane %v4907, 7
        %v4919 = vrot.slane %v4909, 1
        %v4920 = vrot.slane %v4909, 2
        %v4921 = vrot.slane %v4909, 3
        %v4922 = vrot.slane %v4909, 4
        %v4923 = vrot.slane %v4909, 5
        %v4924 = vrot.slane %v4909, 6
        %v4925 = vrot.slane %v4909, 7
        %v4942 = vadd.f32 %v4783, %v4907
        %v4943 = vadd.f32 %v4789, %v4912
        %v4944 = vadd.f32 %v4795, %v4913
        %v4945 = vadd.f32 %v4801, %v4914
        %v4946 = vadd.f32 %v4807, %v4915
        %v4947 = vadd.f32 %v4813, %v4916
        %v4948 = vadd.f32 %v4819, %v4917
        %v4949 = vadd.f32 %v4825, %v4918
        %v4950 = vadd.f32 %v4831, %v4909
        %v4951 = vadd.f32 %v4837, %v4919
        %v4952 = vadd.f32 %v4843, %v4920
        %v4953 = vadd.f32 %v4849, %v4921
        %v4954 = vadd.f32 %v4855, %v4922
        %v4955 = vadd.f32 %v4861, %v4923
        %v4956 = vadd.f32 %v4867, %v4924
        %v4957 = vadd.f32 %v4873, %v4925
        %v4974 = vrot.slane %v4943, 7
        %v4975 = vsel %vm4477, %v4974, %v4942
        %v4976 = vrot.slane %v4944, 6
        %v4977 = vsel %vm4479, %v4976, %v4975
        %v4978 = vrot.slane %v4945, 5
        %v4979 = vsel %vm4481, %v4978, %v4977
        %v4980 = vrot.slane %v4946, 4
        %v4981 = vsel %vm4483, %v4980, %v4979
        %v4982 = vrot.slane %v4947, 3
        %v4983 = vsel %vm4485, %v4982, %v4981
        %v4984 = vrot.slane %v4948, 2
        %v4985 = vsel %vm4487, %v4984, %v4983
        %v4986 = vrot.slane %v4949, 1
        %v4987 = vsel %vm4489, %v4986, %v4985
        %v4988 = vrot.slane %v4951, 7
        %v4989 = vsel %vm4477, %v4988, %v4950
        %v4990 = vrot.slane %v4952, 6
        %v4991 = vsel %vm4479, %v4990, %v4989
        %v4992 = vrot.slane %v4953, 5
        %v4993 = vsel %vm4481, %v4992, %v4991
        %v4994 = vrot.slane %v4954, 4
        %v4995 = vsel %vm4483, %v4994, %v4993
        %v4996 = vrot.slane %v4955, 3
        %v4997 = vsel %vm4485, %v4996, %v4995
        %v4998 = vrot.slane %v4956, 2
        %v4999 = vsel %vm4487, %v4998, %v4997
        %v5000 = vrot.slane %v4957, 1
        %v5001 = vsel %vm4489, %v5000, %v4999
        %5004 = vrot.lane.b32.xlu0 %v4987, 64
        %v5005 = vpop.permute.xlu0 %5004
        %5006 = vrot.lane.b32.xlu0 %v5001, 64
        %v5007 = vpop.permute.xlu0 %5006
        %v5010 = vrot.slane %v5005, 1
        %v5011 = vrot.slane %v5005, 2
        %v5012 = vrot.slane %v5005, 3
        %v5013 = vrot.slane %v5005, 4
        %v5014 = vrot.slane %v5005, 5
        %v5015 = vrot.slane %v5005, 6
        %v5016 = vrot.slane %v5005, 7
        %v5017 = vrot.slane %v5007, 1
        %v5018 = vrot.slane %v5007, 2
        %v5019 = vrot.slane %v5007, 3
        %v5020 = vrot.slane %v5007, 4
        %v5021 = vrot.slane %v5007, 5
        %v5022 = vrot.slane %v5007, 6
        %v5023 = vrot.slane %v5007, 7
        %v5040 = vadd.f32 %v4942, %v5005
        %v5041 = vadd.f32 %v4943, %v5010
        %v5042 = vadd.f32 %v4944, %v5011
        %v5043 = vadd.f32 %v4945, %v5012
        %v5044 = vadd.f32 %v4946, %v5013
        %v5045 = vadd.f32 %v4947, %v5014
        %v5046 = vadd.f32 %v4948, %v5015
        %v5047 = vadd.f32 %v4949, %v5016
        %v5048 = vadd.f32 %v4950, %v5007
        %v5049 = vadd.f32 %v4951, %v5017
        %v5050 = vadd.f32 %v4952, %v5018
        %v5051 = vadd.f32 %v4953, %v5019
        %v5052 = vadd.f32 %v4954, %v5020
        %v5053 = vadd.f32 %v4955, %v5021
        %v5054 = vadd.f32 %v4956, %v5022
        %v5055 = vadd.f32 %v4957, %v5023
        %v5056 = vrcp.pop %v5040
        %v5057 = vrcp.pop %v5041
        %v5058 = vrcp.pop %v5042
        %v5059 = vrcp.pop %v5043
        %v5060 = vrcp.pop %v5044
        %v5061 = vrcp.pop %v5045
        %v5062 = vrcp.pop %v5046
        %v5063 = vrcp.pop %v5047
        %v5064 = vrcp.pop %v5048
        %v5065 = vrcp.pop %v5049
        %v5066 = vrcp.pop %v5050
        %v5067 = vrcp.pop %v5051
        %v5068 = vrcp.pop %v5052
        %v5069 = vrcp.pop %v5053
        %v5070 = vrcp.pop %v5054
        %v5071 = vrcp.pop %v5055
        %v5072 = vlaneseq
        %v5073 = vshrl.u32 %v5072, 7
        %v5074 = vsub.s32 0, %v5073
        %v5075 = vrot.slane %v5056, %v5074
        %v5076 = vlaneseq
        %v5077 = vshrl.u32 %v5076, 7
        %v5078 = vsub.s32 0, %v5077
        %v5079 = vrot.slane %v5057, %v5078
        %v5080 = vlaneseq
        %v5081 = vshrl.u32 %v5080, 7
        %v5082 = vsub.s32 0, %v5081
        %v5083 = vrot.slane %v5058, %v5082
        %v5084 = vlaneseq
        %v5085 = vshrl.u32 %v5084, 7
        %v5086 = vsub.s32 0, %v5085
        %v5087 = vrot.slane %v5059, %v5086
        %v5088 = vlaneseq
        %v5089 = vshrl.u32 %v5088, 7
        %v5090 = vsub.s32 0, %v5089
        %v5091 = vrot.slane %v5060, %v5090
        %v5092 = vlaneseq
        %v5093 = vshrl.u32 %v5092, 7
        %v5094 = vsub.s32 0, %v5093
        %v5095 = vrot.slane %v5061, %v5094
        %v5096 = vlaneseq
        %v5097 = vshrl.u32 %v5096, 7
        %v5098 = vsub.s32 0, %v5097
        %v5099 = vrot.slane %v5062, %v5098
        %v5100 = vlaneseq
        %v5101 = vshrl.u32 %v5100, 7
        %v5102 = vsub.s32 0, %v5101
        %v5103 = vrot.slane %v5063, %v5102
        %v5104 = vlaneseq
        %v5105 = vshrl.u32 %v5104, 7
        %v5106 = vsub.s32 0, %v5105
        %v5107 = vrot.slane %v5064, %v5106
        %v5108 = vlaneseq
        %v5109 = vshrl.u32 %v5108, 7
        %v5110 = vsub.s32 0, %v5109
        %v5111 = vrot.slane %v5065, %v5110
        %v5112 = vlaneseq
        %v5113 = vshrl.u32 %v5112, 7
        %v5114 = vsub.s32 0, %v5113
        %v5115 = vrot.slane %v5066, %v5114
        %v5116 = vlaneseq
        %v5117 = vshrl.u32 %v5116, 7
        %v5118 = vsub.s32 0, %v5117
        %v5119 = vrot.slane %v5067, %v5118
        %v5120 = vlaneseq
        %v5121 = vshrl.u32 %v5120, 7
        %v5122 = vsub.s32 0, %v5121
        %v5123 = vrot.slane %v5068, %v5122
        %v5124 = vlaneseq
        %v5125 = vshrl.u32 %v5124, 7
        %v5126 = vsub.s32 0, %v5125
        %v5127 = vrot.slane %v5069, %v5126
        %v5128 = vlaneseq
        %v5129 = vshrl.u32 %v5128, 7
        %v5130 = vsub.s32 0, %v5129
        %v5131 = vrot.slane %v5070, %v5130
        %v5132 = vlaneseq
        %v5133 = vshrl.u32 %v5132, 7
        %v5134 = vsub.s32 0, %v5133
        %v5135 = vrot.slane %v5071, %v5134
        %v5136 = vmul.f32 %v4762, %v5075
        %v5137 = vmul.f32 %v4763, %v5079
        %v5138 = vmul.f32 %v4764, %v5083
        %v5139 = vmul.f32 %v4765, %v5087
        %v5140 = vmul.f32 %v4766, %v5091
        %v5141 = vmul.f32 %v4767, %v5095
        %v5142 = vmul.f32 %v4768, %v5099
        %v5143 = vmul.f32 %v4769, %v5103
        %v5144 = vmul.f32 %v4770, %v5107
        %v5145 = vmul.f32 %v4771, %v5111
        %v5146 = vmul.f32 %v4772, %v5115
        %v5147 = vmul.f32 %v4773, %v5119
        %v5148 = vmul.f32 %v4774, %v5123
        %v5149 = vmul.f32 %v4775, %v5127
        %v5150 = vmul.f32 %v4776, %v5131
        %v5151 = vmul.f32 %v4777, %v5135
        %v5152 = vmul.f32 %v5136, %v1263
        %v5153 = vmul.f32 %v5137, %v1263
        %v5154 = vmul.f32 %v5138, %v1263
        %v5155 = vmul.f32 %v5139, %v1263
        %v5156 = vmul.f32 %v5140, %v1263
        %v5157 = vmul.f32 %v5141, %v1263
        %v5158 = vmul.f32 %v5142, %v1263
        %v5159 = vmul.f32 %v5143, %v1263
        %v5160 = vmul.f32 %v5144, %v1263
        %v5161 = vmul.f32 %v5145, %v1263
        %v5162 = vmul.f32 %v5146, %v1263
        %v5163 = vmul.f32 %v5147, %v1263
        %v5164 = vmul.f32 %v5148, %v1263
        %v5165 = vmul.f32 %v5149, %v1263
        %v5166 = vmul.f32 %v5150, %v1263
        %v5167 = vmul.f32 %v5151, %v1263
        %v5168 = vrot.slane %v5152, 4
        %v5169 = vadd.f32 %v5152, %v5168
        %v5170 = vrot.slane %v5169, 2
        %v5171 = vadd.f32 %v5169, %v5170
        %v5172 = vrot.slane %v5171, 1
        %v5173 = vadd.f32 %v5171, %v5172
        %v5174 = vrot.slane %v5153, 4
        %v5175 = vadd.f32 %v5153, %v5174
        %v5176 = vrot.slane %v5175, 2
        %v5177 = vadd.f32 %v5175, %v5176
        %v5178 = vrot.slane %v5177, 1
        %v5179 = vadd.f32 %v5177, %v5178
        %v5180 = vrot.slane %v5154, 4
        %v5181 = vadd.f32 %v5154, %v5180
        %v5182 = vrot.slane %v5181, 2
        %v5183 = vadd.f32 %v5181, %v5182
        %v5184 = vrot.slane %v5183, 1
        %v5185 = vadd.f32 %v5183, %v5184
        %v5186 = vrot.slane %v5155, 4
        %v5187 = vadd.f32 %v5155, %v5186
        %v5188 = vrot.slane %v5187, 2
        %v5189 = vadd.f32 %v5187, %v5188
        %v5190 = vrot.slane %v5189, 1
        %v5191 = vadd.f32 %v5189, %v5190
        %v5192 = vrot.slane %v5156, 4
        %v5193 = vadd.f32 %v5156, %v5192
        %v5194 = vrot.slane %v5193, 2
        %v5195 = vadd.f32 %v5193, %v5194
        %v5196 = vrot.slane %v5195, 1
        %v5197 = vadd.f32 %v5195, %v5196
        %v5198 = vrot.slane %v5157, 4
        %v5199 = vadd.f32 %v5157, %v5198
        %v5200 = vrot.slane %v5199, 2
        %v5201 = vadd.f32 %v5199, %v5200
        %v5202 = vrot.slane %v5201, 1
        %v5203 = vadd.f32 %v5201, %v5202
        %v5204 = vrot.slane %v5158, 4
        %v5205 = vadd.f32 %v5158, %v5204
        %v5206 = vrot.slane %v5205, 2
        %v5207 = vadd.f32 %v5205, %v5206
        %v5208 = vrot.slane %v5207, 1
        %v5209 = vadd.f32 %v5207, %v5208
        %v5210 = vrot.slane %v5159, 4
        %v5211 = vadd.f32 %v5159, %v5210
        %v5212 = vrot.slane %v5211, 2
        %v5213 = vadd.f32 %v5211, %v5212
        %v5214 = vrot.slane %v5213, 1
        %v5215 = vadd.f32 %v5213, %v5214
        %v5216 = vrot.slane %v5160, 4
        %v5217 = vadd.f32 %v5160, %v5216
        %v5218 = vrot.slane %v5217, 2
        %v5219 = vadd.f32 %v5217, %v5218
        %v5220 = vrot.slane %v5219, 1
        %v5221 = vadd.f32 %v5219, %v5220
        %v5222 = vrot.slane %v5161, 4
        %v5223 = vadd.f32 %v5161, %v5222
        %v5224 = vrot.slane %v5223, 2
        %v5225 = vadd.f32 %v5223, %v5224
        %v5226 = vrot.slane %v5225, 1
        %v5227 = vadd.f32 %v5225, %v5226
        %v5228 = vrot.slane %v5162, 4
        %v5229 = vadd.f32 %v5162, %v5228
        %v5230 = vrot.slane %v5229, 2
        %v5231 = vadd.f32 %v5229, %v5230
        %v5232 = vrot.slane %v5231, 1
        %v5233 = vadd.f32 %v5231, %v5232
        %v5234 = vrot.slane %v5163, 4
        %v5235 = vadd.f32 %v5163, %v5234
        %v5236 = vrot.slane %v5235, 2
        %v5237 = vadd.f32 %v5235, %v5236
        %v5238 = vrot.slane %v5237, 1
        %v5239 = vadd.f32 %v5237, %v5238
        %v5240 = vrot.slane %v5164, 4
        %v5241 = vadd.f32 %v5164, %v5240
        %v5242 = vrot.slane %v5241, 2
        %v5243 = vadd.f32 %v5241, %v5242
        %v5244 = vrot.slane %v5243, 1
        %v5245 = vadd.f32 %v5243, %v5244
        %v5246 = vrot.slane %v5165, 4
        %v5247 = vadd.f32 %v5165, %v5246
        %v5248 = vrot.slane %v5247, 2
        %v5249 = vadd.f32 %v5247, %v5248
        %v5250 = vrot.slane %v5249, 1
        %v5251 = vadd.f32 %v5249, %v5250
        %v5252 = vrot.slane %v5166, 4
        %v5253 = vadd.f32 %v5166, %v5252
        %v5254 = vrot.slane %v5253, 2
        %v5255 = vadd.f32 %v5253, %v5254
        %v5256 = vrot.slane %v5255, 1
        %v5257 = vadd.f32 %v5255, %v5256
        %v5258 = vrot.slane %v5167, 4
        %v5259 = vadd.f32 %v5167, %v5258
        %v5260 = vrot.slane %v5259, 2
        %v5261 = vadd.f32 %v5259, %v5260
        %v5262 = vrot.slane %v5261, 1
        %v5263 = vadd.f32 %v5261, %v5262
        %v5280 = vsel %vm4477, %v5179, %v5173
        %v5281 = vsel %vm4479, %v5185, %v5280
        %v5282 = vsel %vm4481, %v5191, %v5281
        %v5283 = vsel %vm4483, %v5197, %v5282
        %v5284 = vsel %vm4485, %v5203, %v5283
        %v5285 = vsel %vm4487, %v5209, %v5284
        %v5286 = vsel %vm4489, %v5215, %v5285
        %v5287 = vsel %vm4477, %v5227, %v5221
        %v5288 = vsel %vm4479, %v5233, %v5287
        %v5289 = vsel %vm4481, %v5239, %v5288
        %v5290 = vsel %vm4483, %v5245, %v5289
        %v5291 = vsel %vm4485, %v5251, %v5290
        %v5292 = vsel %vm4487, %v5257, %v5291
        %v5293 = vsel %vm4489, %v5263, %v5292
        %5296 = vrot.lane.b32.xlu0 %v5286, 32
        %v5297 = vpop.permute.xlu0 %5296
        %5298 = vrot.lane.b32.xlu0 %v5293, 32
        %v5299 = vpop.permute.xlu0 %5298
        %v5302 = vrot.slane %v5297, 1
        %v5303 = vrot.slane %v5297, 2
        %v5304 = vrot.slane %v5297, 3
        %v5305 = vrot.slane %v5297, 4
        %v5306 = vrot.slane %v5297, 5
        %v5307 = vrot.slane %v5297, 6
        %v5308 = vrot.slane %v5297, 7
        %v5309 = vrot.slane %v5299, 1
        %v5310 = vrot.slane %v5299, 2
        %v5311 = vrot.slane %v5299, 3
        %v5312 = vrot.slane %v5299, 4
        %v5313 = vrot.slane %v5299, 5
        %v5314 = vrot.slane %v5299, 6
        %v5315 = vrot.slane %v5299, 7
        %v5332 = vadd.f32 %v5173, %v5297
        %v5333 = vadd.f32 %v5179, %v5302
        %v5334 = vadd.f32 %v5185, %v5303
        %v5335 = vadd.f32 %v5191, %v5304
        %v5336 = vadd.f32 %v5197, %v5305
        %v5337 = vadd.f32 %v5203, %v5306
        %v5338 = vadd.f32 %v5209, %v5307
        %v5339 = vadd.f32 %v5215, %v5308
        %v5340 = vadd.f32 %v5221, %v5299
        %v5341 = vadd.f32 %v5227, %v5309
        %v5342 = vadd.f32 %v5233, %v5310
        %v5343 = vadd.f32 %v5239, %v5311
        %v5344 = vadd.f32 %v5245, %v5312
        %v5345 = vadd.f32 %v5251, %v5313
        %v5346 = vadd.f32 %v5257, %v5314
        %v5347 = vadd.f32 %v5263, %v5315
        %v5364 = vrot.slane %v5333, 7
        %v5365 = vsel %vm4477, %v5364, %v5332
        %v5366 = vrot.slane %v5334, 6
        %v5367 = vsel %vm4479, %v5366, %v5365
        %v5368 = vrot.slane %v5335, 5
        %v5369 = vsel %vm4481, %v5368, %v5367
        %v5370 = vrot.slane %v5336, 4
        %v5371 = vsel %vm4483, %v5370, %v5369
        %v5372 = vrot.slane %v5337, 3
        %v5373 = vsel %vm4485, %v5372, %v5371
        %v5374 = vrot.slane %v5338, 2
        %v5375 = vsel %vm4487, %v5374, %v5373
        %v5376 = vrot.slane %v5339, 1
        %v5377 = vsel %vm4489, %v5376, %v5375
        %v5378 = vrot.slane %v5341, 7
        %v5379 = vsel %vm4477, %v5378, %v5340
        %v5380 = vrot.slane %v5342, 6
        %v5381 = vsel %vm4479, %v5380, %v5379
        %v5382 = vrot.slane %v5343, 5
        %v5383 = vsel %vm4481, %v5382, %v5381
        %v5384 = vrot.slane %v5344, 4
        %v5385 = vsel %vm4483, %v5384, %v5383
        %v5386 = vrot.slane %v5345, 3
        %v5387 = vsel %vm4485, %v5386, %v5385
        %v5388 = vrot.slane %v5346, 2
        %v5389 = vsel %vm4487, %v5388, %v5387
        %v5390 = vrot.slane %v5347, 1
        %v5391 = vsel %vm4489, %v5390, %v5389
        %5394 = vrot.lane.b32.xlu0 %v5377, 64
        %v5395 = vpop.permute.xlu0 %5394
        %5396 = vrot.lane.b32.xlu0 %v5391, 64
        %v5397 = vpop.permute.xlu0 %5396
        %v5400 = vrot.slane %v5395, 1
        %v5401 = vrot.slane %v5395, 2
        %v5402 = vrot.slane %v5395, 3
        %v5403 = vrot.slane %v5395, 4
        %v5404 = vrot.slane %v5395, 5
        %v5405 = vrot.slane %v5395, 6
        %v5406 = vrot.slane %v5395, 7
        %v5407 = vrot.slane %v5397, 1
        %v5408 = vrot.slane %v5397, 2
        %v5409 = vrot.slane %v5397, 3
        %v5410 = vrot.slane %v5397, 4
        %v5411 = vrot.slane %v5397, 5
        %v5412 = vrot.slane %v5397, 6
        %v5413 = vrot.slane %v5397, 7
        %v5430 = vadd.f32 %v5332, %v5395
        %v5431 = vadd.f32 %v5333, %v5400
        %v5432 = vadd.f32 %v5334, %v5401
        %v5433 = vadd.f32 %v5335, %v5402
        %v5434 = vadd.f32 %v5336, %v5403
        %v5435 = vadd.f32 %v5337, %v5404
        %v5436 = vadd.f32 %v5338, %v5405
        %v5437 = vadd.f32 %v5339, %v5406
        %v5438 = vadd.f32 %v5340, %v5397
        %v5439 = vadd.f32 %v5341, %v5407
        %v5440 = vadd.f32 %v5342, %v5408
        %v5441 = vadd.f32 %v5343, %v5409
        %v5442 = vadd.f32 %v5344, %v5410
        %v5443 = vadd.f32 %v5345, %v5411
        %v5444 = vadd.f32 %v5346, %v5412
        %v5445 = vadd.f32 %v5347, %v5413
        %vm5446 = vcmp.gt.f32.partialorder %v740, 0.0
        %vm5447 = vcmp.gt.f32.partialorder %v741, 0.0
        %v5448 = vsel %vm5446, 1, 0
        %v5449 = vsel %vm5447, 1, 0
        %v5450 = vcvt.s32.f32 %v5448
        %v5451 = vcvt.s32.f32 %v5449
        %5453 = vset.pattern.permute.xlu0 0
        %5454 = vperm.xlu0 %5453, %v5450
        %v5455 = vpop.permute.xlu0 %5454
        %5457 = vset.pattern.permute.xlu0 0
        %5458 = vperm.xlu0 %5457, %v5451
        %v5459 = vpop.permute.xlu0 %5458
        %v5460 = vrot.slane %v5455, 1
        %v5461 = vrot.slane %v5455, 2
        %v5462 = vrot.slane %v5455, 3
        %v5463 = vrot.slane %v5455, 4
        %v5464 = vrot.slane %v5455, 5
        %v5465 = vrot.slane %v5455, 6
        %v5466 = vrot.slane %v5455, 7
        %v5467 = vrot.slane %v5459, 1
        %v5468 = vrot.slane %v5459, 2
        %v5469 = vrot.slane %v5459, 3
        %v5470 = vrot.slane %v5459, 4
        %v5471 = vrot.slane %v5459, 5
        %v5472 = vrot.slane %v5459, 6
        %v5473 = vrot.slane %v5459, 7
        %v5490 = vmul.f32 %v5430, %v5455
        %v5491 = vmul.f32 %v5431, %v5460
        %v5492 = vmul.f32 %v5432, %v5461
        %v5493 = vmul.f32 %v5433, %v5462
        %v5494 = vmul.f32 %v5434, %v5463
        %v5495 = vmul.f32 %v5435, %v5464
        %v5496 = vmul.f32 %v5436, %v5465
        %v5497 = vmul.f32 %v5437, %v5466
        %v5498 = vmul.f32 %v5438, %v5459
        %v5499 = vmul.f32 %v5439, %v5467
        %v5500 = vmul.f32 %v5440, %v5468
        %v5501 = vmul.f32 %v5441, %v5469
        %v5502 = vmul.f32 %v5442, %v5470
        %v5503 = vmul.f32 %v5443, %v5471
        %v5504 = vmul.f32 %v5444, %v5472
        %v5505 = vmul.f32 %v5445, %v5473
        %v5522 = vrot.slane %v5491, 7
        %v5523 = vsel %vm4477, %v5522, %v5490
        %v5524 = vrot.slane %v5492, 6
        %v5525 = vsel %vm4479, %v5524, %v5523
        %v5526 = vrot.slane %v5493, 5
        %v5527 = vsel %vm4481, %v5526, %v5525
        %v5528 = vrot.slane %v5494, 4
        %v5529 = vsel %vm4483, %v5528, %v5527
        %v5530 = vrot.slane %v5495, 3
        %v5531 = vsel %vm4485, %v5530, %v5529
        %v5532 = vrot.slane %v5496, 2
        %v5533 = vsel %vm4487, %v5532, %v5531
        %v5534 = vrot.slane %v5497, 1
        %v5535 = vsel %vm4489, %v5534, %v5533
        %v5536 = vrot.slane %v5499, 7
        %v5537 = vsel %vm4477, %v5536, %v5498
        %v5538 = vrot.slane %v5500, 6
        %v5539 = vsel %vm4479, %v5538, %v5537
        %v5540 = vrot.slane %v5501, 5
        %v5541 = vsel %vm4481, %v5540, %v5539
        %v5542 = vrot.slane %v5502, 4
        %v5543 = vsel %vm4483, %v5542, %v5541
        %v5544 = vrot.slane %v5503, 3
        %v5545 = vsel %vm4485, %v5544, %v5543
        %v5546 = vrot.slane %v5504, 2
        %v5547 = vsel %vm4487, %v5546, %v5545
        %v5548 = vrot.slane %v5505, 1
        %v5549 = vsel %vm4489, %v5548, %v5547
        %5552 = vst.msk [vmem:[%s674] sm:$0xff] %vm802, %v5535
        %5553 = vst.msk [vmem:[%s674 + $0x8] sm:$0xff] %vm802, %v5549
        %s5554 = sand.u32 %s443, 1
        %s5555 = scalar_lea.sflag [#allocation3], %s5554
        %s5556 = sand.u32 %s443, 1
        %s5557 = smul.addr %s5556, 16
        %s5558 = scalar_lea.vmem [#allocation2], %s5557
        %s5559 = smul.u32 16, %s38
        %p5560 = scmp.lt.s32.totalorder %s37, 1
        %s5561 = scalar_select %p5560, %s37, 1
        %p5562 = scmp.lt.s32.totalorder %s5559, 31
        %s5563 = scalar_select %p5562, %s5559, 31
        %s5564 = smul.addr %s5561, 32
        %s5565 = sadd.s32 %s5563, %s5564
        %s5566 = smul.addr %s5565, 4
        %s5567 = scalar_lea.vmem %s18, %s5566
        // Predicated region
        $region89: #{vector_attention.1} parent=87 // pred_check
          %p5568 = pneg %p453
        $region90: #{vector_attention.1} parent=87 // pred_check_branch
          %5570 = sbr.rel (%p5568) target = $region92
        $region91: #{vector_attention.1} parent=87 // pred_region
          %s5571 = smul.u32 2, %s38
          %s5573 = ssub.s32 256, 256
          %5574 = vsyncadd %s5555, %s5573
          %s5575 = smul.addr %s37, 4
          %s5576 = sadd.s32 %s5571, %s5575
          %s5577 = smul.addr %s5576, 128
          %s5578 = scalar_lea.hbm %s17, %s5577
          %s5579 = sshll.u32 %s5558, 4
          %s5580 = int_to_ptr.vmem [resolvable:$true] %s5579
          %5585 = dma.vmem_to_hbm [thread:$0]  %s5580, 256, %s5578, %s5555, 128, 128, 8
        $region92: #{vector_attention.1} parent=87 // pred_fallthru
          _
        // Predicated region
        $region93: #{vector_attention.1} parent=87 // pred_check
          %p5586 = pneg %p481
        $region94: #{vector_attention.1} parent=87 // pred_check_branch
          %5588 = sbr.rel (%p5586) target = $region96
        $region95: #{vector_attention.1} parent=87 // pred_region
          %s5589 = smul.u32 16, %s38
        $region96: #{vector_attention.1} parent=87 // pred_fallthru
          _
      $region88: #{vector_attention.1} parent=5 // pred_fallthru
        _
      %p5590 = scmp.le.s32.totalorder 2, %s28
      // Predicated region
      $region97: #{vector_attention.1} parent=5 // pred_check
        %p5591 = pneg %p5590
      $region98: #{vector_attention.1} parent=5 // pred_check_branch
        %5593 = sbr.rel (%p5591) target = $region100
      $region99: #{vector_attention.1} parent=5 // pred_region
        %s5594 = ssub.s32 %s28, 2
        // Predicated region
        $region101: #{vector_attention.1} parent=99 // pred_check
          %p5595 = pneg %p459
        $region102: #{vector_attention.1} parent=99 // pred_check_branch
          %5597 = sbr.rel (%p5595) target = $region104
        $region103: #{vector_attention.1} parent=99 // pred_region
          %s5598 = sand.u32 %s444, 1
          %s5599 = scalar_lea.sflag [#allocation3], %s5598
          %s5600 = sand.u32 %s444, 1
          %s5601 = smul.addr %s5600, 16
          %s5602 = scalar_lea.vmem [#allocation2], %s5601
          %5603 = dma.done %s5599, 256
        $region104: #{vector_attention.1} parent=99 // pred_fallthru
          _
        // Predicated region
        $region105: #{vector_attention.1} parent=99 // pred_check
          %p5604 = pneg %p487
        $region106: #{vector_attention.1} parent=99 // pred_check_branch
          %5606 = sbr.rel (%p5604) target = $region108
        $region107: #{vector_attention.1} parent=99 // pred_region
          %s5607 = smul.u32 16, %s40
          %p5608 = scmp.lt.s32.totalorder %s39, 1
          %s5609 = scalar_select %p5608, %s39, 1
          %p5610 = scmp.lt.s32.totalorder %s5607, 31
          %s5611 = scalar_select %p5610, %s5607, 31
          %s5612 = smul.addr %s5609, 32
          %s5613 = sadd.s32 %s5611, %s5612
          %s5614 = smul.addr %s5613, 4
          %s5615 = scalar_lea.vmem %s18, %s5614
        $region108: #{vector_attention.1} parent=99 // pred_fallthru
          _
      $region100: #{vector_attention.1} parent=5 // pred_fallthru
        _
    $region6: #{vector_attention.1} parent=1 // loop_footer
      %s32 = sadd.s32 1, %s28
    $region7: #{vector_attention.1} parent=1 // loop_footer_branch
      %27 = sbr.rel target = $region3
    $region8: #{vector_attention.1} parent=1 // loop_exit
      _
    %5616 = vsyncpa [#allocation3], 1
    %s5617 = scalar_lea.sflag [#allocation3], 1
    %5618 = vsyncpa %s5617, 1

</llo_original>
